<compile_context>
chip_gen: v6e
topology: v6e:2x2x1
jax: 0.10.0
libtpu: 0.0.40
codegen_flags: <defaults>
</compile_context>

<pallas_src>
import functools

import jax
import jax.numpy as jnp
from jax import lax
from jax.experimental import pallas as pl
from jax.experimental.pallas import tpu as pltpu

# ---- module constants (from progan.py) -------------------------------------
ALPHA = 0.0
NC = 2
NGF = 64
NUM_BLOCKS = 1
NZ = 256
LEAKY_SLOPE = 0.2
LANE = 128


# ---- Pallas kernels ---------------------------------------------------------
def _latent_conv1_kernel(x_ref, w_ref, o_ref):
    """(Npad, 256) @ (256, tn) with fused LeakyReLU(0.2); bf16 output."""
    y = jnp.dot(x_ref[...], w_ref[...], preferred_element_type=jnp.float32)
    y = jnp.where(y >= 0, y, LEAKY_SLOPE * y)
    o_ref[...] = y.astype(o_ref.dtype)


def _conv_leaky_mm_kernel(x_ref, w_ref, o_ref, acc_ref, *, leaky):
    """Generic K-tiled matmul (fallback for non-1x1x1 latent inputs)."""
    @pl.when(pl.program_id(0) == 0)
    def _():
        acc_ref[...] = jnp.zeros_like(acc_ref)

    acc_ref[...] += jnp.dot(
        x_ref[...], w_ref[...], preferred_element_type=jnp.float32
    )

    @pl.when(pl.program_id(0) == pl.num_programs(0) - 1)
    def _():
        y = acc_ref[...]
        if leaky:
            y = jnp.where(y >= 0, y, LEAKY_SLOPE * y)
        o_ref[...] = y.astype(o_ref.dtype)


def _conv2_rgb_kernel(xc_ref, w2_ref, wr_ref, br_ref, o_ref, acc_ref):
    """K-tiled conv2 matmul; last-K epilogue does rgb 1x1 conv + bias + (tanh+1)/2."""
    k = pl.program_id(1)

    @pl.when(k == 0)
    def _():
        acc_ref[...] = jnp.zeros_like(acc_ref)

    acc_ref[...] += jnp.dot(
        xc_ref[...], w2_ref[...], preferred_element_type=jnp.float32
    )

    @pl.when(k == pl.num_programs(1) - 1)
    def _():
        y = acc_ref[...]  # (tm, 512) f32 == conv2 output rows
        z = jnp.dot(y, wr_ref[...], preferred_element_type=jnp.float32)
        z = z + br_ref[...]
        o_ref[...] = (jnp.tanh(z) + 1.0) * 0.5


# ---- wrappers ---------------------------------------------------------------
def _pick_tile(K, max_t):
    """Largest multiple-of-128 divisor of K that is <= max_t (else K itself)."""
    if K <= max_t or K % 128 != 0:
        return K
    d = K // 128
    for dd in range(min(d, max_t // 128), 0, -1):
        if d % dd == 0:
            return 128 * dd
    return K


def _latent_conv1(x2, w1r, *, max_tn=4096):
    """x2: (Npad, 256) bf16, w1r: (256, 4^3*512) bf16 -> (Npad, 4^3*512) bf16."""
    Npad, K = x2.shape
    Cout = w1r.shape[1]
    tn = _pick_tile(Cout, max_tn)
    return pl.pallas_call(
        _latent_conv1_kernel,
        out_shape=jax.ShapeDtypeStruct((Npad, Cout), jnp.bfloat16),
        grid_spec=pltpu.PrefetchScalarGridSpec(
            num_scalar_prefetch=0,
            grid=(Cout // tn,),
            in_specs=[
                pl.BlockSpec((Npad, K), lambda j: (0, 0)),
                pl.BlockSpec((K, tn), lambda j: (0, j)),
            ],
            out_specs=pl.BlockSpec((Npad, tn), lambda j: (0, j)),
        ),
        compiler_params=pltpu.CompilerParams(
            dimension_semantics=("parallel",)),
    )(x2, w1r)


def _conv_matmul(x_col, w_col, *, leaky, max_tk=2304):
    """Fallback: x_col (M, K) bf16 @ w_col (K, Cout) bf16 -> (M, Cout) f32."""
    M, K = x_col.shape
    Cout = w_col.shape[1]
    tk = _pick_tile(K, max_tk)
    kernel = functools.partial(_conv_leaky_mm_kernel, leaky=leaky)
    return pl.pallas_call(
        kernel,
        out_shape=jax.ShapeDtypeStruct((M, Cout), jnp.float32),
        grid_spec=pltpu.PrefetchScalarGridSpec(
            num_scalar_prefetch=0,
            grid=(K // tk,),
            in_specs=[
                pl.BlockSpec((M, tk), lambda k: (0, k)),
                pl.BlockSpec((tk, Cout), lambda k: (k, 0)),
            ],
            out_specs=pl.BlockSpec((M, Cout), lambda k: (0, 0)),
            scratch_shapes=[pltpu.VMEM((M, Cout), jnp.float32)],
        ),
        compiler_params=pltpu.CompilerParams(
            dimension_semantics=("arbitrary",)),
    )(x_col, w_col)


def _conv2_rgb(x_col, w2, w_rgb_pad, b_rgb_pad, *, max_tk=2304):
    """Fused conv2 + rgb8 + tanh: (M, K) bf16 -> (M, 128) f32 (lane-dense)."""
    M, K = x_col.shape
    C2 = w2.shape[1]          # 512
    Cp = w_rgb_pad.shape[1]   # 128 (NC padded to a full lane group)
    tk = _pick_tile(K, max_tk)
    n_m = 2 if (M % 16 == 0 and M >= 16) else 1   # 2 "parallel" M tiles for v7x
    tm = M // n_m
    return pl.pallas_call(
        _conv2_rgb_kernel,
        out_shape=jax.ShapeDtypeStruct((M, Cp), jnp.float32),
        grid_spec=pltpu.PrefetchScalarGridSpec(
            num_scalar_prefetch=0,
            grid=(n_m, K // tk),
            in_specs=[
                pl.BlockSpec((tm, tk), lambda m, k: (m, k)),
                pl.BlockSpec((tk, C2), lambda m, k: (k, 0)),
                pl.BlockSpec((C2, Cp), lambda m, k: (0, 0)),
                pl.BlockSpec((1, Cp), lambda m, k: (0, 0)),
            ],
            out_specs=pl.BlockSpec((tm, Cp), lambda m, k: (m, 0)),
            scratch_shapes=[pltpu.VMEM((tm, C2), jnp.float32)],
        ),
        compiler_params=pltpu.CompilerParams(
            dimension_semantics=("parallel", "arbitrary")),
    )(x_col, w2, w_rgb_pad, b_rgb_pad)


# ---- glue: im2col + weight reshapes (plain JAX) ------------------------------
def _im2col_3d(x_ndhwc, k, p):
    """x: (N, D, H, W, C) -> (N*OD*OH*OW, k^3 * C), tap-major then channel."""
    N, D, H, W, C = x_ndhwc.shape
    xp = jnp.pad(x_ndhwc, ((0, 0), (p, p), (p, p), (p, p), (0, 0)))
    OD = D + 2 * p - k + 1
    OH = H + 2 * p - k + 1
    OW = W + 2 * p - k + 1
    cols = []
    for kd in range(k):
        for kh in range(k):
            for kw in range(k):
                cols.append(xp[:, kd:kd + OD, kh:kh + OH, kw:kw + OW, :])
    col = jnp.stack(cols, axis=-2)  # (N, OD, OH, OW, k^3, C)
    return col.reshape(N * OD * OH * OW, k * k * k * C), (OD, OH, OW)


def _reshape_conv_weight(w_oidhw, k):
    """(Cout, Cin, kD, kH, kW) -> (k^3*Cin, Cout), matching im2col ordering."""
    cin = w_oidhw.shape[1]
    cout = w_oidhw.shape[0]
    return jnp.transpose(w_oidhw, (2, 3, 4, 1, 0)).reshape(k * k * k * cin, cout)


# ---- full forward -----------------------------------------------------------
def blocked_generator_forward(x_ncdhw, params):
    """x_ncdhw: (N, NZ, D, H, W) f32 -> (N, NC, D+3, H+3, W+3) f32."""
    n, _, d_in, h_in, w_in = x_ncdhw.shape

    # conv1 (k=4, s=1, p=3) + LeakyReLU(0.2), channels-last result
    if (d_in, h_in, w_in) == (1, 1, 1):
        # 1x1x1 latent: each output voxel sees exactly one weight tap ->
        # the conv collapses to one dense matmul (no zero-padded im2col).
        n_pad = max(8, ((n + 7) // 8) * 8)
        x2 = jnp.zeros((n_pad, NZ), jnp.bfloat16).at[:n].set(
            x_ncdhw.reshape(n, NZ).astype(jnp.bfloat16))
        w1 = params["conv1_w"]                                    # (512,256,4,4,4)
        w1r = jnp.transpose(jnp.flip(w1, axis=(2, 3, 4)), (1, 2, 3, 4, 0))
        w1r = w1r.reshape(NZ, 4 * 4 * 4 * NGF * 8).astype(jnp.bfloat16)
        y = _latent_conv1(x2, w1r)[:n]                            # (n, 32768) bf16
        od = oh = ow = 4
        y = y.reshape(n, od, oh, ow, NGF * 8)
    else:
        # General spatial input: bf16 im2col + K-tiled matmul fallback.
        x = jnp.transpose(x_ncdhw, (0, 2, 3, 4, 1)).astype(jnp.bfloat16)
        col, (od, oh, ow) = _im2col_3d(x, 4, 3)
        w1c = _reshape_conv_weight(params["conv1_w"], 4).astype(jnp.bfloat16)
        y = _conv_matmul(col, w1c, leaky=True)
        y = y.reshape(n, od, oh, ow, NGF * 8).astype(jnp.bfloat16)

    # conv2 (k=3, p=1) fused with rgb8 1x1 conv + bias + (tanh+1)/2
    col, (od, oh, ow) = _im2col_3d(y, 3, 1)                       # (M, 27*512) bf16
    w2c = _reshape_conv_weight(params["conv2_w"], 3).astype(jnp.bfloat16)
    # rgb weights/bias padded to 128 lanes -> lane-dense output store.
    w_rgb = params["rgb_w"].reshape(NC, NGF * 8).T                # (512, NC) f32
    w_rgb_pad = jnp.zeros((NGF * 8, LANE), jnp.float32).at[:, :NC].set(w_rgb)
    b_rgb_pad = jnp.zeros((1, LANE), jnp.float32).at[:, :NC].set(
        params["rgb_b"].reshape(1, NC))
    out = _conv2_rgb(col, w2c, w_rgb_pad, b_rgb_pad)              # (M, 128) f32

    out = out[:, :NC].reshape(n, od, oh, ow, NC)
    return jnp.transpose(out, (0, 4, 1, 2, 3))                    # back to NCDHW


# ---- plain-JAX reference for a sanity check ---------------------------------
def _reference_forward(x, params):
    def conv(z, w, pad):
        dn = lax.conv_dimension_numbers(z.shape, w.shape,
                                        ("NCDHW", "OIDHW", "NCDHW"))
        return lax.conv_general_dilated(
            z, w, (1, 1, 1), [(pad, pad)] * 3, dimension_numbers=dn,
            precision=lax.Precision.HIGHEST)

    y = conv(x, params["conv1_w"], 3)
    y = jnp.where(y >= 0, y, LEAKY_SLOPE * y)
    y = conv(y, params["conv2_w"], 1)
    y = conv(y, params["rgb_w"], 0) + params["rgb_b"][None, :, None, None, None]
    return (jnp.tanh(y) + 1.0) / 2.0


# ---- main -------------------------------------------------------------------
if __name__ == "__main__":
    key = jax.random.PRNGKey(0)
    k1, k2, k3, k4, kx = jax.random.split(key, 5)

    # Deterministic synthetic parameters (shapes per the module __init__).
    params = {
        "conv1_w": jax.random.normal(k1, (NGF * 8, NZ, 4, 4, 4), jnp.float32) * 0.05,
        "conv2_w": jax.random.normal(k2, (NGF * 8, NGF * 8, 3, 3, 3), jnp.float32) * 0.02,
        "rgb_w":   jax.random.normal(k3, (NC, NGF * 8, 1, 1, 1), jnp.float32) * 0.05,
        "rgb_b":   jax.random.normal(k4, (NC,), jnp.float32) * 0.05,
    }

    # Typical ProGAN latent input: (batch, nz, 1, 1, 1) in NCDHW.
    x = jax.random.normal(kx, (2, NZ, 1, 1, 1), jnp.float32)

    out = jax.block_until_ready(blocked_generator_forward(x, params))
    assert out.shape == (2, NC, 4, 4, 4), out.shape

    ref = _reference_forward(x, params)
    err = float(jnp.max(jnp.abs(out - ref)))
    assert jnp.allclose(out, ref, atol=2e-2, rtol=2e-2), err

    print("KERNEL_OK")
</pallas_src>

<mosaic_0001>
module attributes {stable_mosaic.version = 11 : i64} {
  func.func @_latent_conv1_kernel(%arg0: i32, %arg1: memref<8x256xbf16, #tpu.memory_space<vmem>>, %arg2: memref<256x4096xbf16, #tpu.memory_space<vmem>>, %arg3: memref<8x4096xbf16, #tpu.memory_space<vmem>>) attributes {dimension_semantics = [#tpu.dimension_semantics<parallel>], iteration_bounds = array<i64: 8>, scalar_prefetch = 0 : i64, scratch_operands = 0 : i64, tpu.core_type = #tpu.core_type<tc>, window_params = [{pipeline_mode = #tpu.pipeline_mode<synchronous>, transform_indices = @transform_0, window_bounds = array<i64: 8, 256>}, {transform_indices = @transform_1, window_bounds = array<i64: 256, 4096>}, {transform_indices = @transform_2, window_bounds = array<i64: 8, 4096>}]} {
    %c0 = arith.constant 0 : index
    %c0_0 = arith.constant 0 : index
    %0 = vector.load %arg1[%c0, %c0_0] : memref<8x256xbf16, #tpu.memory_space<vmem>>, vector<8x256xbf16>
    %c0_1 = arith.constant 0 : index
    %c0_2 = arith.constant 0 : index
    %1 = vector.load %arg2[%c0_1, %c0_2] : memref<256x4096xbf16, #tpu.memory_space<vmem>>, vector<256x4096xbf16>
    %cst = arith.constant dense<0.000000e+00> : vector<8x4096xf32>
    %2 = tpu.matmul %0, %1, %cst {dimension_numbers = #tpu.dot_dimension_numbers<[1], [0], [0], [1], [0, 0, 1, 1], [], []>} : vector<8x256xbf16>, vector<256x4096xbf16>, vector<8x4096xf32> -> vector<8x4096xf32>
    %cst_3 = arith.constant 0.000000e+00 : f32
    %3 = vector.broadcast %cst_3 : f32 to vector<8x4096xf32>
    %4 = arith.cmpf oge, %2, %3 : vector<8x4096xf32>
    %cst_4 = arith.constant 2.000000e-01 : f32
    %5 = vector.broadcast %cst_4 : f32 to vector<8x4096xf32>
    %6 = arith.mulf %5, %2 : vector<8x4096xf32>
    %7 = arith.select %4, %2, %6 : vector<8x4096xi1>, vector<8x4096xf32>
    %8 = arith.truncf %7 : vector<8x4096xf32> to vector<8x4096xbf16>
    %c0_5 = arith.constant 0 : index
    %c0_6 = arith.constant 0 : index
    %9 = vector.load %arg3[%c0_5, %c0_6] : memref<8x4096xbf16, #tpu.memory_space<vmem>>, vector<8x4096xbf16>
    tpu.vector_store %arg3[%c0_5, %c0_6], %8 {strides = array<i32>} : memref<8x4096xbf16, #tpu.memory_space<vmem>>, vector<8x4096xbf16>,
    return
  }
  func.func @transform_0(%arg0: i32) -> (i32, i32) {
    %c0_i32 = arith.constant 0 : i32
    %c0_i32_0 = arith.constant 0 : i32
    %c0_i32_1 = arith.constant 0 : i32
    return %c0_i32, %c0_i32_0 : i32, i32
  }
  func.func @transform_1(%arg0: i32) -> (i32, i32) {
    %c0_i32 = arith.constant 0 : i32
    %c0_i32_0 = arith.constant 0 : i32
    return %c0_i32, %arg0 : i32, i32
  }
  func.func @transform_2(%arg0: i32) -> (i32, i32) {
    %c0_i32 = arith.constant 0 : i32
    %c0_i32_0 = arith.constant 0 : i32
    return %c0_i32, %arg0 : i32, i32
  }
}

</mosaic_0001>

<llo_original>
// kernel: tpu_custom_call.1
$region0: #{tpu_custom_call.1}
  #allocation0 [shape = 'u32[]', space=smem, size = 0x4, offset = 0x4, fixed_abs, tag = 'smem constant byte address 0x4 - core index']
  #allocation1 [shape = 'u32[144,128]{1,0:T(1,128)}', space=vmem, size = 0x12000, scoped, tag = 'internal scratch']
  %s0 = inlined_call_operand.hbm [shape: bf16[8,256], index: 0, kind: input, shape index: {}]
  %s1 = inlined_call_operand.hbm [shape: bf16[256,32768], index: 1, kind: input, shape index: {}]
  %s2 = inlined_call_operand.hbm [shape: bf16[8,32768], index: 2, kind: output, shape index: {}]
  %s3 = sld [smem:[#allocation0]]
  $region49: #{tpu_custom_call.1} parent=0
    _
  %s5 = ssub.s32 1, %s3
  %s6 = scalar_select 0, %s5, %s3
  $region1: #{tpu_custom_call.1} parent=0
    #allocation2 [shape = 'u8[4096]{0}', space=vmem, size = 0x1000, scoped, tag = 'input window, operand 0, single buffered']
    #allocation3 [shape = 's32[2]{0}', space=sflag, size = 0x8, scoped, tag = 'scoped memory for tpu_custom_call.1']
    #allocation4 [shape = 's32[2]{0}', space=sflag, size = 0x8, scoped, tag = 'scoped memory for tpu_custom_call.1']
    #allocation5 [shape = 'u8[4194304]{0}', space=vmem, size = 0x400000, scoped, tag = 'input window, operand 1']
    #allocation6 [shape = 's32[2]{0}', space=sflag, size = 0x8, scoped, tag = 'scoped memory for tpu_custom_call.1']
    #allocation7 [shape = 'u8[131072]{0}', space=vmem, size = 0x20000, scoped, tag = 'output window, operand 0']
    %7 = vsyncpa [#allocation3], 0
    %8 = vsyncpa [#allocation6], 0
    %s9 = scalar_lea.sflag [#allocation6], 1
    %10 = vsyncpa %s9, 0
    %11 = vsyncpa [#allocation4], 0
    %s12 = scalar_lea.sflag [#allocation4], 1
    %13 = vsyncpa %s12, 0
    loop: start=0, step=1, limit=10
    $region2: #{tpu_custom_call.1} parent=1 // loop_pre_header
      _
    $region3: #{tpu_custom_call.1} parent=1 // loop_header
      %s15 = sphi 0, %s19
      %p16 = scmp.ge.s32.totalorder %s15, 10
      %s23 = sphi 0, %s23
      %s25 = sphi 0, %s23
      %s26 = sphi 0, %s25
      %s40 = sphi 0, %s26
      %s46 = sphi 0, %s48
      %s49 = sphi 0, %s46
      %s50 = sphi 0, %s49
      %s66 = sphi 0, %s50
      %s72 = sphi 0, %s74
      %s75 = sphi 0, %s72
      %s76 = sphi 0, %s75
      %s92 = sphi 0, %s76
    $region4: #{tpu_custom_call.1} parent=1 // loop_header_branch
      %18 = sbr.rel (%p16) target = $region8
    $region5: #{tpu_custom_call.1} parent=1 // loop_body
      %s20 = ssub.s32 %s15, 1
      %s21 = ssub.s32 %s15, 2
      %s22 = sadd.s32 %s15, 1
      %s24 = sadd.s32 %s23, 1
      %p27 = scmp.eq.s32.totalorder %s15, 7
      %p28 = scmp.ne.s32.totalorder %s23, %s25
      %p29 = scmp.eq.s32.totalorder %s15, 0
      %p30 = por %p28, %p29
      %p31 = scmp.ne.s32.totalorder %s23, %s25
      %p32 = scmp.eq.s32.totalorder %s20, 7
      %p33 = por %p31, %p32
      %p34 = scmp.ne.s32.totalorder %s25, %s26
      %p35 = scmp.eq.s32.totalorder %s20, 0
      %p36 = por %p34, %p35
      %p37 = scmp.ne.s32.totalorder %s25, %s26
      %p38 = scmp.eq.s32.totalorder %s21, 7
      %p39 = por %p37, %p38
      %p41 = scmp.ne.s32.totalorder %s26, %s40
      %p42 = scmp.eq.s32.totalorder %s21, 0
      %p43 = por %p41, %p42
      %s44 = ssub.s32 %s15, %s22
      %p45 = scmp.eq.s32.totalorder %s44, 0
      %s47 = sadd.s32 %s46, 1
      %s48 = scalar_select %p45, %s46, %s47
      %p51 = pneg %p45
      %p52 = scmp.eq.s32.totalorder %s15, 7
      %p53 = por %p51, %p52
      %p54 = scmp.ne.s32.totalorder %s46, %s49
      %p55 = scmp.eq.s32.totalorder %s15, 0
      %p56 = por %p54, %p55
      %p57 = scmp.ne.s32.totalorder %s46, %s49
      %p58 = scmp.eq.s32.totalorder %s20, 7
      %p59 = por %p57, %p58
      %p60 = scmp.ne.s32.totalorder %s49, %s50
      %p61 = scmp.eq.s32.totalorder %s20, 0
      %p62 = por %p60, %p61
      %p63 = scmp.ne.s32.totalorder %s49, %s50
      %p64 = scmp.eq.s32.totalorder %s21, 7
      %p65 = por %p63, %p64
      %p67 = scmp.ne.s32.totalorder %s50, %s66
      %p68 = scmp.eq.s32.totalorder %s21, 0
      %p69 = por %p67, %p68
      %s70 = ssub.s32 %s15, %s22
      %p71 = scmp.eq.s32.totalorder %s70, 0
      %s73 = sadd.s32 %s72, 1
      %s74 = scalar_select %p71, %s72, %s73
      %p77 = pneg %p71
      %p78 = scmp.eq.s32.totalorder %s15, 7
      %p79 = por %p77, %p78
      %p80 = scmp.ne.s32.totalorder %s72, %s75
      %p81 = scmp.eq.s32.totalorder %s15, 0
      %p82 = por %p80, %p81
      %p83 = scmp.ne.s32.totalorder %s72, %s75
      %p84 = scmp.eq.s32.totalorder %s20, 7
      %p85 = por %p83, %p84
      %p86 = scmp.ne.s32.totalorder %s75, %s76
      %p87 = scmp.eq.s32.totalorder %s20, 0
      %p88 = por %p86, %p87
      %p89 = scmp.ne.s32.totalorder %s75, %s76
      %p90 = scmp.eq.s32.totalorder %s21, 7
      %p91 = por %p89, %p90
      %p93 = scmp.ne.s32.totalorder %s76, %s92
      %p94 = scmp.eq.s32.totalorder %s21, 0
      %p95 = por %p93, %p94
      %p96 = scmp.le.s32.totalorder 1, %s15
      %p97 = scmp.lt.s32.totalorder %s15, 9
      %p98 = pnand %p96, %p97
      %p99 = pneg %p98
      // Predicated region
      $region9: #{tpu_custom_call.1} parent=5 // pred_check
        _
      $region10: #{tpu_custom_call.1} parent=5 // pred_check_branch
        %101 = sbr.rel (%p98) target = $region12
      $region11: #{tpu_custom_call.1} parent=5 // pred_region
        %s102 = ssub.s32 %s15, 1
        // Predicated region
        $region13: #{tpu_custom_call.1} parent=11 // pred_check
          %p103 = pneg %p36
        $region14: #{tpu_custom_call.1} parent=11 // pred_check_branch
          %105 = sbr.rel (%p103) target = $region16
        $region15: #{tpu_custom_call.1} parent=11 // pred_region
          %s107 = ssub.s32 128, 128
          %108 = vsyncadd [#allocation3], %s107
          %s110 = sshll.u32 [#allocation2], 4
          %s111 = int_to_ptr.vmem [resolvable:$true] %s110
          %113 = dma.hbm_to_vmem [thread:$0]  %s0, 128, %s111, [#allocation3]
        $region16: #{tpu_custom_call.1} parent=11 // pred_fallthru
          _
      $region12: #{tpu_custom_call.1} parent=5 // pred_fallthru
        _
      %p114 = scmp.lt.s32.totalorder %s15, 8
      // Predicated region
      $region17: #{tpu_custom_call.1} parent=5 // pred_check
        %p115 = pneg %p114
      $region18: #{tpu_custom_call.1} parent=5 // pred_check_branch
        %117 = sbr.rel (%p115) target = $region20
      $region19: #{tpu_custom_call.1} parent=5 // pred_region
        // Predicated region
        $region21: #{tpu_custom_call.1} parent=19 // pred_check
          %p118 = pneg %p56
        $region22: #{tpu_custom_call.1} parent=19 // pred_check_branch
          %120 = sbr.rel (%p118) target = $region24
        $region23: #{tpu_custom_call.1} parent=19 // pred_region
          %s121 = sand.u32 %s46, 1
          %s122 = scalar_lea.sflag [#allocation6], %s121
          %s123 = sand.u32 %s46, 1
          %s124 = smul.addr %s123, 4096
          %s125 = scalar_lea.vmem [#allocation5], %s124
          %s126 = smul.u32 32, %s15
          %s128 = ssub.s32 65536, 65536
          %129 = vsyncadd %s122, %s128
          %s130 = smul.addr %s126, 64
          %s131 = scalar_lea.hbm %s1, %s130
          %s132 = sshll.u32 %s125, 4
          %s133 = int_to_ptr.vmem [resolvable:$true] %s132
          %138 = dma.hbm_to_vmem [thread:$0]  %s131, 65536, %s133, %s122, 16384, 2048, 128
        $region24: #{tpu_custom_call.1} parent=19 // pred_fallthru
          _
      $region20: #{tpu_custom_call.1} parent=5 // pred_fallthru
        _
      %p139 = scmp.le.s32.totalorder 1, %s15
      %p140 = scmp.lt.s32.totalorder %s15, 9
      %p141 = pnand %p139, %p140
      %p142 = pneg %p141
      // Predicated region
      $region25: #{tpu_custom_call.1} parent=5 // pred_check
        _
      $region26: #{tpu_custom_call.1} parent=5 // pred_check_branch
        %144 = sbr.rel (%p141) target = $region28
      $region27: #{tpu_custom_call.1} parent=5 // pred_region
        %s145 = ssub.s32 %s15, 1
        // Predicated region
        $region29: #{tpu_custom_call.1} parent=27 // pred_check
          %p146 = pneg %p36
        $region30: #{tpu_custom_call.1} parent=27 // pred_check_branch
          %148 = sbr.rel (%p146) target = $region32
        $region31: #{tpu_custom_call.1} parent=27 // pred_region
          %149 = dma.done [#allocation3], 128
        $region32: #{tpu_custom_call.1} parent=27 // pred_fallthru
          _
        %s150 = sand.u32 %s49, 1
        %s151 = scalar_lea.sflag [#allocation6], %s150
        %s152 = sand.u32 %s49, 1
        %s153 = smul.addr %s152, 4096
        %s154 = scalar_lea.vmem [#allocation5], %s153
        // Predicated region
        $region33: #{tpu_custom_call.1} parent=27 // pred_check
          %p155 = pneg %p62
        $region34: #{tpu_custom_call.1} parent=27 // pred_check_branch
          %157 = sbr.rel (%p155) target = $region36
        $region35: #{tpu_custom_call.1} parent=27 // pred_region
          %158 = dma.done %s151, 65536
        $region36: #{tpu_custom_call.1} parent=27 // pred_fallthru
          _
        %p159 = pneg %p36
        %p160 = pneg %p33
        %s161 = sand.u32 %s49, 1
        %s162 = scalar_lea.sflag [#allocation6], %s161
        %s163 = sand.u32 %s49, 1
        %s164 = smul.addr %s163, 4096
        %s165 = scalar_lea.vmem [#allocation5], %s164
        %p166 = pneg %p62
        %p167 = pneg %p59
        %p168 = pneg %p88
        %p169 = pneg %p85
        %s170 = sand.u32 %s75, 1
        %s171 = scalar_lea.sflag [#allocation4], %s170
        %s172 = sand.u32 %s75, 1
        %s173 = smul.addr %s172, 128
        %s174 = scalar_lea.vmem [#allocation7], %s173
        %s175 = smul.u32 32, %s20
        %s176 = smul.u32 32, %s20
        %v177 = vld [vmem:[#allocation2] sm:$0xff]
        %v178 = vld [vmem:[%s154] sm:$0xff]
        %v179 = vld [vmem:[%s154 + $0x8] sm:$0xff]
        %v180 = vld [vmem:[%s154 + $0x10] sm:$0xff]
        %v181 = vld [vmem:[%s154 + $0x18] sm:$0xff]
        %v182 = vld [vmem:[%s154 + $0x20] sm:$0xff]
        %v183 = vld [vmem:[%s154 + $0x28] sm:$0xff]
        %v184 = vld [vmem:[%s154 + $0x30] sm:$0xff]
        %v185 = vld [vmem:[%s154 + $0x38] sm:$0xff]
        %v186 = vld [vmem:[%s154 + $0x40] sm:$0xff]
        %v187 = vld [vmem:[%s154 + $0x48] sm:$0xff]
        %v188 = vld [vmem:[%s154 + $0x50] sm:$0xff]
        %v189 = vld [vmem:[%s154 + $0x58] sm:$0xff]
        %v190 = vld [vmem:[%s154 + $0x60] sm:$0xff]
        %v191 = vld [vmem:[%s154 + $0x68] sm:$0xff]
        %v192 = vld [vmem:[%s154 + $0x70] sm:$0xff]
        %v193 = vld [vmem:[%s154 + $0x78] sm:$0xff]
        %v194 = vld [vmem:[%s154 + $0x80] sm:$0xff]
        %v195 = vld [vmem:[%s154 + $0x88] sm:$0xff]
        %v196 = vld [vmem:[%s154 + $0x90] sm:$0xff]
        %v197 = vld [vmem:[%s154 + $0x98] sm:$0xff]
        %v198 = vld [vmem:[%s154 + $0xa0] sm:$0xff]
        %v199 = vld [vmem:[%s154 + $0xa8] sm:$0xff]
        %v200 = vld [vmem:[%s154 + $0xb0] sm:$0xff]
        %v201 = vld [vmem:[%s154 + $0xb8] sm:$0xff]
        %v202 = vld [vmem:[%s154 + $0xc0] sm:$0xff]
        %v203 = vld [vmem:[%s154 + $0xc8] sm:$0xff]
        %v204 = vld [vmem:[%s154 + $0xd0] sm:$0xff]
        %v205 = vld [vmem:[%s154 + $0xd8] sm:$0xff]
        %v206 = vld [vmem:[%s154 + $0xe0] sm:$0xff]
        %v207 = vld [vmem:[%s154 + $0xe8] sm:$0xff]
        %v208 = vld [vmem:[%s154 + $0xf0] sm:$0xff]
        %v209 = vld [vmem:[%s154 + $0xf8] sm:$0xff]
        %v210 = vld [vmem:[%s154 + $0x100] sm:$0xff]
        %v211 = vld [vmem:[%s154 + $0x108] sm:$0xff]
        %v212 = vld [vmem:[%s154 + $0x110] sm:$0xff]
        %v213 = vld [vmem:[%s154 + $0x118] sm:$0xff]
        %v214 = vld [vmem:[%s154 + $0x120] sm:$0xff]
        %v215 = vld [vmem:[%s154 + $0x128] sm:$0xff]
        %v216 = vld [vmem:[%s154 + $0x130] sm:$0xff]
        %v217 = vld [vmem:[%s154 + $0x138] sm:$0xff]
        %v218 = vld [vmem:[%s154 + $0x140] sm:$0xff]
        %v219 = vld [vmem:[%s154 + $0x148] sm:$0xff]
        %v220 = vld [vmem:[%s154 + $0x150] sm:$0xff]
        %v221 = vld [vmem:[%s154 + $0x158] sm:$0xff]
        %v222 = vld [vmem:[%s154 + $0x160] sm:$0xff]
        %v223 = vld [vmem:[%s154 + $0x168] sm:$0xff]
        %v224 = vld [vmem:[%s154 + $0x170] sm:$0xff]
        %v225 = vld [vmem:[%s154 + $0x178] sm:$0xff]
        %v226 = vld [vmem:[%s154 + $0x180] sm:$0xff]
        %v227 = vld [vmem:[%s154 + $0x188] sm:$0xff]
        %v228 = vld [vmem:[%s154 + $0x190] sm:$0xff]
        %v229 = vld [vmem:[%s154 + $0x198] sm:$0xff]
        %v230 = vld [vmem:[%s154 + $0x1a0] sm:$0xff]
        %v231 = vld [vmem:[%s154 + $0x1a8] sm:$0xff]
        %v232 = vld [vmem:[%s154 + $0x1b0] sm:$0xff]
        %v233 = vld [vmem:[%s154 + $0x1b8] sm:$0xff]
        %v234 = vld [vmem:[%s154 + $0x1c0] sm:$0xff]
        %v235 = vld [vmem:[%s154 + $0x1c8] sm:$0xff]
        %v236 = vld [vmem:[%s154 + $0x1d0] sm:$0xff]
        %v237 = vld [vmem:[%s154 + $0x1d8] sm:$0xff]
        %v238 = vld [vmem:[%s154 + $0x1e0] sm:$0xff]
        %v239 = vld [vmem:[%s154 + $0x1e8] sm:$0xff]
        %v240 = vld [vmem:[%s154 + $0x1f0] sm:$0xff]
        %v241 = vld [vmem:[%s154 + $0x1f8] sm:$0xff]
        %v242 = vld [vmem:[%s154 + $0x200] sm:$0xff]
        %v243 = vld [vmem:[%s154 + $0x208] sm:$0xff]
        %v244 = vld [vmem:[%s154 + $0x210] sm:$0xff]
        %v245 = vld [vmem:[%s154 + $0x218] sm:$0xff]
        %v246 = vld [vmem:[%s154 + $0x220] sm:$0xff]
        %v247 = vld [vmem:[%s154 + $0x228] sm:$0xff]
        %v248 = vld [vmem:[%s154 + $0x230] sm:$0xff]
        %v249 = vld [vmem:[%s154 + $0x238] sm:$0xff]
        %v250 = vld [vmem:[%s154 + $0x240] sm:$0xff]
        %v251 = vld [vmem:[%s154 + $0x248] sm:$0xff]
        %v252 = vld [vmem:[%s154 + $0x250] sm:$0xff]
        %v253 = vld [vmem:[%s154 + $0x258] sm:$0xff]
        %v254 = vld [vmem:[%s154 + $0x260] sm:$0xff]
        %v255 = vld [vmem:[%s154 + $0x268] sm:$0xff]
        %v256 = vld [vmem:[%s154 + $0x270] sm:$0xff]
        %v257 = vld [vmem:[%s154 + $0x278] sm:$0xff]
        %v258 = vld [vmem:[%s154 + $0x280] sm:$0xff]
        %v259 = vld [vmem:[%s154 + $0x288] sm:$0xff]
        %v260 = vld [vmem:[%s154 + $0x290] sm:$0xff]
        %v261 = vld [vmem:[%s154 + $0x298] sm:$0xff]
        %v262 = vld [vmem:[%s154 + $0x2a0] sm:$0xff]
        %v263 = vld [vmem:[%s154 + $0x2a8] sm:$0xff]
        %v264 = vld [vmem:[%s154 + $0x2b0] sm:$0xff]
        %v265 = vld [vmem:[%s154 + $0x2b8] sm:$0xff]
        %v266 = vld [vmem:[%s154 + $0x2c0] sm:$0xff]
        %v267 = vld [vmem:[%s154 + $0x2c8] sm:$0xff]
        %v268 = vld [vmem:[%s154 + $0x2d0] sm:$0xff]
        %v269 = vld [vmem:[%s154 + $0x2d8] sm:$0xff]
        %v270 = vld [vmem:[%s154 + $0x2e0] sm:$0xff]
        %v271 = vld [vmem:[%s154 + $0x2e8] sm:$0xff]
        %v272 = vld [vmem:[%s154 + $0x2f0] sm:$0xff]
        %v273 = vld [vmem:[%s154 + $0x2f8] sm:$0xff]
        %v274 = vld [vmem:[%s154 + $0x300] sm:$0xff]
        %v275 = vld [vmem:[%s154 + $0x308] sm:$0xff]
        %v276 = vld [vmem:[%s154 + $0x310] sm:$0xff]
        %v277 = vld [vmem:[%s154 + $0x318] sm:$0xff]
        %v278 = vld [vmem:[%s154 + $0x320] sm:$0xff]
        %v279 = vld [vmem:[%s154 + $0x328] sm:$0xff]
        %v280 = vld [vmem:[%s154 + $0x330] sm:$0xff]
        %v281 = vld [vmem:[%s154 + $0x338] sm:$0xff]
        %v282 = vld [vmem:[%s154 + $0x340] sm:$0xff]
        %v283 = vld [vmem:[%s154 + $0x348] sm:$0xff]
        %v284 = vld [vmem:[%s154 + $0x350] sm:$0xff]
        %v285 = vld [vmem:[%s154 + $0x358] sm:$0xff]
        %v286 = vld [vmem:[%s154 + $0x360] sm:$0xff]
        %v287 = vld [vmem:[%s154 + $0x368] sm:$0xff]
        %v288 = vld [vmem:[%s154 + $0x370] sm:$0xff]
        %v289 = vld [vmem:[%s154 + $0x378] sm:$0xff]
        %v290 = vld [vmem:[%s154 + $0x380] sm:$0xff]
        %v291 = vld [vmem:[%s154 + $0x388] sm:$0xff]
        %v292 = vld [vmem:[%s154 + $0x390] sm:$0xff]
        %v293 = vld [vmem:[%s154 + $0x398] sm:$0xff]
        %v294 = vld [vmem:[%s154 + $0x3a0] sm:$0xff]
        %v295 = vld [vmem:[%s154 + $0x3a8] sm:$0xff]
        %v296 = vld [vmem:[%s154 + $0x3b0] sm:$0xff]
        %v297 = vld [vmem:[%s154 + $0x3b8] sm:$0xff]
        %v298 = vld [vmem:[%s154 + $0x3c0] sm:$0xff]
        %v299 = vld [vmem:[%s154 + $0x3c8] sm:$0xff]
        %v300 = vld [vmem:[%s154 + $0x3d0] sm:$0xff]
        %v301 = vld [vmem:[%s154 + $0x3d8] sm:$0xff]
        %v302 = vld [vmem:[%s154 + $0x3e0] sm:$0xff]
        %v303 = vld [vmem:[%s154 + $0x3e8] sm:$0xff]
        %v304 = vld [vmem:[%s154 + $0x3f0] sm:$0xff]
        %v305 = vld [vmem:[%s154 + $0x3f8] sm:$0xff]
        %v306 = vld [vmem:[%s154 + $0x400] sm:$0xff]
        %v307 = vld [vmem:[%s154 + $0x408] sm:$0xff]
        %v308 = vld [vmem:[%s154 + $0x410] sm:$0xff]
        %v309 = vld [vmem:[%s154 + $0x418] sm:$0xff]
        %v310 = vld [vmem:[%s154 + $0x420] sm:$0xff]
        %v311 = vld [vmem:[%s154 + $0x428] sm:$0xff]
        %v312 = vld [vmem:[%s154 + $0x430] sm:$0xff]
        %v313 = vld [vmem:[%s154 + $0x438] sm:$0xff]
        %v314 = vld [vmem:[%s154 + $0x440] sm:$0xff]
        %v315 = vld [vmem:[%s154 + $0x448] sm:$0xff]
        %v316 = vld [vmem:[%s154 + $0x450] sm:$0xff]
        %v317 = vld [vmem:[%s154 + $0x458] sm:$0xff]
        %v318 = vld [vmem:[%s154 + $0x460] sm:$0xff]
        %v319 = vld [vmem:[%s154 + $0x468] sm:$0xff]
        %v320 = vld [vmem:[%s154 + $0x470] sm:$0xff]
        %v321 = vld [vmem:[%s154 + $0x478] sm:$0xff]
        %v322 = vld [vmem:[%s154 + $0x480] sm:$0xff]
        %v323 = vld [vmem:[%s154 + $0x488] sm:$0xff]
        %v324 = vld [vmem:[%s154 + $0x490] sm:$0xff]
        %v325 = vld [vmem:[%s154 + $0x498] sm:$0xff]
        %v326 = vld [vmem:[%s154 + $0x4a0] sm:$0xff]
        %v327 = vld [vmem:[%s154 + $0x4a8] sm:$0xff]
        %v328 = vld [vmem:[%s154 + $0x4b0] sm:$0xff]
        %v329 = vld [vmem:[%s154 + $0x4b8] sm:$0xff]
        %v330 = vld [vmem:[%s154 + $0x4c0] sm:$0xff]
        %v331 = vld [vmem:[%s154 + $0x4c8] sm:$0xff]
        %v332 = vld [vmem:[%s154 + $0x4d0] sm:$0xff]
        %v333 = vld [vmem:[%s154 + $0x4d8] sm:$0xff]
        %v334 = vld [vmem:[%s154 + $0x4e0] sm:$0xff]
        %v335 = vld [vmem:[%s154 + $0x4e8] sm:$0xff]
        %v336 = vld [vmem:[%s154 + $0x4f0] sm:$0xff]
        %v337 = vld [vmem:[%s154 + $0x4f8] sm:$0xff]
        %v338 = vld [vmem:[%s154 + $0x500] sm:$0xff]
        %v339 = vld [vmem:[%s154 + $0x508] sm:$0xff]
        %v340 = vld [vmem:[%s154 + $0x510] sm:$0xff]
        %v341 = vld [vmem:[%s154 + $0x518] sm:$0xff]
        %v342 = vld [vmem:[%s154 + $0x520] sm:$0xff]
        %v343 = vld [vmem:[%s154 + $0x528] sm:$0xff]
        %v344 = vld [vmem:[%s154 + $0x530] sm:$0xff]
        %v345 = vld [vmem:[%s154 + $0x538] sm:$0xff]
        %v346 = vld [vmem:[%s154 + $0x540] sm:$0xff]
        %v347 = vld [vmem:[%s154 + $0x548] sm:$0xff]
        %v348 = vld [vmem:[%s154 + $0x550] sm:$0xff]
        %v349 = vld [vmem:[%s154 + $0x558] sm:$0xff]
        %v350 = vld [vmem:[%s154 + $0x560] sm:$0xff]
        %v351 = vld [vmem:[%s154 + $0x568] sm:$0xff]
        %v352 = vld [vmem:[%s154 + $0x570] sm:$0xff]
        %v353 = vld [vmem:[%s154 + $0x578] sm:$0xff]
        %v354 = vld [vmem:[%s154 + $0x580] sm:$0xff]
        %v355 = vld [vmem:[%s154 + $0x588] sm:$0xff]
        %v356 = vld [vmem:[%s154 + $0x590] sm:$0xff]
        %v357 = vld [vmem:[%s154 + $0x598] sm:$0xff]
        %v358 = vld [vmem:[%s154 + $0x5a0] sm:$0xff]
        %v359 = vld [vmem:[%s154 + $0x5a8] sm:$0xff]
        %v360 = vld [vmem:[%s154 + $0x5b0] sm:$0xff]
        %v361 = vld [vmem:[%s154 + $0x5b8] sm:$0xff]
        %v362 = vld [vmem:[%s154 + $0x5c0] sm:$0xff]
        %v363 = vld [vmem:[%s154 + $0x5c8] sm:$0xff]
        %v364 = vld [vmem:[%s154 + $0x5d0] sm:$0xff]
        %v365 = vld [vmem:[%s154 + $0x5d8] sm:$0xff]
        %v366 = vld [vmem:[%s154 + $0x5e0] sm:$0xff]
        %v367 = vld [vmem:[%s154 + $0x5e8] sm:$0xff]
        %v368 = vld [vmem:[%s154 + $0x5f0] sm:$0xff]
        %v369 = vld [vmem:[%s154 + $0x5f8] sm:$0xff]
        %v370 = vld [vmem:[%s154 + $0x600] sm:$0xff]
        %v371 = vld [vmem:[%s154 + $0x608] sm:$0xff]
        %v372 = vld [vmem:[%s154 + $0x610] sm:$0xff]
        %v373 = vld [vmem:[%s154 + $0x618] sm:$0xff]
        %v374 = vld [vmem:[%s154 + $0x620] sm:$0xff]
        %v375 = vld [vmem:[%s154 + $0x628] sm:$0xff]
        %v376 = vld [vmem:[%s154 + $0x630] sm:$0xff]
        %v377 = vld [vmem:[%s154 + $0x638] sm:$0xff]
        %v378 = vld [vmem:[%s154 + $0x640] sm:$0xff]
        %v379 = vld [vmem:[%s154 + $0x648] sm:$0xff]
        %v380 = vld [vmem:[%s154 + $0x650] sm:$0xff]
        %v381 = vld [vmem:[%s154 + $0x658] sm:$0xff]
        %v382 = vld [vmem:[%s154 + $0x660] sm:$0xff]
        %v383 = vld [vmem:[%s154 + $0x668] sm:$0xff]
        %v384 = vld [vmem:[%s154 + $0x670] sm:$0xff]
        %v385 = vld [vmem:[%s154 + $0x678] sm:$0xff]
        %v386 = vld [vmem:[%s154 + $0x680] sm:$0xff]
        %v387 = vld [vmem:[%s154 + $0x688] sm:$0xff]
        %v388 = vld [vmem:[%s154 + $0x690] sm:$0xff]
        %v389 = vld [vmem:[%s154 + $0x698] sm:$0xff]
        %v390 = vld [vmem:[%s154 + $0x6a0] sm:$0xff]
        %v391 = vld [vmem:[%s154 + $0x6a8] sm:$0xff]
        %v392 = vld [vmem:[%s154 + $0x6b0] sm:$0xff]
        %v393 = vld [vmem:[%s154 + $0x6b8] sm:$0xff]
        %v394 = vld [vmem:[%s154 + $0x6c0] sm:$0xff]
        %v395 = vld [vmem:[%s154 + $0x6c8] sm:$0xff]
        %v396 = vld [vmem:[%s154 + $0x6d0] sm:$0xff]
        %v397 = vld [vmem:[%s154 + $0x6d8] sm:$0xff]
        %v398 = vld [vmem:[%s154 + $0x6e0] sm:$0xff]
        %v399 = vld [vmem:[%s154 + $0x6e8] sm:$0xff]
        %v400 = vld [vmem:[%s154 + $0x6f0] sm:$0xff]
        %v401 = vld [vmem:[%s154 + $0x6f8] sm:$0xff]
        %v402 = vld [vmem:[%s154 + $0x700] sm:$0xff]
        %v403 = vld [vmem:[%s154 + $0x708] sm:$0xff]
        %v404 = vld [vmem:[%s154 + $0x710] sm:$0xff]
        %v405 = vld [vmem:[%s154 + $0x718] sm:$0xff]
        %v406 = vld [vmem:[%s154 + $0x720] sm:$0xff]
        %v407 = vld [vmem:[%s154 + $0x728] sm:$0xff]
        %v408 = vld [vmem:[%s154 + $0x730] sm:$0xff]
        %v409 = vld [vmem:[%s154 + $0x738] sm:$0xff]
        %v410 = vld [vmem:[%s154 + $0x740] sm:$0xff]
        %v411 = vld [vmem:[%s154 + $0x748] sm:$0xff]
        %v412 = vld [vmem:[%s154 + $0x750] sm:$0xff]
        %v413 = vld [vmem:[%s154 + $0x758] sm:$0xff]
        %v414 = vld [vmem:[%s154 + $0x760] sm:$0xff]
        %v415 = vld [vmem:[%s154 + $0x768] sm:$0xff]
        %v416 = vld [vmem:[%s154 + $0x770] sm:$0xff]
        %v417 = vld [vmem:[%s154 + $0x778] sm:$0xff]
        %v418 = vld [vmem:[%s154 + $0x780] sm:$0xff]
        %v419 = vld [vmem:[%s154 + $0x788] sm:$0xff]
        %v420 = vld [vmem:[%s154 + $0x790] sm:$0xff]
        %v421 = vld [vmem:[%s154 + $0x798] sm:$0xff]
        %v422 = vld [vmem:[%s154 + $0x7a0] sm:$0xff]
        %v423 = vld [vmem:[%s154 + $0x7a8] sm:$0xff]
        %v424 = vld [vmem:[%s154 + $0x7b0] sm:$0xff]
        %v425 = vld [vmem:[%s154 + $0x7b8] sm:$0xff]
        %v426 = vld [vmem:[%s154 + $0x7c0] sm:$0xff]
        %v427 = vld [vmem:[%s154 + $0x7c8] sm:$0xff]
        %v428 = vld [vmem:[%s154 + $0x7d0] sm:$0xff]
        %v429 = vld [vmem:[%s154 + $0x7d8] sm:$0xff]
        %v430 = vld [vmem:[%s154 + $0x7e0] sm:$0xff]
        %v431 = vld [vmem:[%s154 + $0x7e8] sm:$0xff]
        %v432 = vld [vmem:[%s154 + $0x7f0] sm:$0xff]
        %v433 = vld [vmem:[%s154 + $0x7f8] sm:$0xff]
        %v434 = vld [vmem:[%s154 + $0x800] sm:$0xff]
        %v435 = vld [vmem:[%s154 + $0x808] sm:$0xff]
        %v436 = vld [vmem:[%s154 + $0x810] sm:$0xff]
        %v437 = vld [vmem:[%s154 + $0x818] sm:$0xff]
        %v438 = vld [vmem:[%s154 + $0x820] sm:$0xff]
        %v439 = vld [vmem:[%s154 + $0x828] sm:$0xff]
        %v440 = vld [vmem:[%s154 + $0x830] sm:$0xff]
        %v441 = vld [vmem:[%s154 + $0x838] sm:$0xff]
        %v442 = vld [vmem:[%s154 + $0x840] sm:$0xff]
        %v443 = vld [vmem:[%s154 + $0x848] sm:$0xff]
        %v444 = vld [vmem:[%s154 + $0x850] sm:$0xff]
        %v445 = vld [vmem:[%s154 + $0x858] sm:$0xff]
        %v446 = vld [vmem:[%s154 + $0x860] sm:$0xff]
        %v447 = vld [vmem:[%s154 + $0x868] sm:$0xff]
        %v448 = vld [vmem:[%s154 + $0x870] sm:$0xff]
        %v449 = vld [vmem:[%s154 + $0x878] sm:$0xff]
        %v450 = vld [vmem:[%s154 + $0x880] sm:$0xff]
        %v451 = vld [vmem:[%s154 + $0x888] sm:$0xff]
        %v452 = vld [vmem:[%s154 + $0x890] sm:$0xff]
        %v453 = vld [vmem:[%s154 + $0x898] sm:$0xff]
        %v454 = vld [vmem:[%s154 + $0x8a0] sm:$0xff]
        %v455 = vld [vmem:[%s154 + $0x8a8] sm:$0xff]
        %v456 = vld [vmem:[%s154 + $0x8b0] sm:$0xff]
        %v457 = vld [vmem:[%s154 + $0x8b8] sm:$0xff]
        %v458 = vld [vmem:[%s154 + $0x8c0] sm:$0xff]
        %v459 = vld [vmem:[%s154 + $0x8c8] sm:$0xff]
        %v460 = vld [vmem:[%s154 + $0x8d0] sm:$0xff]
        %v461 = vld [vmem:[%s154 + $0x8d8] sm:$0xff]
        %v462 = vld [vmem:[%s154 + $0x8e0] sm:$0xff]
        %v463 = vld [vmem:[%s154 + $0x8e8] sm:$0xff]
        %v464 = vld [vmem:[%s154 + $0x8f0] sm:$0xff]
        %v465 = vld [vmem:[%s154 + $0x8f8] sm:$0xff]
        %v466 = vld [vmem:[%s154 + $0x900] sm:$0xff]
        %v467 = vld [vmem:[%s154 + $0x908] sm:$0xff]
        %v468 = vld [vmem:[%s154 + $0x910] sm:$0xff]
        %v469 = vld [vmem:[%s154 + $0x918] sm:$0xff]
        %v470 = vld [vmem:[%s154 + $0x920] sm:$0xff]
        %v471 = vld [vmem:[%s154 + $0x928] sm:$0xff]
        %v472 = vld [vmem:[%s154 + $0x930] sm:$0xff]
        %v473 = vld [vmem:[%s154 + $0x938] sm:$0xff]
        %v474 = vld [vmem:[%s154 + $0x940] sm:$0xff]
        %v475 = vld [vmem:[%s154 + $0x948] sm:$0xff]
        %v476 = vld [vmem:[%s154 + $0x950] sm:$0xff]
        %v477 = vld [vmem:[%s154 + $0x958] sm:$0xff]
        %v478 = vld [vmem:[%s154 + $0x960] sm:$0xff]
        %v479 = vld [vmem:[%s154 + $0x968] sm:$0xff]
        %v480 = vld [vmem:[%s154 + $0x970] sm:$0xff]
        %v481 = vld [vmem:[%s154 + $0x978] sm:$0xff]
        %v482 = vld [vmem:[%s154 + $0x980] sm:$0xff]
        %v483 = vld [vmem:[%s154 + $0x988] sm:$0xff]
        %v484 = vld [vmem:[%s154 + $0x990] sm:$0xff]
        %v485 = vld [vmem:[%s154 + $0x998] sm:$0xff]
        %v486 = vld [vmem:[%s154 + $0x9a0] sm:$0xff]
        %v487 = vld [vmem:[%s154 + $0x9a8] sm:$0xff]
        %v488 = vld [vmem:[%s154 + $0x9b0] sm:$0xff]
        %v489 = vld [vmem:[%s154 + $0x9b8] sm:$0xff]
        %v490 = vld [vmem:[%s154 + $0x9c0] sm:$0xff]
        %v491 = vld [vmem:[%s154 + $0x9c8] sm:$0xff]
        %v492 = vld [vmem:[%s154 + $0x9d0] sm:$0xff]
        %v493 = vld [vmem:[%s154 + $0x9d8] sm:$0xff]
        %v494 = vld [vmem:[%s154 + $0x9e0] sm:$0xff]
        %v495 = vld [vmem:[%s154 + $0x9e8] sm:$0xff]
        %v496 = vld [vmem:[%s154 + $0x9f0] sm:$0xff]
        %v497 = vld [vmem:[%s154 + $0x9f8] sm:$0xff]
        %v498 = vld [vmem:[%s154 + $0xa00] sm:$0xff]
        %v499 = vld [vmem:[%s154 + $0xa08] sm:$0xff]
        %v500 = vld [vmem:[%s154 + $0xa10] sm:$0xff]
        %v501 = vld [vmem:[%s154 + $0xa18] sm:$0xff]
        %v502 = vld [vmem:[%s154 + $0xa20] sm:$0xff]
        %v503 = vld [vmem:[%s154 + $0xa28] sm:$0xff]
        %v504 = vld [vmem:[%s154 + $0xa30] sm:$0xff]
        %v505 = vld [vmem:[%s154 + $0xa38] sm:$0xff]
        %v506 = vld [vmem:[%s154 + $0xa40] sm:$0xff]
        %v507 = vld [vmem:[%s154 + $0xa48] sm:$0xff]
        %v508 = vld [vmem:[%s154 + $0xa50] sm:$0xff]
        %v509 = vld [vmem:[%s154 + $0xa58] sm:$0xff]
        %v510 = vld [vmem:[%s154 + $0xa60] sm:$0xff]
        %v511 = vld [vmem:[%s154 + $0xa68] sm:$0xff]
        %v512 = vld [vmem:[%s154 + $0xa70] sm:$0xff]
        %v513 = vld [vmem:[%s154 + $0xa78] sm:$0xff]
        %v514 = vld [vmem:[%s154 + $0xa80] sm:$0xff]
        %v515 = vld [vmem:[%s154 + $0xa88] sm:$0xff]
        %v516 = vld [vmem:[%s154 + $0xa90] sm:$0xff]
        %v517 = vld [vmem:[%s154 + $0xa98] sm:$0xff]
        %v518 = vld [vmem:[%s154 + $0xaa0] sm:$0xff]
        %v519 = vld [vmem:[%s154 + $0xaa8] sm:$0xff]
        %v520 = vld [vmem:[%s154 + $0xab0] sm:$0xff]
        %v521 = vld [vmem:[%s154 + $0xab8] sm:$0xff]
        %v522 = vld [vmem:[%s154 + $0xac0] sm:$0xff]
        %v523 = vld [vmem:[%s154 + $0xac8] sm:$0xff]
        %v524 = vld [vmem:[%s154 + $0xad0] sm:$0xff]
        %v525 = vld [vmem:[%s154 + $0xad8] sm:$0xff]
        %v526 = vld [vmem:[%s154 + $0xae0] sm:$0xff]
        %v527 = vld [vmem:[%s154 + $0xae8] sm:$0xff]
        %v528 = vld [vmem:[%s154 + $0xaf0] sm:$0xff]
        %v529 = vld [vmem:[%s154 + $0xaf8] sm:$0xff]
        %v530 = vld [vmem:[%s154 + $0xb00] sm:$0xff]
        %v531 = vld [vmem:[%s154 + $0xb08] sm:$0xff]
        %v532 = vld [vmem:[%s154 + $0xb10] sm:$0xff]
        %v533 = vld [vmem:[%s154 + $0xb18] sm:$0xff]
        %v534 = vld [vmem:[%s154 + $0xb20] sm:$0xff]
        %v535 = vld [vmem:[%s154 + $0xb28] sm:$0xff]
        %v536 = vld [vmem:[%s154 + $0xb30] sm:$0xff]
        %v537 = vld [vmem:[%s154 + $0xb38] sm:$0xff]
        %v538 = vld [vmem:[%s154 + $0xb40] sm:$0xff]
        %v539 = vld [vmem:[%s154 + $0xb48] sm:$0xff]
        %v540 = vld [vmem:[%s154 + $0xb50] sm:$0xff]
        %v541 = vld [vmem:[%s154 + $0xb58] sm:$0xff]
        %v542 = vld [vmem:[%s154 + $0xb60] sm:$0xff]
        %v543 = vld [vmem:[%s154 + $0xb68] sm:$0xff]
        %v544 = vld [vmem:[%s154 + $0xb70] sm:$0xff]
        %v545 = vld [vmem:[%s154 + $0xb78] sm:$0xff]
        %v546 = vld [vmem:[%s154 + $0xb80] sm:$0xff]
        %v547 = vld [vmem:[%s154 + $0xb88] sm:$0xff]
        %v548 = vld [vmem:[%s154 + $0xb90] sm:$0xff]
        %v549 = vld [vmem:[%s154 + $0xb98] sm:$0xff]
        %v550 = vld [vmem:[%s154 + $0xba0] sm:$0xff]
        %v551 = vld [vmem:[%s154 + $0xba8] sm:$0xff]
        %v552 = vld [vmem:[%s154 + $0xbb0] sm:$0xff]
        %v553 = vld [vmem:[%s154 + $0xbb8] sm:$0xff]
        %v554 = vld [vmem:[%s154 + $0xbc0] sm:$0xff]
        %v555 = vld [vmem:[%s154 + $0xbc8] sm:$0xff]
        %v556 = vld [vmem:[%s154 + $0xbd0] sm:$0xff]
        %v557 = vld [vmem:[%s154 + $0xbd8] sm:$0xff]
        %v558 = vld [vmem:[%s154 + $0xbe0] sm:$0xff]
        %v559 = vld [vmem:[%s154 + $0xbe8] sm:$0xff]
        %v560 = vld [vmem:[%s154 + $0xbf0] sm:$0xff]
        %v561 = vld [vmem:[%s154 + $0xbf8] sm:$0xff]
        %v562 = vld [vmem:[%s154 + $0xc00] sm:$0xff]
        %v563 = vld [vmem:[%s154 + $0xc08] sm:$0xff]
        %v564 = vld [vmem:[%s154 + $0xc10] sm:$0xff]
        %v565 = vld [vmem:[%s154 + $0xc18] sm:$0xff]
        %v566 = vld [vmem:[%s154 + $0xc20] sm:$0xff]
        %v567 = vld [vmem:[%s154 + $0xc28] sm:$0xff]
        %v568 = vld [vmem:[%s154 + $0xc30] sm:$0xff]
        %v569 = vld [vmem:[%s154 + $0xc38] sm:$0xff]
        %v570 = vld [vmem:[%s154 + $0xc40] sm:$0xff]
        %v571 = vld [vmem:[%s154 + $0xc48] sm:$0xff]
        %v572 = vld [vmem:[%s154 + $0xc50] sm:$0xff]
        %v573 = vld [vmem:[%s154 + $0xc58] sm:$0xff]
        %v574 = vld [vmem:[%s154 + $0xc60] sm:$0xff]
        %v575 = vld [vmem:[%s154 + $0xc68] sm:$0xff]
        %v576 = vld [vmem:[%s154 + $0xc70] sm:$0xff]
        %v577 = vld [vmem:[%s154 + $0xc78] sm:$0xff]
        %v578 = vld [vmem:[%s154 + $0xc80] sm:$0xff]
        %v579 = vld [vmem:[%s154 + $0xc88] sm:$0xff]
        %v580 = vld [vmem:[%s154 + $0xc90] sm:$0xff]
        %v581 = vld [vmem:[%s154 + $0xc98] sm:$0xff]
        %v582 = vld [vmem:[%s154 + $0xca0] sm:$0xff]
        %v583 = vld [vmem:[%s154 + $0xca8] sm:$0xff]
        %v584 = vld [vmem:[%s154 + $0xcb0] sm:$0xff]
        %v585 = vld [vmem:[%s154 + $0xcb8] sm:$0xff]
        %v586 = vld [vmem:[%s154 + $0xcc0] sm:$0xff]
        %v587 = vld [vmem:[%s154 + $0xcc8] sm:$0xff]
        %v588 = vld [vmem:[%s154 + $0xcd0] sm:$0xff]
        %v589 = vld [vmem:[%s154 + $0xcd8] sm:$0xff]
        %v590 = vld [vmem:[%s154 + $0xce0] sm:$0xff]
        %v591 = vld [vmem:[%s154 + $0xce8] sm:$0xff]
        %v592 = vld [vmem:[%s154 + $0xcf0] sm:$0xff]
        %v593 = vld [vmem:[%s154 + $0xcf8] sm:$0xff]
        %v594 = vld [vmem:[%s154 + $0xd00] sm:$0xff]
        %v595 = vld [vmem:[%s154 + $0xd08] sm:$0xff]
        %v596 = vld [vmem:[%s154 + $0xd10] sm:$0xff]
        %v597 = vld [vmem:[%s154 + $0xd18] sm:$0xff]
        %v598 = vld [vmem:[%s154 + $0xd20] sm:$0xff]
        %v599 = vld [vmem:[%s154 + $0xd28] sm:$0xff]
        %v600 = vld [vmem:[%s154 + $0xd30] sm:$0xff]
        %v601 = vld [vmem:[%s154 + $0xd38] sm:$0xff]
        %v602 = vld [vmem:[%s154 + $0xd40] sm:$0xff]
        %v603 = vld [vmem:[%s154 + $0xd48] sm:$0xff]
        %v604 = vld [vmem:[%s154 + $0xd50] sm:$0xff]
        %v605 = vld [vmem:[%s154 + $0xd58] sm:$0xff]
        %v606 = vld [vmem:[%s154 + $0xd60] sm:$0xff]
        %v607 = vld [vmem:[%s154 + $0xd68] sm:$0xff]
        %v608 = vld [vmem:[%s154 + $0xd70] sm:$0xff]
        %v609 = vld [vmem:[%s154 + $0xd78] sm:$0xff]
        %v610 = vld [vmem:[%s154 + $0xd80] sm:$0xff]
        %v611 = vld [vmem:[%s154 + $0xd88] sm:$0xff]
        %v612 = vld [vmem:[%s154 + $0xd90] sm:$0xff]
        %v613 = vld [vmem:[%s154 + $0xd98] sm:$0xff]
        %v614 = vld [vmem:[%s154 + $0xda0] sm:$0xff]
        %v615 = vld [vmem:[%s154 + $0xda8] sm:$0xff]
        %v616 = vld [vmem:[%s154 + $0xdb0] sm:$0xff]
        %v617 = vld [vmem:[%s154 + $0xdb8] sm:$0xff]
        %v618 = vld [vmem:[%s154 + $0xdc0] sm:$0xff]
        %v619 = vld [vmem:[%s154 + $0xdc8] sm:$0xff]
        %v620 = vld [vmem:[%s154 + $0xdd0] sm:$0xff]
        %v621 = vld [vmem:[%s154 + $0xdd8] sm:$0xff]
        %v622 = vld [vmem:[%s154 + $0xde0] sm:$0xff]
        %v623 = vld [vmem:[%s154 + $0xde8] sm:$0xff]
        %v624 = vld [vmem:[%s154 + $0xdf0] sm:$0xff]
        %v625 = vld [vmem:[%s154 + $0xdf8] sm:$0xff]
        %v626 = vld [vmem:[%s154 + $0xe00] sm:$0xff]
        %v627 = vld [vmem:[%s154 + $0xe08] sm:$0xff]
        %v628 = vld [vmem:[%s154 + $0xe10] sm:$0xff]
        %v629 = vld [vmem:[%s154 + $0xe18] sm:$0xff]
        %v630 = vld [vmem:[%s154 + $0xe20] sm:$0xff]
        %v631 = vld [vmem:[%s154 + $0xe28] sm:$0xff]
        %v632 = vld [vmem:[%s154 + $0xe30] sm:$0xff]
        %v633 = vld [vmem:[%s154 + $0xe38] sm:$0xff]
        %v634 = vld [vmem:[%s154 + $0xe40] sm:$0xff]
        %v635 = vld [vmem:[%s154 + $0xe48] sm:$0xff]
        %v636 = vld [vmem:[%s154 + $0xe50] sm:$0xff]
        %v637 = vld [vmem:[%s154 + $0xe58] sm:$0xff]
        %v638 = vld [vmem:[%s154 + $0xe60] sm:$0xff]
        %v639 = vld [vmem:[%s154 + $0xe68] sm:$0xff]
        %v640 = vld [vmem:[%s154 + $0xe70] sm:$0xff]
        %v641 = vld [vmem:[%s154 + $0xe78] sm:$0xff]
        %v642 = vld [vmem:[%s154 + $0xe80] sm:$0xff]
        %v643 = vld [vmem:[%s154 + $0xe88] sm:$0xff]
        %v644 = vld [vmem:[%s154 + $0xe90] sm:$0xff]
        %v645 = vld [vmem:[%s154 + $0xe98] sm:$0xff]
        %v646 = vld [vmem:[%s154 + $0xea0] sm:$0xff]
        %v647 = vld [vmem:[%s154 + $0xea8] sm:$0xff]
        %v648 = vld [vmem:[%s154 + $0xeb0] sm:$0xff]
        %v649 = vld [vmem:[%s154 + $0xeb8] sm:$0xff]
        %v650 = vld [vmem:[%s154 + $0xec0] sm:$0xff]
        %v651 = vld [vmem:[%s154 + $0xec8] sm:$0xff]
        %v652 = vld [vmem:[%s154 + $0xed0] sm:$0xff]
        %v653 = vld [vmem:[%s154 + $0xed8] sm:$0xff]
        %v654 = vld [vmem:[%s154 + $0xee0] sm:$0xff]
        %v655 = vld [vmem:[%s154 + $0xee8] sm:$0xff]
        %v656 = vld [vmem:[%s154 + $0xef0] sm:$0xff]
        %v657 = vld [vmem:[%s154 + $0xef8] sm:$0xff]
        %v658 = vld [vmem:[%s154 + $0xf00] sm:$0xff]
        %v659 = vld [vmem:[%s154 + $0xf08] sm:$0xff]
        %v660 = vld [vmem:[%s154 + $0xf10] sm:$0xff]
        %v661 = vld [vmem:[%s154 + $0xf18] sm:$0xff]
        %v662 = vld [vmem:[%s154 + $0xf20] sm:$0xff]
        %v663 = vld [vmem:[%s154 + $0xf28] sm:$0xff]
        %v664 = vld [vmem:[%s154 + $0xf30] sm:$0xff]
        %v665 = vld [vmem:[%s154 + $0xf38] sm:$0xff]
        %v666 = vld [vmem:[%s154 + $0xf40] sm:$0xff]
        %v667 = vld [vmem:[%s154 + $0xf48] sm:$0xff]
        %v668 = vld [vmem:[%s154 + $0xf50] sm:$0xff]
        %v669 = vld [vmem:[%s154 + $0xf58] sm:$0xff]
        %v670 = vld [vmem:[%s154 + $0xf60] sm:$0xff]
        %v671 = vld [vmem:[%s154 + $0xf68] sm:$0xff]
        %v672 = vld [vmem:[%s154 + $0xf70] sm:$0xff]
        %v673 = vld [vmem:[%s154 + $0xf78] sm:$0xff]
        %v674 = vld [vmem:[%s154 + $0xf80] sm:$0xff]
        %v675 = vld [vmem:[%s154 + $0xf88] sm:$0xff]
        %v676 = vld [vmem:[%s154 + $0xf90] sm:$0xff]
        %v677 = vld [vmem:[%s154 + $0xf98] sm:$0xff]
        %v678 = vld [vmem:[%s154 + $0xfa0] sm:$0xff]
        %v679 = vld [vmem:[%s154 + $0xfa8] sm:$0xff]
        %v680 = vld [vmem:[%s154 + $0xfb0] sm:$0xff]
        %v681 = vld [vmem:[%s154 + $0xfb8] sm:$0xff]
        %v682 = vld [vmem:[%s154 + $0xfc0] sm:$0xff]
        %v683 = vld [vmem:[%s154 + $0xfc8] sm:$0xff]
        %v684 = vld [vmem:[%s154 + $0xfd0] sm:$0xff]
        %v685 = vld [vmem:[%s154 + $0xfd8] sm:$0xff]
        %v686 = vld [vmem:[%s154 + $0xfe0] sm:$0xff]
        %v687 = vld [vmem:[%s154 + $0xfe8] sm:$0xff]
        %v688 = vld [vmem:[%s154 + $0xff0] sm:$0xff]
        %v689 = vld [vmem:[%s154 + $0xff8] sm:$0xff]
        %v691 = vunpack.c.l.b16 %v177
        %v692 = vunpack.c.h.b16 %v177
        %v693 = vpack.c.b16 %v691, %v691
        %v694 = vpack.c.b16 %v692, %v692
        %v1209 = vunpack.c.l.b16 %v178
        %v1210 = vunpack.c.h.b16 %v178
        %v1211 = vunpack.c.l.b16 %v179
        %v1212 = vunpack.c.h.b16 %v179
        %v1213 = vunpack.c.l.b16 %v180
        %v1214 = vunpack.c.h.b16 %v180
        %v1215 = vunpack.c.l.b16 %v181
        %v1216 = vunpack.c.h.b16 %v181
        %v1217 = vunpack.c.l.b16 %v182
        %v1218 = vunpack.c.h.b16 %v182
        %v1219 = vunpack.c.l.b16 %v183
        %v1220 = vunpack.c.h.b16 %v183
        %v1221 = vunpack.c.l.b16 %v184
        %v1222 = vunpack.c.h.b16 %v184
        %v1223 = vunpack.c.l.b16 %v185
        %v1224 = vunpack.c.h.b16 %v185
        %v1225 = vunpack.c.l.b16 %v186
        %v1226 = vunpack.c.h.b16 %v186
        %v1227 = vunpack.c.l.b16 %v187
        %v1228 = vunpack.c.h.b16 %v187
        %v1229 = vunpack.c.l.b16 %v188
        %v1230 = vunpack.c.h.b16 %v188
        %v1231 = vunpack.c.l.b16 %v189
        %v1232 = vunpack.c.h.b16 %v189
        %v1233 = vunpack.c.l.b16 %v190
        %v1234 = vunpack.c.h.b16 %v190
        %v1235 = vunpack.c.l.b16 %v191
        %v1236 = vunpack.c.h.b16 %v191
        %v1237 = vunpack.c.l.b16 %v192
        %v1238 = vunpack.c.h.b16 %v192
        %v1239 = vunpack.c.l.b16 %v193
        %v1240 = vunpack.c.h.b16 %v193
        %v1241 = vunpack.c.l.b16 %v194
        %v1242 = vunpack.c.h.b16 %v194
        %v1243 = vunpack.c.l.b16 %v195
        %v1244 = vunpack.c.h.b16 %v195
        %v1245 = vunpack.c.l.b16 %v196
        %v1246 = vunpack.c.h.b16 %v196
        %v1247 = vunpack.c.l.b16 %v197
        %v1248 = vunpack.c.h.b16 %v197
        %v1249 = vunpack.c.l.b16 %v198
        %v1250 = vunpack.c.h.b16 %v198
        %v1251 = vunpack.c.l.b16 %v199
        %v1252 = vunpack.c.h.b16 %v199
        %v1253 = vunpack.c.l.b16 %v200
        %v1254 = vunpack.c.h.b16 %v200
        %v1255 = vunpack.c.l.b16 %v201
        %v1256 = vunpack.c.h.b16 %v201
        %v1257 = vunpack.c.l.b16 %v202
        %v1258 = vunpack.c.h.b16 %v202
        %v1259 = vunpack.c.l.b16 %v203
        %v1260 = vunpack.c.h.b16 %v203
        %v1261 = vunpack.c.l.b16 %v204
        %v1262 = vunpack.c.h.b16 %v204
        %v1263 = vunpack.c.l.b16 %v205
        %v1264 = vunpack.c.h.b16 %v205
        %v1265 = vunpack.c.l.b16 %v206
        %v1266 = vunpack.c.h.b16 %v206
        %v1267 = vunpack.c.l.b16 %v207
        %v1268 = vunpack.c.h.b16 %v207
        %v1269 = vunpack.c.l.b16 %v208
        %v1270 = vunpack.c.h.b16 %v208
        %v1271 = vunpack.c.l.b16 %v209
        %v1272 = vunpack.c.h.b16 %v209
        %v1273 = vunpack.c.l.b16 %v210
        %v1274 = vunpack.c.h.b16 %v210
        %v1275 = vunpack.c.l.b16 %v211
        %v1276 = vunpack.c.h.b16 %v211
        %v1277 = vunpack.c.l.b16 %v212
        %v1278 = vunpack.c.h.b16 %v212
        %v1279 = vunpack.c.l.b16 %v213
        %v1280 = vunpack.c.h.b16 %v213
        %v1281 = vunpack.c.l.b16 %v214
        %v1282 = vunpack.c.h.b16 %v214
        %v1283 = vunpack.c.l.b16 %v215
        %v1284 = vunpack.c.h.b16 %v215
        %v1285 = vunpack.c.l.b16 %v216
        %v1286 = vunpack.c.h.b16 %v216
        %v1287 = vunpack.c.l.b16 %v217
        %v1288 = vunpack.c.h.b16 %v217
        %v1289 = vunpack.c.l.b16 %v218
        %v1290 = vunpack.c.h.b16 %v218
        %v1291 = vunpack.c.l.b16 %v219
        %v1292 = vunpack.c.h.b16 %v219
        %v1293 = vunpack.c.l.b16 %v220
        %v1294 = vunpack.c.h.b16 %v220
        %v1295 = vunpack.c.l.b16 %v221
        %v1296 = vunpack.c.h.b16 %v221
        %v1297 = vunpack.c.l.b16 %v222
        %v1298 = vunpack.c.h.b16 %v222
        %v1299 = vunpack.c.l.b16 %v223
        %v1300 = vunpack.c.h.b16 %v223
        %v1301 = vunpack.c.l.b16 %v224
        %v1302 = vunpack.c.h.b16 %v224
        %v1303 = vunpack.c.l.b16 %v225
        %v1304 = vunpack.c.h.b16 %v225
        %v1305 = vunpack.c.l.b16 %v226
        %v1306 = vunpack.c.h.b16 %v226
        %v1307 = vunpack.c.l.b16 %v227
        %v1308 = vunpack.c.h.b16 %v227
        %v1309 = vunpack.c.l.b16 %v228
        %v1310 = vunpack.c.h.b16 %v228
        %v1311 = vunpack.c.l.b16 %v229
        %v1312 = vunpack.c.h.b16 %v229
        %v1313 = vunpack.c.l.b16 %v230
        %v1314 = vunpack.c.h.b16 %v230
        %v1315 = vunpack.c.l.b16 %v231
        %v1316 = vunpack.c.h.b16 %v231
        %v1317 = vunpack.c.l.b16 %v232
        %v1318 = vunpack.c.h.b16 %v232
        %v1319 = vunpack.c.l.b16 %v233
        %v1320 = vunpack.c.h.b16 %v233
        %v1321 = vunpack.c.l.b16 %v234
        %v1322 = vunpack.c.h.b16 %v234
        %v1323 = vunpack.c.l.b16 %v235
        %v1324 = vunpack.c.h.b16 %v235
        %v1325 = vunpack.c.l.b16 %v236
        %v1326 = vunpack.c.h.b16 %v236
        %v1327 = vunpack.c.l.b16 %v237
        %v1328 = vunpack.c.h.b16 %v237
        %v1329 = vunpack.c.l.b16 %v238
        %v1330 = vunpack.c.h.b16 %v238
        %v1331 = vunpack.c.l.b16 %v239
        %v1332 = vunpack.c.h.b16 %v239
        %v1333 = vunpack.c.l.b16 %v240
        %v1334 = vunpack.c.h.b16 %v240
        %v1335 = vunpack.c.l.b16 %v241
        %v1336 = vunpack.c.h.b16 %v241
        %v1337 = vunpack.c.l.b16 %v242
        %v1338 = vunpack.c.h.b16 %v242
        %v1339 = vunpack.c.l.b16 %v243
        %v1340 = vunpack.c.h.b16 %v243
        %v1341 = vunpack.c.l.b16 %v244
        %v1342 = vunpack.c.h.b16 %v244
        %v1343 = vunpack.c.l.b16 %v245
        %v1344 = vunpack.c.h.b16 %v245
        %v1345 = vunpack.c.l.b16 %v246
        %v1346 = vunpack.c.h.b16 %v246
        %v1347 = vunpack.c.l.b16 %v247
        %v1348 = vunpack.c.h.b16 %v247
        %v1349 = vunpack.c.l.b16 %v248
        %v1350 = vunpack.c.h.b16 %v248
        %v1351 = vunpack.c.l.b16 %v249
        %v1352 = vunpack.c.h.b16 %v249
        %v1353 = vunpack.c.l.b16 %v250
        %v1354 = vunpack.c.h.b16 %v250
        %v1355 = vunpack.c.l.b16 %v251
        %v1356 = vunpack.c.h.b16 %v251
        %v1357 = vunpack.c.l.b16 %v252
        %v1358 = vunpack.c.h.b16 %v252
        %v1359 = vunpack.c.l.b16 %v253
        %v1360 = vunpack.c.h.b16 %v253
        %v1361 = vunpack.c.l.b16 %v254
        %v1362 = vunpack.c.h.b16 %v254
        %v1363 = vunpack.c.l.b16 %v255
        %v1364 = vunpack.c.h.b16 %v255
        %v1365 = vunpack.c.l.b16 %v256
        %v1366 = vunpack.c.h.b16 %v256
        %v1367 = vunpack.c.l.b16 %v257
        %v1368 = vunpack.c.h.b16 %v257
        %v1369 = vunpack.c.l.b16 %v258
        %v1370 = vunpack.c.h.b16 %v258
        %v1371 = vunpack.c.l.b16 %v259
        %v1372 = vunpack.c.h.b16 %v259
        %v1373 = vunpack.c.l.b16 %v260
        %v1374 = vunpack.c.h.b16 %v260
        %v1375 = vunpack.c.l.b16 %v261
        %v1376 = vunpack.c.h.b16 %v261
        %v1377 = vunpack.c.l.b16 %v262
        %v1378 = vunpack.c.h.b16 %v262
        %v1379 = vunpack.c.l.b16 %v263
        %v1380 = vunpack.c.h.b16 %v263
        %v1381 = vunpack.c.l.b16 %v264
        %v1382 = vunpack.c.h.b16 %v264
        %v1383 = vunpack.c.l.b16 %v265
        %v1384 = vunpack.c.h.b16 %v265
        %v1385 = vunpack.c.l.b16 %v266
        %v1386 = vunpack.c.h.b16 %v266
        %v1387 = vunpack.c.l.b16 %v267
        %v1388 = vunpack.c.h.b16 %v267
        %v1389 = vunpack.c.l.b16 %v268
        %v1390 = vunpack.c.h.b16 %v268
        %v1391 = vunpack.c.l.b16 %v269
        %v1392 = vunpack.c.h.b16 %v269
        %v1393 = vunpack.c.l.b16 %v270
        %v1394 = vunpack.c.h.b16 %v270
        %v1395 = vunpack.c.l.b16 %v271
        %v1396 = vunpack.c.h.b16 %v271
        %v1397 = vunpack.c.l.b16 %v272
        %v1398 = vunpack.c.h.b16 %v272
        %v1399 = vunpack.c.l.b16 %v273
        %v1400 = vunpack.c.h.b16 %v273
        %v1401 = vunpack.c.l.b16 %v274
        %v1402 = vunpack.c.h.b16 %v274
        %v1403 = vunpack.c.l.b16 %v275
        %v1404 = vunpack.c.h.b16 %v275
        %v1405 = vunpack.c.l.b16 %v276
        %v1406 = vunpack.c.h.b16 %v276
        %v1407 = vunpack.c.l.b16 %v277
        %v1408 = vunpack.c.h.b16 %v277
        %v1409 = vunpack.c.l.b16 %v278
        %v1410 = vunpack.c.h.b16 %v278
        %v1411 = vunpack.c.l.b16 %v279
        %v1412 = vunpack.c.h.b16 %v279
        %v1413 = vunpack.c.l.b16 %v280
        %v1414 = vunpack.c.h.b16 %v280
        %v1415 = vunpack.c.l.b16 %v281
        %v1416 = vunpack.c.h.b16 %v281
        %v1417 = vunpack.c.l.b16 %v282
        %v1418 = vunpack.c.h.b16 %v282
        %v1419 = vunpack.c.l.b16 %v283
        %v1420 = vunpack.c.h.b16 %v283
        %v1421 = vunpack.c.l.b16 %v284
        %v1422 = vunpack.c.h.b16 %v284
        %v1423 = vunpack.c.l.b16 %v285
        %v1424 = vunpack.c.h.b16 %v285
        %v1425 = vunpack.c.l.b16 %v286
        %v1426 = vunpack.c.h.b16 %v286
        %v1427 = vunpack.c.l.b16 %v287
        %v1428 = vunpack.c.h.b16 %v287
        %v1429 = vunpack.c.l.b16 %v288
        %v1430 = vunpack.c.h.b16 %v288
        %v1431 = vunpack.c.l.b16 %v289
        %v1432 = vunpack.c.h.b16 %v289
        %v1433 = vunpack.c.l.b16 %v290
        %v1434 = vunpack.c.h.b16 %v290
        %v1435 = vunpack.c.l.b16 %v291
        %v1436 = vunpack.c.h.b16 %v291
        %v1437 = vunpack.c.l.b16 %v292
        %v1438 = vunpack.c.h.b16 %v292
        %v1439 = vunpack.c.l.b16 %v293
        %v1440 = vunpack.c.h.b16 %v293
        %v1441 = vunpack.c.l.b16 %v294
        %v1442 = vunpack.c.h.b16 %v294
        %v1443 = vunpack.c.l.b16 %v295
        %v1444 = vunpack.c.h.b16 %v295
        %v1445 = vunpack.c.l.b16 %v296
        %v1446 = vunpack.c.h.b16 %v296
        %v1447 = vunpack.c.l.b16 %v297
        %v1448 = vunpack.c.h.b16 %v297
        %v1449 = vunpack.c.l.b16 %v298
        %v1450 = vunpack.c.h.b16 %v298
        %v1451 = vunpack.c.l.b16 %v299
        %v1452 = vunpack.c.h.b16 %v299
        %v1453 = vunpack.c.l.b16 %v300
        %v1454 = vunpack.c.h.b16 %v300
        %v1455 = vunpack.c.l.b16 %v301
        %v1456 = vunpack.c.h.b16 %v301
        %v1457 = vunpack.c.l.b16 %v302
        %v1458 = vunpack.c.h.b16 %v302
        %v1459 = vunpack.c.l.b16 %v303
        %v1460 = vunpack.c.h.b16 %v303
        %v1461 = vunpack.c.l.b16 %v304
        %v1462 = vunpack.c.h.b16 %v304
        %v1463 = vunpack.c.l.b16 %v305
        %v1464 = vunpack.c.h.b16 %v305
        %v1465 = vunpack.c.l.b16 %v306
        %v1466 = vunpack.c.h.b16 %v306
        %v1467 = vunpack.c.l.b16 %v307
        %v1468 = vunpack.c.h.b16 %v307
        %v1469 = vunpack.c.l.b16 %v308
        %v1470 = vunpack.c.h.b16 %v308
        %v1471 = vunpack.c.l.b16 %v309
        %v1472 = vunpack.c.h.b16 %v309
        %v1473 = vunpack.c.l.b16 %v310
        %v1474 = vunpack.c.h.b16 %v310
        %v1475 = vunpack.c.l.b16 %v311
        %v1476 = vunpack.c.h.b16 %v311
        %v1477 = vunpack.c.l.b16 %v312
        %v1478 = vunpack.c.h.b16 %v312
        %v1479 = vunpack.c.l.b16 %v313
        %v1480 = vunpack.c.h.b16 %v313
        %v1481 = vunpack.c.l.b16 %v314
        %v1482 = vunpack.c.h.b16 %v314
        %v1483 = vunpack.c.l.b16 %v315
        %v1484 = vunpack.c.h.b16 %v315
        %v1485 = vunpack.c.l.b16 %v316
        %v1486 = vunpack.c.h.b16 %v316
        %v1487 = vunpack.c.l.b16 %v317
        %v1488 = vunpack.c.h.b16 %v317
        %v1489 = vunpack.c.l.b16 %v318
        %v1490 = vunpack.c.h.b16 %v318
        %v1491 = vunpack.c.l.b16 %v319
        %v1492 = vunpack.c.h.b16 %v319
        %v1493 = vunpack.c.l.b16 %v320
        %v1494 = vunpack.c.h.b16 %v320
        %v1495 = vunpack.c.l.b16 %v321
        %v1496 = vunpack.c.h.b16 %v321
        %v1497 = vunpack.c.l.b16 %v322
        %v1498 = vunpack.c.h.b16 %v322
        %v1499 = vunpack.c.l.b16 %v323
        %v1500 = vunpack.c.h.b16 %v323
        %v1501 = vunpack.c.l.b16 %v324
        %v1502 = vunpack.c.h.b16 %v324
        %v1503 = vunpack.c.l.b16 %v325
        %v1504 = vunpack.c.h.b16 %v325
        %v1505 = vunpack.c.l.b16 %v326
        %v1506 = vunpack.c.h.b16 %v326
        %v1507 = vunpack.c.l.b16 %v327
        %v1508 = vunpack.c.h.b16 %v327
        %v1509 = vunpack.c.l.b16 %v328
        %v1510 = vunpack.c.h.b16 %v328
        %v1511 = vunpack.c.l.b16 %v329
        %v1512 = vunpack.c.h.b16 %v329
        %v1513 = vunpack.c.l.b16 %v330
        %v1514 = vunpack.c.h.b16 %v330
        %v1515 = vunpack.c.l.b16 %v331
        %v1516 = vunpack.c.h.b16 %v331
        %v1517 = vunpack.c.l.b16 %v332
        %v1518 = vunpack.c.h.b16 %v332
        %v1519 = vunpack.c.l.b16 %v333
        %v1520 = vunpack.c.h.b16 %v333
        %v1521 = vunpack.c.l.b16 %v334
        %v1522 = vunpack.c.h.b16 %v334
        %v1523 = vunpack.c.l.b16 %v335
        %v1524 = vunpack.c.h.b16 %v335
        %v1525 = vunpack.c.l.b16 %v336
        %v1526 = vunpack.c.h.b16 %v336
        %v1527 = vunpack.c.l.b16 %v337
        %v1528 = vunpack.c.h.b16 %v337
        %v1529 = vunpack.c.l.b16 %v338
        %v1530 = vunpack.c.h.b16 %v338
        %v1531 = vunpack.c.l.b16 %v339
        %v1532 = vunpack.c.h.b16 %v339
        %v1533 = vunpack.c.l.b16 %v340
        %v1534 = vunpack.c.h.b16 %v340
        %v1535 = vunpack.c.l.b16 %v341
        %v1536 = vunpack.c.h.b16 %v341
        %v1537 = vunpack.c.l.b16 %v342
        %v1538 = vunpack.c.h.b16 %v342
        %v1539 = vunpack.c.l.b16 %v343
        %v1540 = vunpack.c.h.b16 %v343
        %v1541 = vunpack.c.l.b16 %v344
        %v1542 = vunpack.c.h.b16 %v344
        %v1543 = vunpack.c.l.b16 %v345
        %v1544 = vunpack.c.h.b16 %v345
        %v1545 = vunpack.c.l.b16 %v346
        %v1546 = vunpack.c.h.b16 %v346
        %v1547 = vunpack.c.l.b16 %v347
        %v1548 = vunpack.c.h.b16 %v347
        %v1549 = vunpack.c.l.b16 %v348
        %v1550 = vunpack.c.h.b16 %v348
        %v1551 = vunpack.c.l.b16 %v349
        %v1552 = vunpack.c.h.b16 %v349
        %v1553 = vunpack.c.l.b16 %v350
        %v1554 = vunpack.c.h.b16 %v350
        %v1555 = vunpack.c.l.b16 %v351
        %v1556 = vunpack.c.h.b16 %v351
        %v1557 = vunpack.c.l.b16 %v352
        %v1558 = vunpack.c.h.b16 %v352
        %v1559 = vunpack.c.l.b16 %v353
        %v1560 = vunpack.c.h.b16 %v353
        %v1561 = vunpack.c.l.b16 %v354
        %v1562 = vunpack.c.h.b16 %v354
        %v1563 = vunpack.c.l.b16 %v355
        %v1564 = vunpack.c.h.b16 %v355
        %v1565 = vunpack.c.l.b16 %v356
        %v1566 = vunpack.c.h.b16 %v356
        %v1567 = vunpack.c.l.b16 %v357
        %v1568 = vunpack.c.h.b16 %v357
        %v1569 = vunpack.c.l.b16 %v358
        %v1570 = vunpack.c.h.b16 %v358
        %v1571 = vunpack.c.l.b16 %v359
        %v1572 = vunpack.c.h.b16 %v359
        %v1573 = vunpack.c.l.b16 %v360
        %v1574 = vunpack.c.h.b16 %v360
        %v1575 = vunpack.c.l.b16 %v361
        %v1576 = vunpack.c.h.b16 %v361
        %v1577 = vunpack.c.l.b16 %v362
        %v1578 = vunpack.c.h.b16 %v362
        %v1579 = vunpack.c.l.b16 %v363
        %v1580 = vunpack.c.h.b16 %v363
        %v1581 = vunpack.c.l.b16 %v364
        %v1582 = vunpack.c.h.b16 %v364
        %v1583 = vunpack.c.l.b16 %v365
        %v1584 = vunpack.c.h.b16 %v365
        %v1585 = vunpack.c.l.b16 %v366
        %v1586 = vunpack.c.h.b16 %v366
        %v1587 = vunpack.c.l.b16 %v367
        %v1588 = vunpack.c.h.b16 %v367
        %v1589 = vunpack.c.l.b16 %v368
        %v1590 = vunpack.c.h.b16 %v368
        %v1591 = vunpack.c.l.b16 %v369
        %v1592 = vunpack.c.h.b16 %v369
        %v1593 = vunpack.c.l.b16 %v370
        %v1594 = vunpack.c.h.b16 %v370
        %v1595 = vunpack.c.l.b16 %v371
        %v1596 = vunpack.c.h.b16 %v371
        %v1597 = vunpack.c.l.b16 %v372
        %v1598 = vunpack.c.h.b16 %v372
        %v1599 = vunpack.c.l.b16 %v373
        %v1600 = vunpack.c.h.b16 %v373
        %v1601 = vunpack.c.l.b16 %v374
        %v1602 = vunpack.c.h.b16 %v374
        %v1603 = vunpack.c.l.b16 %v375
        %v1604 = vunpack.c.h.b16 %v375
        %v1605 = vunpack.c.l.b16 %v376
        %v1606 = vunpack.c.h.b16 %v376
        %v1607 = vunpack.c.l.b16 %v377
        %v1608 = vunpack.c.h.b16 %v377
        %v1609 = vunpack.c.l.b16 %v378
        %v1610 = vunpack.c.h.b16 %v378
        %v1611 = vunpack.c.l.b16 %v379
        %v1612 = vunpack.c.h.b16 %v379
        %v1613 = vunpack.c.l.b16 %v380
        %v1614 = vunpack.c.h.b16 %v380
        %v1615 = vunpack.c.l.b16 %v381
        %v1616 = vunpack.c.h.b16 %v381
        %v1617 = vunpack.c.l.b16 %v382
        %v1618 = vunpack.c.h.b16 %v382
        %v1619 = vunpack.c.l.b16 %v383
        %v1620 = vunpack.c.h.b16 %v383
        %v1621 = vunpack.c.l.b16 %v384
        %v1622 = vunpack.c.h.b16 %v384
        %v1623 = vunpack.c.l.b16 %v385
        %v1624 = vunpack.c.h.b16 %v385
        %v1625 = vunpack.c.l.b16 %v386
        %v1626 = vunpack.c.h.b16 %v386
        %v1627 = vunpack.c.l.b16 %v387
        %v1628 = vunpack.c.h.b16 %v387
        %v1629 = vunpack.c.l.b16 %v388
        %v1630 = vunpack.c.h.b16 %v388
        %v1631 = vunpack.c.l.b16 %v389
        %v1632 = vunpack.c.h.b16 %v389
        %v1633 = vunpack.c.l.b16 %v390
        %v1634 = vunpack.c.h.b16 %v390
        %v1635 = vunpack.c.l.b16 %v391
        %v1636 = vunpack.c.h.b16 %v391
        %v1637 = vunpack.c.l.b16 %v392
        %v1638 = vunpack.c.h.b16 %v392
        %v1639 = vunpack.c.l.b16 %v393
        %v1640 = vunpack.c.h.b16 %v393
        %v1641 = vunpack.c.l.b16 %v394
        %v1642 = vunpack.c.h.b16 %v394
        %v1643 = vunpack.c.l.b16 %v395
        %v1644 = vunpack.c.h.b16 %v395
        %v1645 = vunpack.c.l.b16 %v396
        %v1646 = vunpack.c.h.b16 %v396
        %v1647 = vunpack.c.l.b16 %v397
        %v1648 = vunpack.c.h.b16 %v397
        %v1649 = vunpack.c.l.b16 %v398
        %v1650 = vunpack.c.h.b16 %v398
        %v1651 = vunpack.c.l.b16 %v399
        %v1652 = vunpack.c.h.b16 %v399
        %v1653 = vunpack.c.l.b16 %v400
        %v1654 = vunpack.c.h.b16 %v400
        %v1655 = vunpack.c.l.b16 %v401
        %v1656 = vunpack.c.h.b16 %v401
        %v1657 = vunpack.c.l.b16 %v402
        %v1658 = vunpack.c.h.b16 %v402
        %v1659 = vunpack.c.l.b16 %v403
        %v1660 = vunpack.c.h.b16 %v403
        %v1661 = vunpack.c.l.b16 %v404
        %v1662 = vunpack.c.h.b16 %v404
        %v1663 = vunpack.c.l.b16 %v405
        %v1664 = vunpack.c.h.b16 %v405
        %v1665 = vunpack.c.l.b16 %v406
        %v1666 = vunpack.c.h.b16 %v406
        %v1667 = vunpack.c.l.b16 %v407
        %v1668 = vunpack.c.h.b16 %v407
        %v1669 = vunpack.c.l.b16 %v408
        %v1670 = vunpack.c.h.b16 %v408
        %v1671 = vunpack.c.l.b16 %v409
        %v1672 = vunpack.c.h.b16 %v409
        %v1673 = vunpack.c.l.b16 %v410
        %v1674 = vunpack.c.h.b16 %v410
        %v1675 = vunpack.c.l.b16 %v411
        %v1676 = vunpack.c.h.b16 %v411
        %v1677 = vunpack.c.l.b16 %v412
        %v1678 = vunpack.c.h.b16 %v412
        %v1679 = vunpack.c.l.b16 %v413
        %v1680 = vunpack.c.h.b16 %v413
        %v1681 = vunpack.c.l.b16 %v414
        %v1682 = vunpack.c.h.b16 %v414
        %v1683 = vunpack.c.l.b16 %v415
        %v1684 = vunpack.c.h.b16 %v415
        %v1685 = vunpack.c.l.b16 %v416
        %v1686 = vunpack.c.h.b16 %v416
        %v1687 = vunpack.c.l.b16 %v417
        %v1688 = vunpack.c.h.b16 %v417
        %v1689 = vunpack.c.l.b16 %v418
        %v1690 = vunpack.c.h.b16 %v418
        %v1691 = vunpack.c.l.b16 %v419
        %v1692 = vunpack.c.h.b16 %v419
        %v1693 = vunpack.c.l.b16 %v420
        %v1694 = vunpack.c.h.b16 %v420
        %v1695 = vunpack.c.l.b16 %v421
        %v1696 = vunpack.c.h.b16 %v421
        %v1697 = vunpack.c.l.b16 %v422
        %v1698 = vunpack.c.h.b16 %v422
        %v1699 = vunpack.c.l.b16 %v423
        %v1700 = vunpack.c.h.b16 %v423
        %v1701 = vunpack.c.l.b16 %v424
        %v1702 = vunpack.c.h.b16 %v424
        %v1703 = vunpack.c.l.b16 %v425
        %v1704 = vunpack.c.h.b16 %v425
        %v1705 = vunpack.c.l.b16 %v426
        %v1706 = vunpack.c.h.b16 %v426
        %v1707 = vunpack.c.l.b16 %v427
        %v1708 = vunpack.c.h.b16 %v427
        %v1709 = vunpack.c.l.b16 %v428
        %v1710 = vunpack.c.h.b16 %v428
        %v1711 = vunpack.c.l.b16 %v429
        %v1712 = vunpack.c.h.b16 %v429
        %v1713 = vunpack.c.l.b16 %v430
        %v1714 = vunpack.c.h.b16 %v430
        %v1715 = vunpack.c.l.b16 %v431
        %v1716 = vunpack.c.h.b16 %v431
        %v1717 = vunpack.c.l.b16 %v432
        %v1718 = vunpack.c.h.b16 %v432
        %v1719 = vunpack.c.l.b16 %v433
        %v1720 = vunpack.c.h.b16 %v433
        %v1721 = vunpack.c.l.b16 %v434
        %v1722 = vunpack.c.h.b16 %v434
        %v1723 = vunpack.c.l.b16 %v435
        %v1724 = vunpack.c.h.b16 %v435
        %v1725 = vunpack.c.l.b16 %v436
        %v1726 = vunpack.c.h.b16 %v436
        %v1727 = vunpack.c.l.b16 %v437
        %v1728 = vunpack.c.h.b16 %v437
        %v1729 = vunpack.c.l.b16 %v438
        %v1730 = vunpack.c.h.b16 %v438
        %v1731 = vunpack.c.l.b16 %v439
        %v1732 = vunpack.c.h.b16 %v439
        %v1733 = vunpack.c.l.b16 %v440
        %v1734 = vunpack.c.h.b16 %v440
        %v1735 = vunpack.c.l.b16 %v441
        %v1736 = vunpack.c.h.b16 %v441
        %v1737 = vunpack.c.l.b16 %v442
        %v1738 = vunpack.c.h.b16 %v442
        %v1739 = vunpack.c.l.b16 %v443
        %v1740 = vunpack.c.h.b16 %v443
        %v1741 = vunpack.c.l.b16 %v444
        %v1742 = vunpack.c.h.b16 %v444
        %v1743 = vunpack.c.l.b16 %v445
        %v1744 = vunpack.c.h.b16 %v445
        %v1745 = vunpack.c.l.b16 %v446
        %v1746 = vunpack.c.h.b16 %v446
        %v1747 = vunpack.c.l.b16 %v447
        %v1748 = vunpack.c.h.b16 %v447
        %v1749 = vunpack.c.l.b16 %v448
        %v1750 = vunpack.c.h.b16 %v448
        %v1751 = vunpack.c.l.b16 %v449
        %v1752 = vunpack.c.h.b16 %v449
        %v1753 = vunpack.c.l.b16 %v450
        %v1754 = vunpack.c.h.b16 %v450
        %v1755 = vunpack.c.l.b16 %v451
        %v1756 = vunpack.c.h.b16 %v451
        %v1757 = vunpack.c.l.b16 %v452
        %v1758 = vunpack.c.h.b16 %v452
        %v1759 = vunpack.c.l.b16 %v453
        %v1760 = vunpack.c.h.b16 %v453
        %v1761 = vunpack.c.l.b16 %v454
        %v1762 = vunpack.c.h.b16 %v454
        %v1763 = vunpack.c.l.b16 %v455
        %v1764 = vunpack.c.h.b16 %v455
        %v1765 = vunpack.c.l.b16 %v456
        %v1766 = vunpack.c.h.b16 %v456
        %v1767 = vunpack.c.l.b16 %v457
        %v1768 = vunpack.c.h.b16 %v457
        %v1769 = vunpack.c.l.b16 %v458
        %v1770 = vunpack.c.h.b16 %v458
        %v1771 = vunpack.c.l.b16 %v459
        %v1772 = vunpack.c.h.b16 %v459
        %v1773 = vunpack.c.l.b16 %v460
        %v1774 = vunpack.c.h.b16 %v460
        %v1775 = vunpack.c.l.b16 %v461
        %v1776 = vunpack.c.h.b16 %v461
        %v1777 = vunpack.c.l.b16 %v462
        %v1778 = vunpack.c.h.b16 %v462
        %v1779 = vunpack.c.l.b16 %v463
        %v1780 = vunpack.c.h.b16 %v463
        %v1781 = vunpack.c.l.b16 %v464
        %v1782 = vunpack.c.h.b16 %v464
        %v1783 = vunpack.c.l.b16 %v465
        %v1784 = vunpack.c.h.b16 %v465
        %v1785 = vunpack.c.l.b16 %v466
        %v1786 = vunpack.c.h.b16 %v466
        %v1787 = vunpack.c.l.b16 %v467
        %v1788 = vunpack.c.h.b16 %v467
        %v1789 = vunpack.c.l.b16 %v468
        %v1790 = vunpack.c.h.b16 %v468
        %v1791 = vunpack.c.l.b16 %v469
        %v1792 = vunpack.c.h.b16 %v469
        %v1793 = vunpack.c.l.b16 %v470
        %v1794 = vunpack.c.h.b16 %v470
        %v1795 = vunpack.c.l.b16 %v471
        %v1796 = vunpack.c.h.b16 %v471
        %v1797 = vunpack.c.l.b16 %v472
        %v1798 = vunpack.c.h.b16 %v472
        %v1799 = vunpack.c.l.b16 %v473
        %v1800 = vunpack.c.h.b16 %v473
        %v1801 = vunpack.c.l.b16 %v474
        %v1802 = vunpack.c.h.b16 %v474
        %v1803 = vunpack.c.l.b16 %v475
        %v1804 = vunpack.c.h.b16 %v475
        %v1805 = vunpack.c.l.b16 %v476
        %v1806 = vunpack.c.h.b16 %v476
        %v1807 = vunpack.c.l.b16 %v477
        %v1808 = vunpack.c.h.b16 %v477
        %v1809 = vunpack.c.l.b16 %v478
        %v1810 = vunpack.c.h.b16 %v478
        %v1811 = vunpack.c.l.b16 %v479
        %v1812 = vunpack.c.h.b16 %v479
        %v1813 = vunpack.c.l.b16 %v480
        %v1814 = vunpack.c.h.b16 %v480
        %v1815 = vunpack.c.l.b16 %v481
        %v1816 = vunpack.c.h.b16 %v481
        %v1817 = vunpack.c.l.b16 %v482
        %v1818 = vunpack.c.h.b16 %v482
        %v1819 = vunpack.c.l.b16 %v483
        %v1820 = vunpack.c.h.b16 %v483
        %v1821 = vunpack.c.l.b16 %v484
        %v1822 = vunpack.c.h.b16 %v484
        %v1823 = vunpack.c.l.b16 %v485
        %v1824 = vunpack.c.h.b16 %v485
        %v1825 = vunpack.c.l.b16 %v486
        %v1826 = vunpack.c.h.b16 %v486
        %v1827 = vunpack.c.l.b16 %v487
        %v1828 = vunpack.c.h.b16 %v487
        %v1829 = vunpack.c.l.b16 %v488
        %v1830 = vunpack.c.h.b16 %v488
        %v1831 = vunpack.c.l.b16 %v489
        %v1832 = vunpack.c.h.b16 %v489
        %v1833 = vunpack.c.l.b16 %v490
        %v1834 = vunpack.c.h.b16 %v490
        %v1835 = vunpack.c.l.b16 %v491
        %v1836 = vunpack.c.h.b16 %v491
        %v1837 = vunpack.c.l.b16 %v492
        %v1838 = vunpack.c.h.b16 %v492
        %v1839 = vunpack.c.l.b16 %v493
        %v1840 = vunpack.c.h.b16 %v493
        %v1841 = vunpack.c.l.b16 %v494
        %v1842 = vunpack.c.h.b16 %v494
        %v1843 = vunpack.c.l.b16 %v495
        %v1844 = vunpack.c.h.b16 %v495
        %v1845 = vunpack.c.l.b16 %v496
        %v1846 = vunpack.c.h.b16 %v496
        %v1847 = vunpack.c.l.b16 %v497
        %v1848 = vunpack.c.h.b16 %v497
        %v1849 = vunpack.c.l.b16 %v498
        %v1850 = vunpack.c.h.b16 %v498
        %v1851 = vunpack.c.l.b16 %v499
        %v1852 = vunpack.c.h.b16 %v499
        %v1853 = vunpack.c.l.b16 %v500
        %v1854 = vunpack.c.h.b16 %v500
        %v1855 = vunpack.c.l.b16 %v501
        %v1856 = vunpack.c.h.b16 %v501
        %v1857 = vunpack.c.l.b16 %v502
        %v1858 = vunpack.c.h.b16 %v502
        %v1859 = vunpack.c.l.b16 %v503
        %v1860 = vunpack.c.h.b16 %v503
        %v1861 = vunpack.c.l.b16 %v504
        %v1862 = vunpack.c.h.b16 %v504
        %v1863 = vunpack.c.l.b16 %v505
        %v1864 = vunpack.c.h.b16 %v505
        %v1865 = vunpack.c.l.b16 %v506
        %v1866 = vunpack.c.h.b16 %v506
        %v1867 = vunpack.c.l.b16 %v507
        %v1868 = vunpack.c.h.b16 %v507
        %v1869 = vunpack.c.l.b16 %v508
        %v1870 = vunpack.c.h.b16 %v508
        %v1871 = vunpack.c.l.b16 %v509
        %v1872 = vunpack.c.h.b16 %v509
        %v1873 = vunpack.c.l.b16 %v510
        %v1874 = vunpack.c.h.b16 %v510
        %v1875 = vunpack.c.l.b16 %v511
        %v1876 = vunpack.c.h.b16 %v511
        %v1877 = vunpack.c.l.b16 %v512
        %v1878 = vunpack.c.h.b16 %v512
        %v1879 = vunpack.c.l.b16 %v513
        %v1880 = vunpack.c.h.b16 %v513
        %v1881 = vunpack.c.l.b16 %v514
        %v1882 = vunpack.c.h.b16 %v514
        %v1883 = vunpack.c.l.b16 %v515
        %v1884 = vunpack.c.h.b16 %v515
        %v1885 = vunpack.c.l.b16 %v516
        %v1886 = vunpack.c.h.b16 %v516
        %v1887 = vunpack.c.l.b16 %v517
        %v1888 = vunpack.c.h.b16 %v517
        %v1889 = vunpack.c.l.b16 %v518
        %v1890 = vunpack.c.h.b16 %v518
        %v1891 = vunpack.c.l.b16 %v519
        %v1892 = vunpack.c.h.b16 %v519
        %v1893 = vunpack.c.l.b16 %v520
        %v1894 = vunpack.c.h.b16 %v520
        %v1895 = vunpack.c.l.b16 %v521
        %v1896 = vunpack.c.h.b16 %v521
        %v1897 = vunpack.c.l.b16 %v522
        %v1898 = vunpack.c.h.b16 %v522
        %v1899 = vunpack.c.l.b16 %v523
        %v1900 = vunpack.c.h.b16 %v523
        %v1901 = vunpack.c.l.b16 %v524
        %v1902 = vunpack.c.h.b16 %v524
        %v1903 = vunpack.c.l.b16 %v525
        %v1904 = vunpack.c.h.b16 %v525
        %v1905 = vunpack.c.l.b16 %v526
        %v1906 = vunpack.c.h.b16 %v526
        %v1907 = vunpack.c.l.b16 %v527
        %v1908 = vunpack.c.h.b16 %v527
        %v1909 = vunpack.c.l.b16 %v528
        %v1910 = vunpack.c.h.b16 %v528
        %v1911 = vunpack.c.l.b16 %v529
        %v1912 = vunpack.c.h.b16 %v529
        %v1913 = vunpack.c.l.b16 %v530
        %v1914 = vunpack.c.h.b16 %v530
        %v1915 = vunpack.c.l.b16 %v531
        %v1916 = vunpack.c.h.b16 %v531
        %v1917 = vunpack.c.l.b16 %v532
        %v1918 = vunpack.c.h.b16 %v532
        %v1919 = vunpack.c.l.b16 %v533
        %v1920 = vunpack.c.h.b16 %v533
        %v1921 = vunpack.c.l.b16 %v534
        %v1922 = vunpack.c.h.b16 %v534
        %v1923 = vunpack.c.l.b16 %v535
        %v1924 = vunpack.c.h.b16 %v535
        %v1925 = vunpack.c.l.b16 %v536
        %v1926 = vunpack.c.h.b16 %v536
        %v1927 = vunpack.c.l.b16 %v537
        %v1928 = vunpack.c.h.b16 %v537
        %v1929 = vunpack.c.l.b16 %v538
        %v1930 = vunpack.c.h.b16 %v538
        %v1931 = vunpack.c.l.b16 %v539
        %v1932 = vunpack.c.h.b16 %v539
        %v1933 = vunpack.c.l.b16 %v540
        %v1934 = vunpack.c.h.b16 %v540
        %v1935 = vunpack.c.l.b16 %v541
        %v1936 = vunpack.c.h.b16 %v541
        %v1937 = vunpack.c.l.b16 %v542
        %v1938 = vunpack.c.h.b16 %v542
        %v1939 = vunpack.c.l.b16 %v543
        %v1940 = vunpack.c.h.b16 %v543
        %v1941 = vunpack.c.l.b16 %v544
        %v1942 = vunpack.c.h.b16 %v544
        %v1943 = vunpack.c.l.b16 %v545
        %v1944 = vunpack.c.h.b16 %v545
        %v1945 = vunpack.c.l.b16 %v546
        %v1946 = vunpack.c.h.b16 %v546
        %v1947 = vunpack.c.l.b16 %v547
        %v1948 = vunpack.c.h.b16 %v547
        %v1949 = vunpack.c.l.b16 %v548
        %v1950 = vunpack.c.h.b16 %v548
        %v1951 = vunpack.c.l.b16 %v549
        %v1952 = vunpack.c.h.b16 %v549
        %v1953 = vunpack.c.l.b16 %v550
        %v1954 = vunpack.c.h.b16 %v550
        %v1955 = vunpack.c.l.b16 %v551
        %v1956 = vunpack.c.h.b16 %v551
        %v1957 = vunpack.c.l.b16 %v552
        %v1958 = vunpack.c.h.b16 %v552
        %v1959 = vunpack.c.l.b16 %v553
        %v1960 = vunpack.c.h.b16 %v553
        %v1961 = vunpack.c.l.b16 %v554
        %v1962 = vunpack.c.h.b16 %v554
        %v1963 = vunpack.c.l.b16 %v555
        %v1964 = vunpack.c.h.b16 %v555
        %v1965 = vunpack.c.l.b16 %v556
        %v1966 = vunpack.c.h.b16 %v556
        %v1967 = vunpack.c.l.b16 %v557
        %v1968 = vunpack.c.h.b16 %v557
        %v1969 = vunpack.c.l.b16 %v558
        %v1970 = vunpack.c.h.b16 %v558
        %v1971 = vunpack.c.l.b16 %v559
        %v1972 = vunpack.c.h.b16 %v559
        %v1973 = vunpack.c.l.b16 %v560
        %v1974 = vunpack.c.h.b16 %v560
        %v1975 = vunpack.c.l.b16 %v561
        %v1976 = vunpack.c.h.b16 %v561
        %v1977 = vunpack.c.l.b16 %v562
        %v1978 = vunpack.c.h.b16 %v562
        %v1979 = vunpack.c.l.b16 %v563
        %v1980 = vunpack.c.h.b16 %v563
        %v1981 = vunpack.c.l.b16 %v564
        %v1982 = vunpack.c.h.b16 %v564
        %v1983 = vunpack.c.l.b16 %v565
        %v1984 = vunpack.c.h.b16 %v565
        %v1985 = vunpack.c.l.b16 %v566
        %v1986 = vunpack.c.h.b16 %v566
        %v1987 = vunpack.c.l.b16 %v567
        %v1988 = vunpack.c.h.b16 %v567
        %v1989 = vunpack.c.l.b16 %v568
        %v1990 = vunpack.c.h.b16 %v568
        %v1991 = vunpack.c.l.b16 %v569
        %v1992 = vunpack.c.h.b16 %v569
        %v1993 = vunpack.c.l.b16 %v570
        %v1994 = vunpack.c.h.b16 %v570
        %v1995 = vunpack.c.l.b16 %v571
        %v1996 = vunpack.c.h.b16 %v571
        %v1997 = vunpack.c.l.b16 %v572
        %v1998 = vunpack.c.h.b16 %v572
        %v1999 = vunpack.c.l.b16 %v573
        %v2000 = vunpack.c.h.b16 %v573
        %v2001 = vunpack.c.l.b16 %v574
        %v2002 = vunpack.c.h.b16 %v574
        %v2003 = vunpack.c.l.b16 %v575
        %v2004 = vunpack.c.h.b16 %v575
        %v2005 = vunpack.c.l.b16 %v576
        %v2006 = vunpack.c.h.b16 %v576
        %v2007 = vunpack.c.l.b16 %v577
        %v2008 = vunpack.c.h.b16 %v577
        %v2009 = vunpack.c.l.b16 %v578
        %v2010 = vunpack.c.h.b16 %v578
        %v2011 = vunpack.c.l.b16 %v579
        %v2012 = vunpack.c.h.b16 %v579
        %v2013 = vunpack.c.l.b16 %v580
        %v2014 = vunpack.c.h.b16 %v580
        %v2015 = vunpack.c.l.b16 %v581
        %v2016 = vunpack.c.h.b16 %v581
        %v2017 = vunpack.c.l.b16 %v582
        %v2018 = vunpack.c.h.b16 %v582
        %v2019 = vunpack.c.l.b16 %v583
        %v2020 = vunpack.c.h.b16 %v583
        %v2021 = vunpack.c.l.b16 %v584
        %v2022 = vunpack.c.h.b16 %v584
        %v2023 = vunpack.c.l.b16 %v585
        %v2024 = vunpack.c.h.b16 %v585
        %v2025 = vunpack.c.l.b16 %v586
        %v2026 = vunpack.c.h.b16 %v586
        %v2027 = vunpack.c.l.b16 %v587
        %v2028 = vunpack.c.h.b16 %v587
        %v2029 = vunpack.c.l.b16 %v588
        %v2030 = vunpack.c.h.b16 %v588
        %v2031 = vunpack.c.l.b16 %v589
        %v2032 = vunpack.c.h.b16 %v589
        %v2033 = vunpack.c.l.b16 %v590
        %v2034 = vunpack.c.h.b16 %v590
        %v2035 = vunpack.c.l.b16 %v591
        %v2036 = vunpack.c.h.b16 %v591
        %v2037 = vunpack.c.l.b16 %v592
        %v2038 = vunpack.c.h.b16 %v592
        %v2039 = vunpack.c.l.b16 %v593
        %v2040 = vunpack.c.h.b16 %v593
        %v2041 = vunpack.c.l.b16 %v594
        %v2042 = vunpack.c.h.b16 %v594
        %v2043 = vunpack.c.l.b16 %v595
        %v2044 = vunpack.c.h.b16 %v595
        %v2045 = vunpack.c.l.b16 %v596
        %v2046 = vunpack.c.h.b16 %v596
        %v2047 = vunpack.c.l.b16 %v597
        %v2048 = vunpack.c.h.b16 %v597
        %v2049 = vunpack.c.l.b16 %v598
        %v2050 = vunpack.c.h.b16 %v598
        %v2051 = vunpack.c.l.b16 %v599
        %v2052 = vunpack.c.h.b16 %v599
        %v2053 = vunpack.c.l.b16 %v600
        %v2054 = vunpack.c.h.b16 %v600
        %v2055 = vunpack.c.l.b16 %v601
        %v2056 = vunpack.c.h.b16 %v601
        %v2057 = vunpack.c.l.b16 %v602
        %v2058 = vunpack.c.h.b16 %v602
        %v2059 = vunpack.c.l.b16 %v603
        %v2060 = vunpack.c.h.b16 %v603
        %v2061 = vunpack.c.l.b16 %v604
        %v2062 = vunpack.c.h.b16 %v604
        %v2063 = vunpack.c.l.b16 %v605
        %v2064 = vunpack.c.h.b16 %v605
        %v2065 = vunpack.c.l.b16 %v606
        %v2066 = vunpack.c.h.b16 %v606
        %v2067 = vunpack.c.l.b16 %v607
        %v2068 = vunpack.c.h.b16 %v607
        %v2069 = vunpack.c.l.b16 %v608
        %v2070 = vunpack.c.h.b16 %v608
        %v2071 = vunpack.c.l.b16 %v609
        %v2072 = vunpack.c.h.b16 %v609
        %v2073 = vunpack.c.l.b16 %v610
        %v2074 = vunpack.c.h.b16 %v610
        %v2075 = vunpack.c.l.b16 %v611
        %v2076 = vunpack.c.h.b16 %v611
        %v2077 = vunpack.c.l.b16 %v612
        %v2078 = vunpack.c.h.b16 %v612
        %v2079 = vunpack.c.l.b16 %v613
        %v2080 = vunpack.c.h.b16 %v613
        %v2081 = vunpack.c.l.b16 %v614
        %v2082 = vunpack.c.h.b16 %v614
        %v2083 = vunpack.c.l.b16 %v615
        %v2084 = vunpack.c.h.b16 %v615
        %v2085 = vunpack.c.l.b16 %v616
        %v2086 = vunpack.c.h.b16 %v616
        %v2087 = vunpack.c.l.b16 %v617
        %v2088 = vunpack.c.h.b16 %v617
        %v2089 = vunpack.c.l.b16 %v618
        %v2090 = vunpack.c.h.b16 %v618
        %v2091 = vunpack.c.l.b16 %v619
        %v2092 = vunpack.c.h.b16 %v619
        %v2093 = vunpack.c.l.b16 %v620
        %v2094 = vunpack.c.h.b16 %v620
        %v2095 = vunpack.c.l.b16 %v621
        %v2096 = vunpack.c.h.b16 %v621
        %v2097 = vunpack.c.l.b16 %v622
        %v2098 = vunpack.c.h.b16 %v622
        %v2099 = vunpack.c.l.b16 %v623
        %v2100 = vunpack.c.h.b16 %v623
        %v2101 = vunpack.c.l.b16 %v624
        %v2102 = vunpack.c.h.b16 %v624
        %v2103 = vunpack.c.l.b16 %v625
        %v2104 = vunpack.c.h.b16 %v625
        %v2105 = vunpack.c.l.b16 %v626
        %v2106 = vunpack.c.h.b16 %v626
        %v2107 = vunpack.c.l.b16 %v627
        %v2108 = vunpack.c.h.b16 %v627
        %v2109 = vunpack.c.l.b16 %v628
        %v2110 = vunpack.c.h.b16 %v628
        %v2111 = vunpack.c.l.b16 %v629
        %v2112 = vunpack.c.h.b16 %v629
        %v2113 = vunpack.c.l.b16 %v630
        %v2114 = vunpack.c.h.b16 %v630
        %v2115 = vunpack.c.l.b16 %v631
        %v2116 = vunpack.c.h.b16 %v631
        %v2117 = vunpack.c.l.b16 %v632
        %v2118 = vunpack.c.h.b16 %v632
        %v2119 = vunpack.c.l.b16 %v633
        %v2120 = vunpack.c.h.b16 %v633
        %v2121 = vunpack.c.l.b16 %v634
        %v2122 = vunpack.c.h.b16 %v634
        %v2123 = vunpack.c.l.b16 %v635
        %v2124 = vunpack.c.h.b16 %v635
        %v2125 = vunpack.c.l.b16 %v636
        %v2126 = vunpack.c.h.b16 %v636
        %v2127 = vunpack.c.l.b16 %v637
        %v2128 = vunpack.c.h.b16 %v637
        %v2129 = vunpack.c.l.b16 %v638
        %v2130 = vunpack.c.h.b16 %v638
        %v2131 = vunpack.c.l.b16 %v639
        %v2132 = vunpack.c.h.b16 %v639
        %v2133 = vunpack.c.l.b16 %v640
        %v2134 = vunpack.c.h.b16 %v640
        %v2135 = vunpack.c.l.b16 %v641
        %v2136 = vunpack.c.h.b16 %v641
        %v2137 = vunpack.c.l.b16 %v642
        %v2138 = vunpack.c.h.b16 %v642
        %v2139 = vunpack.c.l.b16 %v643
        %v2140 = vunpack.c.h.b16 %v643
        %v2141 = vunpack.c.l.b16 %v644
        %v2142 = vunpack.c.h.b16 %v644
        %v2143 = vunpack.c.l.b16 %v645
        %v2144 = vunpack.c.h.b16 %v645
        %v2145 = vunpack.c.l.b16 %v646
        %v2146 = vunpack.c.h.b16 %v646
        %v2147 = vunpack.c.l.b16 %v647
        %v2148 = vunpack.c.h.b16 %v647
        %v2149 = vunpack.c.l.b16 %v648
        %v2150 = vunpack.c.h.b16 %v648
        %v2151 = vunpack.c.l.b16 %v649
        %v2152 = vunpack.c.h.b16 %v649
        %v2153 = vunpack.c.l.b16 %v650
        %v2154 = vunpack.c.h.b16 %v650
        %v2155 = vunpack.c.l.b16 %v651
        %v2156 = vunpack.c.h.b16 %v651
        %v2157 = vunpack.c.l.b16 %v652
        %v2158 = vunpack.c.h.b16 %v652
        %v2159 = vunpack.c.l.b16 %v653
        %v2160 = vunpack.c.h.b16 %v653
        %v2161 = vunpack.c.l.b16 %v654
        %v2162 = vunpack.c.h.b16 %v654
        %v2163 = vunpack.c.l.b16 %v655
        %v2164 = vunpack.c.h.b16 %v655
        %v2165 = vunpack.c.l.b16 %v656
        %v2166 = vunpack.c.h.b16 %v656
        %v2167 = vunpack.c.l.b16 %v657
        %v2168 = vunpack.c.h.b16 %v657
        %v2169 = vunpack.c.l.b16 %v658
        %v2170 = vunpack.c.h.b16 %v658
        %v2171 = vunpack.c.l.b16 %v659
        %v2172 = vunpack.c.h.b16 %v659
        %v2173 = vunpack.c.l.b16 %v660
        %v2174 = vunpack.c.h.b16 %v660
        %v2175 = vunpack.c.l.b16 %v661
        %v2176 = vunpack.c.h.b16 %v661
        %v2177 = vunpack.c.l.b16 %v662
        %v2178 = vunpack.c.h.b16 %v662
        %v2179 = vunpack.c.l.b16 %v663
        %v2180 = vunpack.c.h.b16 %v663
        %v2181 = vunpack.c.l.b16 %v664
        %v2182 = vunpack.c.h.b16 %v664
        %v2183 = vunpack.c.l.b16 %v665
        %v2184 = vunpack.c.h.b16 %v665
        %v2185 = vunpack.c.l.b16 %v666
        %v2186 = vunpack.c.h.b16 %v666
        %v2187 = vunpack.c.l.b16 %v667
        %v2188 = vunpack.c.h.b16 %v667
        %v2189 = vunpack.c.l.b16 %v668
        %v2190 = vunpack.c.h.b16 %v668
        %v2191 = vunpack.c.l.b16 %v669
        %v2192 = vunpack.c.h.b16 %v669
        %v2193 = vunpack.c.l.b16 %v670
        %v2194 = vunpack.c.h.b16 %v670
        %v2195 = vunpack.c.l.b16 %v671
        %v2196 = vunpack.c.h.b16 %v671
        %v2197 = vunpack.c.l.b16 %v672
        %v2198 = vunpack.c.h.b16 %v672
        %v2199 = vunpack.c.l.b16 %v673
        %v2200 = vunpack.c.h.b16 %v673
        %v2201 = vunpack.c.l.b16 %v674
        %v2202 = vunpack.c.h.b16 %v674
        %v2203 = vunpack.c.l.b16 %v675
        %v2204 = vunpack.c.h.b16 %v675
        %v2205 = vunpack.c.l.b16 %v676
        %v2206 = vunpack.c.h.b16 %v676
        %v2207 = vunpack.c.l.b16 %v677
        %v2208 = vunpack.c.h.b16 %v677
        %v2209 = vunpack.c.l.b16 %v678
        %v2210 = vunpack.c.h.b16 %v678
        %v2211 = vunpack.c.l.b16 %v679
        %v2212 = vunpack.c.h.b16 %v679
        %v2213 = vunpack.c.l.b16 %v680
        %v2214 = vunpack.c.h.b16 %v680
        %v2215 = vunpack.c.l.b16 %v681
        %v2216 = vunpack.c.h.b16 %v681
        %v2217 = vunpack.c.l.b16 %v682
        %v2218 = vunpack.c.h.b16 %v682
        %v2219 = vunpack.c.l.b16 %v683
        %v2220 = vunpack.c.h.b16 %v683
        %v2221 = vunpack.c.l.b16 %v684
        %v2222 = vunpack.c.h.b16 %v684
        %v2223 = vunpack.c.l.b16 %v685
        %v2224 = vunpack.c.h.b16 %v685
        %v2225 = vunpack.c.l.b16 %v686
        %v2226 = vunpack.c.h.b16 %v686
        %v2227 = vunpack.c.l.b16 %v687
        %v2228 = vunpack.c.h.b16 %v687
        %v2229 = vunpack.c.l.b16 %v688
        %v2230 = vunpack.c.h.b16 %v688
        %v2231 = vunpack.c.l.b16 %v689
        %v2232 = vunpack.c.h.b16 %v689
        %v2233 = vpack.c.b16 %v1241, %v1209
        %v2234 = vpack.c.b16 %v1242, %v1210
        %v2235 = vpack.c.b16 %v1243, %v1211
        %v2236 = vpack.c.b16 %v1244, %v1212
        %v2237 = vpack.c.b16 %v1245, %v1213
        %v2238 = vpack.c.b16 %v1246, %v1214
        %v2239 = vpack.c.b16 %v1247, %v1215
        %v2240 = vpack.c.b16 %v1248, %v1216
        %v2241 = vpack.c.b16 %v1249, %v1217
        %v2242 = vpack.c.b16 %v1250, %v1218
        %v2243 = vpack.c.b16 %v1251, %v1219
        %v2244 = vpack.c.b16 %v1252, %v1220
        %v2245 = vpack.c.b16 %v1253, %v1221
        %v2246 = vpack.c.b16 %v1254, %v1222
        %v2247 = vpack.c.b16 %v1255, %v1223
        %v2248 = vpack.c.b16 %v1256, %v1224
        %v2249 = vpack.c.b16 %v1257, %v1225
        %v2250 = vpack.c.b16 %v1258, %v1226
        %v2251 = vpack.c.b16 %v1259, %v1227
        %v2252 = vpack.c.b16 %v1260, %v1228
        %v2253 = vpack.c.b16 %v1261, %v1229
        %v2254 = vpack.c.b16 %v1262, %v1230
        %v2255 = vpack.c.b16 %v1263, %v1231
        %v2256 = vpack.c.b16 %v1264, %v1232
        %v2257 = vpack.c.b16 %v1265, %v1233
        %v2258 = vpack.c.b16 %v1266, %v1234
        %v2259 = vpack.c.b16 %v1267, %v1235
        %v2260 = vpack.c.b16 %v1268, %v1236
        %v2261 = vpack.c.b16 %v1269, %v1237
        %v2262 = vpack.c.b16 %v1270, %v1238
        %v2263 = vpack.c.b16 %v1271, %v1239
        %v2264 = vpack.c.b16 %v1272, %v1240
        %v2265 = vpack.c.b16 %v1305, %v1273
        %v2266 = vpack.c.b16 %v1306, %v1274
        %v2267 = vpack.c.b16 %v1307, %v1275
        %v2268 = vpack.c.b16 %v1308, %v1276
        %v2269 = vpack.c.b16 %v1309, %v1277
        %v2270 = vpack.c.b16 %v1310, %v1278
        %v2271 = vpack.c.b16 %v1311, %v1279
        %v2272 = vpack.c.b16 %v1312, %v1280
        %v2273 = vpack.c.b16 %v1313, %v1281
        %v2274 = vpack.c.b16 %v1314, %v1282
        %v2275 = vpack.c.b16 %v1315, %v1283
        %v2276 = vpack.c.b16 %v1316, %v1284
        %v2277 = vpack.c.b16 %v1317, %v1285
        %v2278 = vpack.c.b16 %v1318, %v1286
        %v2279 = vpack.c.b16 %v1319, %v1287
        %v2280 = vpack.c.b16 %v1320, %v1288
        %v2281 = vpack.c.b16 %v1321, %v1289
        %v2282 = vpack.c.b16 %v1322, %v1290
        %v2283 = vpack.c.b16 %v1323, %v1291
        %v2284 = vpack.c.b16 %v1324, %v1292
        %v2285 = vpack.c.b16 %v1325, %v1293
        %v2286 = vpack.c.b16 %v1326, %v1294
        %v2287 = vpack.c.b16 %v1327, %v1295
        %v2288 = vpack.c.b16 %v1328, %v1296
        %v2289 = vpack.c.b16 %v1329, %v1297
        %v2290 = vpack.c.b16 %v1330, %v1298
        %v2291 = vpack.c.b16 %v1331, %v1299
        %v2292 = vpack.c.b16 %v1332, %v1300
        %v2293 = vpack.c.b16 %v1333, %v1301
        %v2294 = vpack.c.b16 %v1334, %v1302
        %v2295 = vpack.c.b16 %v1335, %v1303
        %v2296 = vpack.c.b16 %v1336, %v1304
        %v2297 = vpack.c.b16 %v1369, %v1337
        %v2298 = vpack.c.b16 %v1370, %v1338
        %v2299 = vpack.c.b16 %v1371, %v1339
        %v2300 = vpack.c.b16 %v1372, %v1340
        %v2301 = vpack.c.b16 %v1373, %v1341
        %v2302 = vpack.c.b16 %v1374, %v1342
        %v2303 = vpack.c.b16 %v1375, %v1343
        %v2304 = vpack.c.b16 %v1376, %v1344
        %v2305 = vpack.c.b16 %v1377, %v1345
        %v2306 = vpack.c.b16 %v1378, %v1346
        %v2307 = vpack.c.b16 %v1379, %v1347
        %v2308 = vpack.c.b16 %v1380, %v1348
        %v2309 = vpack.c.b16 %v1381, %v1349
        %v2310 = vpack.c.b16 %v1382, %v1350
        %v2311 = vpack.c.b16 %v1383, %v1351
        %v2312 = vpack.c.b16 %v1384, %v1352
        %v2313 = vpack.c.b16 %v1385, %v1353
        %v2314 = vpack.c.b16 %v1386, %v1354
        %v2315 = vpack.c.b16 %v1387, %v1355
        %v2316 = vpack.c.b16 %v1388, %v1356
        %v2317 = vpack.c.b16 %v1389, %v1357
        %v2318 = vpack.c.b16 %v1390, %v1358
        %v2319 = vpack.c.b16 %v1391, %v1359
        %v2320 = vpack.c.b16 %v1392, %v1360
        %v2321 = vpack.c.b16 %v1393, %v1361
        %v2322 = vpack.c.b16 %v1394, %v1362
        %v2323 = vpack.c.b16 %v1395, %v1363
        %v2324 = vpack.c.b16 %v1396, %v1364
        %v2325 = vpack.c.b16 %v1397, %v1365
        %v2326 = vpack.c.b16 %v1398, %v1366
        %v2327 = vpack.c.b16 %v1399, %v1367
        %v2328 = vpack.c.b16 %v1400, %v1368
        %v2329 = vpack.c.b16 %v1433, %v1401
        %v2330 = vpack.c.b16 %v1434, %v1402
        %v2331 = vpack.c.b16 %v1435, %v1403
        %v2332 = vpack.c.b16 %v1436, %v1404
        %v2333 = vpack.c.b16 %v1437, %v1405
        %v2334 = vpack.c.b16 %v1438, %v1406
        %v2335 = vpack.c.b16 %v1439, %v1407
        %v2336 = vpack.c.b16 %v1440, %v1408
        %v2337 = vpack.c.b16 %v1441, %v1409
        %v2338 = vpack.c.b16 %v1442, %v1410
        %v2339 = vpack.c.b16 %v1443, %v1411
        %v2340 = vpack.c.b16 %v1444, %v1412
        %v2341 = vpack.c.b16 %v1445, %v1413
        %v2342 = vpack.c.b16 %v1446, %v1414
        %v2343 = vpack.c.b16 %v1447, %v1415
        %v2344 = vpack.c.b16 %v1448, %v1416
        %v2345 = vpack.c.b16 %v1449, %v1417
        %v2346 = vpack.c.b16 %v1450, %v1418
        %v2347 = vpack.c.b16 %v1451, %v1419
        %v2348 = vpack.c.b16 %v1452, %v1420
        %v2349 = vpack.c.b16 %v1453, %v1421
        %v2350 = vpack.c.b16 %v1454, %v1422
        %v2351 = vpack.c.b16 %v1455, %v1423
        %v2352 = vpack.c.b16 %v1456, %v1424
        %v2353 = vpack.c.b16 %v1457, %v1425
        %v2354 = vpack.c.b16 %v1458, %v1426
        %v2355 = vpack.c.b16 %v1459, %v1427
        %v2356 = vpack.c.b16 %v1460, %v1428
        %v2357 = vpack.c.b16 %v1461, %v1429
        %v2358 = vpack.c.b16 %v1462, %v1430
        %v2359 = vpack.c.b16 %v1463, %v1431
        %v2360 = vpack.c.b16 %v1464, %v1432
        %v2361 = vpack.c.b16 %v1497, %v1465
        %v2362 = vpack.c.b16 %v1498, %v1466
        %v2363 = vpack.c.b16 %v1499, %v1467
        %v2364 = vpack.c.b16 %v1500, %v1468
        %v2365 = vpack.c.b16 %v1501, %v1469
        %v2366 = vpack.c.b16 %v1502, %v1470
        %v2367 = vpack.c.b16 %v1503, %v1471
        %v2368 = vpack.c.b16 %v1504, %v1472
        %v2369 = vpack.c.b16 %v1505, %v1473
        %v2370 = vpack.c.b16 %v1506, %v1474
        %v2371 = vpack.c.b16 %v1507, %v1475
        %v2372 = vpack.c.b16 %v1508, %v1476
        %v2373 = vpack.c.b16 %v1509, %v1477
        %v2374 = vpack.c.b16 %v1510, %v1478
        %v2375 = vpack.c.b16 %v1511, %v1479
        %v2376 = vpack.c.b16 %v1512, %v1480
        %v2377 = vpack.c.b16 %v1513, %v1481
        %v2378 = vpack.c.b16 %v1514, %v1482
        %v2379 = vpack.c.b16 %v1515, %v1483
        %v2380 = vpack.c.b16 %v1516, %v1484
        %v2381 = vpack.c.b16 %v1517, %v1485
        %v2382 = vpack.c.b16 %v1518, %v1486
        %v2383 = vpack.c.b16 %v1519, %v1487
        %v2384 = vpack.c.b16 %v1520, %v1488
        %v2385 = vpack.c.b16 %v1521, %v1489
        %v2386 = vpack.c.b16 %v1522, %v1490
        %v2387 = vpack.c.b16 %v1523, %v1491
        %v2388 = vpack.c.b16 %v1524, %v1492
        %v2389 = vpack.c.b16 %v1525, %v1493
        %v2390 = vpack.c.b16 %v1526, %v1494
        %v2391 = vpack.c.b16 %v1527, %v1495
        %v2392 = vpack.c.b16 %v1528, %v1496
        %v2393 = vpack.c.b16 %v1561, %v1529
        %v2394 = vpack.c.b16 %v1562, %v1530
        %v2395 = vpack.c.b16 %v1563, %v1531
        %v2396 = vpack.c.b16 %v1564, %v1532
        %v2397 = vpack.c.b16 %v1565, %v1533
        %v2398 = vpack.c.b16 %v1566, %v1534
        %v2399 = vpack.c.b16 %v1567, %v1535
        %v2400 = vpack.c.b16 %v1568, %v1536
        %v2401 = vpack.c.b16 %v1569, %v1537
        %v2402 = vpack.c.b16 %v1570, %v1538
        %v2403 = vpack.c.b16 %v1571, %v1539
        %v2404 = vpack.c.b16 %v1572, %v1540
        %v2405 = vpack.c.b16 %v1573, %v1541
        %v2406 = vpack.c.b16 %v1574, %v1542
        %v2407 = vpack.c.b16 %v1575, %v1543
        %v2408 = vpack.c.b16 %v1576, %v1544
        %v2409 = vpack.c.b16 %v1577, %v1545
        %v2410 = vpack.c.b16 %v1578, %v1546
        %v2411 = vpack.c.b16 %v1579, %v1547
        %v2412 = vpack.c.b16 %v1580, %v1548
        %v2413 = vpack.c.b16 %v1581, %v1549
        %v2414 = vpack.c.b16 %v1582, %v1550
        %v2415 = vpack.c.b16 %v1583, %v1551
        %v2416 = vpack.c.b16 %v1584, %v1552
        %v2417 = vpack.c.b16 %v1585, %v1553
        %v2418 = vpack.c.b16 %v1586, %v1554
        %v2419 = vpack.c.b16 %v1587, %v1555
        %v2420 = vpack.c.b16 %v1588, %v1556
        %v2421 = vpack.c.b16 %v1589, %v1557
        %v2422 = vpack.c.b16 %v1590, %v1558
        %v2423 = vpack.c.b16 %v1591, %v1559
        %v2424 = vpack.c.b16 %v1592, %v1560
        %v2425 = vpack.c.b16 %v1625, %v1593
        %v2426 = vpack.c.b16 %v1626, %v1594
        %v2427 = vpack.c.b16 %v1627, %v1595
        %v2428 = vpack.c.b16 %v1628, %v1596
        %v2429 = vpack.c.b16 %v1629, %v1597
        %v2430 = vpack.c.b16 %v1630, %v1598
        %v2431 = vpack.c.b16 %v1631, %v1599
        %v2432 = vpack.c.b16 %v1632, %v1600
        %v2433 = vpack.c.b16 %v1633, %v1601
        %v2434 = vpack.c.b16 %v1634, %v1602
        %v2435 = vpack.c.b16 %v1635, %v1603
        %v2436 = vpack.c.b16 %v1636, %v1604
        %v2437 = vpack.c.b16 %v1637, %v1605
        %v2438 = vpack.c.b16 %v1638, %v1606
        %v2439 = vpack.c.b16 %v1639, %v1607
        %v2440 = vpack.c.b16 %v1640, %v1608
        %v2441 = vpack.c.b16 %v1641, %v1609
        %v2442 = vpack.c.b16 %v1642, %v1610
        %v2443 = vpack.c.b16 %v1643, %v1611
        %v2444 = vpack.c.b16 %v1644, %v1612
        %v2445 = vpack.c.b16 %v1645, %v1613
        %v2446 = vpack.c.b16 %v1646, %v1614
        %v2447 = vpack.c.b16 %v1647, %v1615
        %v2448 = vpack.c.b16 %v1648, %v1616
        %v2449 = vpack.c.b16 %v1649, %v1617
        %v2450 = vpack.c.b16 %v1650, %v1618
        %v2451 = vpack.c.b16 %v1651, %v1619
        %v2452 = vpack.c.b16 %v1652, %v1620
        %v2453 = vpack.c.b16 %v1653, %v1621
        %v2454 = vpack.c.b16 %v1654, %v1622
        %v2455 = vpack.c.b16 %v1655, %v1623
        %v2456 = vpack.c.b16 %v1656, %v1624
        %v2457 = vpack.c.b16 %v1689, %v1657
        %v2458 = vpack.c.b16 %v1690, %v1658
        %v2459 = vpack.c.b16 %v1691, %v1659
        %v2460 = vpack.c.b16 %v1692, %v1660
        %v2461 = vpack.c.b16 %v1693, %v1661
        %v2462 = vpack.c.b16 %v1694, %v1662
        %v2463 = vpack.c.b16 %v1695, %v1663
        %v2464 = vpack.c.b16 %v1696, %v1664
        %v2465 = vpack.c.b16 %v1697, %v1665
        %v2466 = vpack.c.b16 %v1698, %v1666
        %v2467 = vpack.c.b16 %v1699, %v1667
        %v2468 = vpack.c.b16 %v1700, %v1668
        %v2469 = vpack.c.b16 %v1701, %v1669
        %v2470 = vpack.c.b16 %v1702, %v1670
        %v2471 = vpack.c.b16 %v1703, %v1671
        %v2472 = vpack.c.b16 %v1704, %v1672
        %v2473 = vpack.c.b16 %v1705, %v1673
        %v2474 = vpack.c.b16 %v1706, %v1674
        %v2475 = vpack.c.b16 %v1707, %v1675
        %v2476 = vpack.c.b16 %v1708, %v1676
        %v2477 = vpack.c.b16 %v1709, %v1677
        %v2478 = vpack.c.b16 %v1710, %v1678
        %v2479 = vpack.c.b16 %v1711, %v1679
        %v2480 = vpack.c.b16 %v1712, %v1680
        %v2481 = vpack.c.b16 %v1713, %v1681
        %v2482 = vpack.c.b16 %v1714, %v1682
        %v2483 = vpack.c.b16 %v1715, %v1683
        %v2484 = vpack.c.b16 %v1716, %v1684
        %v2485 = vpack.c.b16 %v1717, %v1685
        %v2486 = vpack.c.b16 %v1718, %v1686
        %v2487 = vpack.c.b16 %v1719, %v1687
        %v2488 = vpack.c.b16 %v1720, %v1688
        %v2489 = vpack.c.b16 %v1753, %v1721
        %v2490 = vpack.c.b16 %v1754, %v1722
        %v2491 = vpack.c.b16 %v1755, %v1723
        %v2492 = vpack.c.b16 %v1756, %v1724
        %v2493 = vpack.c.b16 %v1757, %v1725
        %v2494 = vpack.c.b16 %v1758, %v1726
        %v2495 = vpack.c.b16 %v1759, %v1727
        %v2496 = vpack.c.b16 %v1760, %v1728
        %v2497 = vpack.c.b16 %v1761, %v1729
        %v2498 = vpack.c.b16 %v1762, %v1730
        %v2499 = vpack.c.b16 %v1763, %v1731
        %v2500 = vpack.c.b16 %v1764, %v1732
        %v2501 = vpack.c.b16 %v1765, %v1733
        %v2502 = vpack.c.b16 %v1766, %v1734
        %v2503 = vpack.c.b16 %v1767, %v1735
        %v2504 = vpack.c.b16 %v1768, %v1736
        %v2505 = vpack.c.b16 %v1769, %v1737
        %v2506 = vpack.c.b16 %v1770, %v1738
        %v2507 = vpack.c.b16 %v1771, %v1739
        %v2508 = vpack.c.b16 %v1772, %v1740
        %v2509 = vpack.c.b16 %v1773, %v1741
        %v2510 = vpack.c.b16 %v1774, %v1742
        %v2511 = vpack.c.b16 %v1775, %v1743
        %v2512 = vpack.c.b16 %v1776, %v1744
        %v2513 = vpack.c.b16 %v1777, %v1745
        %v2514 = vpack.c.b16 %v1778, %v1746
        %v2515 = vpack.c.b16 %v1779, %v1747
        %v2516 = vpack.c.b16 %v1780, %v1748
        %v2517 = vpack.c.b16 %v1781, %v1749
        %v2518 = vpack.c.b16 %v1782, %v1750
        %v2519 = vpack.c.b16 %v1783, %v1751
        %v2520 = vpack.c.b16 %v1784, %v1752
        %v2521 = vpack.c.b16 %v1817, %v1785
        %v2522 = vpack.c.b16 %v1818, %v1786
        %v2523 = vpack.c.b16 %v1819, %v1787
        %v2524 = vpack.c.b16 %v1820, %v1788
        %v2525 = vpack.c.b16 %v1821, %v1789
        %v2526 = vpack.c.b16 %v1822, %v1790
        %v2527 = vpack.c.b16 %v1823, %v1791
        %v2528 = vpack.c.b16 %v1824, %v1792
        %v2529 = vpack.c.b16 %v1825, %v1793
        %v2530 = vpack.c.b16 %v1826, %v1794
        %v2531 = vpack.c.b16 %v1827, %v1795
        %v2532 = vpack.c.b16 %v1828, %v1796
        %v2533 = vpack.c.b16 %v1829, %v1797
        %v2534 = vpack.c.b16 %v1830, %v1798
        %v2535 = vpack.c.b16 %v1831, %v1799
        %v2536 = vpack.c.b16 %v1832, %v1800
        %v2537 = vpack.c.b16 %v1833, %v1801
        %v2538 = vpack.c.b16 %v1834, %v1802
        %v2539 = vpack.c.b16 %v1835, %v1803
        %v2540 = vpack.c.b16 %v1836, %v1804
        %v2541 = vpack.c.b16 %v1837, %v1805
        %v2542 = vpack.c.b16 %v1838, %v1806
        %v2543 = vpack.c.b16 %v1839, %v1807
        %v2544 = vpack.c.b16 %v1840, %v1808
        %v2545 = vpack.c.b16 %v1841, %v1809
        %v2546 = vpack.c.b16 %v1842, %v1810
        %v2547 = vpack.c.b16 %v1843, %v1811
        %v2548 = vpack.c.b16 %v1844, %v1812
        %v2549 = vpack.c.b16 %v1845, %v1813
        %v2550 = vpack.c.b16 %v1846, %v1814
        %v2551 = vpack.c.b16 %v1847, %v1815
        %v2552 = vpack.c.b16 %v1848, %v1816
        %v2553 = vpack.c.b16 %v1881, %v1849
        %v2554 = vpack.c.b16 %v1882, %v1850
        %v2555 = vpack.c.b16 %v1883, %v1851
        %v2556 = vpack.c.b16 %v1884, %v1852
        %v2557 = vpack.c.b16 %v1885, %v1853
        %v2558 = vpack.c.b16 %v1886, %v1854
        %v2559 = vpack.c.b16 %v1887, %v1855
        %v2560 = vpack.c.b16 %v1888, %v1856
        %v2561 = vpack.c.b16 %v1889, %v1857
        %v2562 = vpack.c.b16 %v1890, %v1858
        %v2563 = vpack.c.b16 %v1891, %v1859
        %v2564 = vpack.c.b16 %v1892, %v1860
        %v2565 = vpack.c.b16 %v1893, %v1861
        %v2566 = vpack.c.b16 %v1894, %v1862
        %v2567 = vpack.c.b16 %v1895, %v1863
        %v2568 = vpack.c.b16 %v1896, %v1864
        %v2569 = vpack.c.b16 %v1897, %v1865
        %v2570 = vpack.c.b16 %v1898, %v1866
        %v2571 = vpack.c.b16 %v1899, %v1867
        %v2572 = vpack.c.b16 %v1900, %v1868
        %v2573 = vpack.c.b16 %v1901, %v1869
        %v2574 = vpack.c.b16 %v1902, %v1870
        %v2575 = vpack.c.b16 %v1903, %v1871
        %v2576 = vpack.c.b16 %v1904, %v1872
        %v2577 = vpack.c.b16 %v1905, %v1873
        %v2578 = vpack.c.b16 %v1906, %v1874
        %v2579 = vpack.c.b16 %v1907, %v1875
        %v2580 = vpack.c.b16 %v1908, %v1876
        %v2581 = vpack.c.b16 %v1909, %v1877
        %v2582 = vpack.c.b16 %v1910, %v1878
        %v2583 = vpack.c.b16 %v1911, %v1879
        %v2584 = vpack.c.b16 %v1912, %v1880
        %v2585 = vpack.c.b16 %v1945, %v1913
        %v2586 = vpack.c.b16 %v1946, %v1914
        %v2587 = vpack.c.b16 %v1947, %v1915
        %v2588 = vpack.c.b16 %v1948, %v1916
        %v2589 = vpack.c.b16 %v1949, %v1917
        %v2590 = vpack.c.b16 %v1950, %v1918
        %v2591 = vpack.c.b16 %v1951, %v1919
        %v2592 = vpack.c.b16 %v1952, %v1920
        %v2593 = vpack.c.b16 %v1953, %v1921
        %v2594 = vpack.c.b16 %v1954, %v1922
        %v2595 = vpack.c.b16 %v1955, %v1923
        %v2596 = vpack.c.b16 %v1956, %v1924
        %v2597 = vpack.c.b16 %v1957, %v1925
        %v2598 = vpack.c.b16 %v1958, %v1926
        %v2599 = vpack.c.b16 %v1959, %v1927
        %v2600 = vpack.c.b16 %v1960, %v1928
        %v2601 = vpack.c.b16 %v1961, %v1929
        %v2602 = vpack.c.b16 %v1962, %v1930
        %v2603 = vpack.c.b16 %v1963, %v1931
        %v2604 = vpack.c.b16 %v1964, %v1932
        %v2605 = vpack.c.b16 %v1965, %v1933
        %v2606 = vpack.c.b16 %v1966, %v1934
        %v2607 = vpack.c.b16 %v1967, %v1935
        %v2608 = vpack.c.b16 %v1968, %v1936
        %v2609 = vpack.c.b16 %v1969, %v1937
        %v2610 = vpack.c.b16 %v1970, %v1938
        %v2611 = vpack.c.b16 %v1971, %v1939
        %v2612 = vpack.c.b16 %v1972, %v1940
        %v2613 = vpack.c.b16 %v1973, %v1941
        %v2614 = vpack.c.b16 %v1974, %v1942
        %v2615 = vpack.c.b16 %v1975, %v1943
        %v2616 = vpack.c.b16 %v1976, %v1944
        %v2617 = vpack.c.b16 %v2009, %v1977
        %v2618 = vpack.c.b16 %v2010, %v1978
        %v2619 = vpack.c.b16 %v2011, %v1979
        %v2620 = vpack.c.b16 %v2012, %v1980
        %v2621 = vpack.c.b16 %v2013, %v1981
        %v2622 = vpack.c.b16 %v2014, %v1982
        %v2623 = vpack.c.b16 %v2015, %v1983
        %v2624 = vpack.c.b16 %v2016, %v1984
        %v2625 = vpack.c.b16 %v2017, %v1985
        %v2626 = vpack.c.b16 %v2018, %v1986
        %v2627 = vpack.c.b16 %v2019, %v1987
        %v2628 = vpack.c.b16 %v2020, %v1988
        %v2629 = vpack.c.b16 %v2021, %v1989
        %v2630 = vpack.c.b16 %v2022, %v1990
        %v2631 = vpack.c.b16 %v2023, %v1991
        %v2632 = vpack.c.b16 %v2024, %v1992
        %v2633 = vpack.c.b16 %v2025, %v1993
        %v2634 = vpack.c.b16 %v2026, %v1994
        %v2635 = vpack.c.b16 %v2027, %v1995
        %v2636 = vpack.c.b16 %v2028, %v1996
        %v2637 = vpack.c.b16 %v2029, %v1997
        %v2638 = vpack.c.b16 %v2030, %v1998
        %v2639 = vpack.c.b16 %v2031, %v1999
        %v2640 = vpack.c.b16 %v2032, %v2000
        %v2641 = vpack.c.b16 %v2033, %v2001
        %v2642 = vpack.c.b16 %v2034, %v2002
        %v2643 = vpack.c.b16 %v2035, %v2003
        %v2644 = vpack.c.b16 %v2036, %v2004
        %v2645 = vpack.c.b16 %v2037, %v2005
        %v2646 = vpack.c.b16 %v2038, %v2006
        %v2647 = vpack.c.b16 %v2039, %v2007
        %v2648 = vpack.c.b16 %v2040, %v2008
        %v2649 = vpack.c.b16 %v2073, %v2041
        %v2650 = vpack.c.b16 %v2074, %v2042
        %v2651 = vpack.c.b16 %v2075, %v2043
        %v2652 = vpack.c.b16 %v2076, %v2044
        %v2653 = vpack.c.b16 %v2077, %v2045
        %v2654 = vpack.c.b16 %v2078, %v2046
        %v2655 = vpack.c.b16 %v2079, %v2047
        %v2656 = vpack.c.b16 %v2080, %v2048
        %v2657 = vpack.c.b16 %v2081, %v2049
        %v2658 = vpack.c.b16 %v2082, %v2050
        %v2659 = vpack.c.b16 %v2083, %v2051
        %v2660 = vpack.c.b16 %v2084, %v2052
        %v2661 = vpack.c.b16 %v2085, %v2053
        %v2662 = vpack.c.b16 %v2086, %v2054
        %v2663 = vpack.c.b16 %v2087, %v2055
        %v2664 = vpack.c.b16 %v2088, %v2056
        %v2665 = vpack.c.b16 %v2089, %v2057
        %v2666 = vpack.c.b16 %v2090, %v2058
        %v2667 = vpack.c.b16 %v2091, %v2059
        %v2668 = vpack.c.b16 %v2092, %v2060
        %v2669 = vpack.c.b16 %v2093, %v2061
        %v2670 = vpack.c.b16 %v2094, %v2062
        %v2671 = vpack.c.b16 %v2095, %v2063
        %v2672 = vpack.c.b16 %v2096, %v2064
        %v2673 = vpack.c.b16 %v2097, %v2065
        %v2674 = vpack.c.b16 %v2098, %v2066
        %v2675 = vpack.c.b16 %v2099, %v2067
        %v2676 = vpack.c.b16 %v2100, %v2068
        %v2677 = vpack.c.b16 %v2101, %v2069
        %v2678 = vpack.c.b16 %v2102, %v2070
        %v2679 = vpack.c.b16 %v2103, %v2071
        %v2680 = vpack.c.b16 %v2104, %v2072
        %v2681 = vpack.c.b16 %v2137, %v2105
        %v2682 = vpack.c.b16 %v2138, %v2106
        %v2683 = vpack.c.b16 %v2139, %v2107
        %v2684 = vpack.c.b16 %v2140, %v2108
        %v2685 = vpack.c.b16 %v2141, %v2109
        %v2686 = vpack.c.b16 %v2142, %v2110
        %v2687 = vpack.c.b16 %v2143, %v2111
        %v2688 = vpack.c.b16 %v2144, %v2112
        %v2689 = vpack.c.b16 %v2145, %v2113
        %v2690 = vpack.c.b16 %v2146, %v2114
        %v2691 = vpack.c.b16 %v2147, %v2115
        %v2692 = vpack.c.b16 %v2148, %v2116
        %v2693 = vpack.c.b16 %v2149, %v2117
        %v2694 = vpack.c.b16 %v2150, %v2118
        %v2695 = vpack.c.b16 %v2151, %v2119
        %v2696 = vpack.c.b16 %v2152, %v2120
        %v2697 = vpack.c.b16 %v2153, %v2121
        %v2698 = vpack.c.b16 %v2154, %v2122
        %v2699 = vpack.c.b16 %v2155, %v2123
        %v2700 = vpack.c.b16 %v2156, %v2124
        %v2701 = vpack.c.b16 %v2157, %v2125
        %v2702 = vpack.c.b16 %v2158, %v2126
        %v2703 = vpack.c.b16 %v2159, %v2127
        %v2704 = vpack.c.b16 %v2160, %v2128
        %v2705 = vpack.c.b16 %v2161, %v2129
        %v2706 = vpack.c.b16 %v2162, %v2130
        %v2707 = vpack.c.b16 %v2163, %v2131
        %v2708 = vpack.c.b16 %v2164, %v2132
        %v2709 = vpack.c.b16 %v2165, %v2133
        %v2710 = vpack.c.b16 %v2166, %v2134
        %v2711 = vpack.c.b16 %v2167, %v2135
        %v2712 = vpack.c.b16 %v2168, %v2136
        %v2713 = vpack.c.b16 %v2201, %v2169
        %v2714 = vpack.c.b16 %v2202, %v2170
        %v2715 = vpack.c.b16 %v2203, %v2171
        %v2716 = vpack.c.b16 %v2204, %v2172
        %v2717 = vpack.c.b16 %v2205, %v2173
        %v2718 = vpack.c.b16 %v2206, %v2174
        %v2719 = vpack.c.b16 %v2207, %v2175
        %v2720 = vpack.c.b16 %v2208, %v2176
        %v2721 = vpack.c.b16 %v2209, %v2177
        %v2722 = vpack.c.b16 %v2210, %v2178
        %v2723 = vpack.c.b16 %v2211, %v2179
        %v2724 = vpack.c.b16 %v2212, %v2180
        %v2725 = vpack.c.b16 %v2213, %v2181
        %v2726 = vpack.c.b16 %v2214, %v2182
        %v2727 = vpack.c.b16 %v2215, %v2183
        %v2728 = vpack.c.b16 %v2216, %v2184
        %v2729 = vpack.c.b16 %v2217, %v2185
        %v2730 = vpack.c.b16 %v2218, %v2186
        %v2731 = vpack.c.b16 %v2219, %v2187
        %v2732 = vpack.c.b16 %v2220, %v2188
        %v2733 = vpack.c.b16 %v2221, %v2189
        %v2734 = vpack.c.b16 %v2222, %v2190
        %v2735 = vpack.c.b16 %v2223, %v2191
        %v2736 = vpack.c.b16 %v2224, %v2192
        %v2737 = vpack.c.b16 %v2225, %v2193
        %v2738 = vpack.c.b16 %v2226, %v2194
        %v2739 = vpack.c.b16 %v2227, %v2195
        %v2740 = vpack.c.b16 %v2228, %v2196
        %v2741 = vpack.c.b16 %v2229, %v2197
        %v2742 = vpack.c.b16 %v2230, %v2198
        %v2743 = vpack.c.b16 %v2231, %v2199
        %v2744 = vpack.c.b16 %v2232, %v2200
        %3257 = vmatprep.subr.bf16.mxu0 %v2458
        %3258 = vmatpush1.bf16.msra.mxu0 %v2457
        %3259 = vmatprep.subr.bf16.mxu0 %v2426
        %3260 = vmatpush1.bf16.msra.mxu0 %v2425
        %3261 = vmatprep.subr.bf16.mxu0 %v2394
        %3262 = vmatpush1.bf16.msra.mxu0 %v2393
        %3263 = vmatprep.subr.bf16.mxu0 %v2362
        %3264 = vmatpush1.bf16.msra.mxu0 %v2361
        %3265 = vmatprep.subr.bf16.mxu0 %v2330
        %3266 = vmatpush1.bf16.msra.mxu0 %v2329
        %3267 = vmatprep.subr.bf16.mxu0 %v2298
        %3268 = vmatpush1.bf16.msra.mxu0 %v2297
        %3269 = vmatprep.subr.bf16.mxu0 %v2266
        %3270 = vmatpush1.bf16.msra.mxu0 %v2265
        %3271 = vmatprep.subr.bf16.mxu0 %v2234
        %3272 = vmatpush1.bf16.msra.mxu0 %v2233
        %3273 = vmatprep.subr.bf16.mxu0 %v2714
        %3274 = vmatpush2.bf16.msra.mxu0 %v2713
        %3275 = vmatprep.subr.bf16.mxu0 %v2682
        %3276 = vmatpush2.bf16.msra.mxu0 %v2681
        %3277 = vmatprep.subr.bf16.mxu0 %v2650
        %3278 = vmatpush2.bf16.msra.mxu0 %v2649
        %3279 = vmatprep.subr.bf16.mxu0 %v2618
        %3280 = vmatpush2.bf16.msra.mxu0 %v2617
        %3281 = vmatprep.subr.bf16.mxu0 %v2586
        %3282 = vmatpush2.bf16.msra.mxu0 %v2585
        %3283 = vmatprep.subr.bf16.mxu0 %v2554
        %3284 = vmatpush2.bf16.msra.mxu0 %v2553
        %3285 = vmatprep.subr.bf16.mxu0 %v2522
        %3286 = vmatpush2.bf16.msra.mxu0 %v2521
        %3287 = vmatprep.subr.bf16.mxu0 %v2490
        %3288 = vmatpush2.bf16.msra.mxu0 %v2489
        %3289 = vmatprep.mubr.bf16.mxu0 %v694
        %3290 = vmatmul.mubr.bf16.gmra.mxu0 %v693
        %v3291 = vpop.f32.mrf.mxu0
        %v3292 = vadd.f32 0.0, %v3291
        %v3293 = vpop.f32.mrf.mxu0
        %v3294 = vadd.f32 0.0, %v3293
        %v3295 = vpop.f32.mrf.mxu0
        %v3296 = vpop.f32.mrf.mxu0
        %3297 = vdwg.mxu0
        %3298 = vmatprep.subr.bf16.mxu0 %v2460
        %3299 = vmatpush1.bf16.msra.mxu0 %v2459
        %3300 = vmatprep.subr.bf16.mxu0 %v2428
        %3301 = vmatpush1.bf16.msra.mxu0 %v2427
        %3302 = vmatprep.subr.bf16.mxu0 %v2396
        %3303 = vmatpush1.bf16.msra.mxu0 %v2395
        %3304 = vmatprep.subr.bf16.mxu0 %v2364
        %3305 = vmatpush1.bf16.msra.mxu0 %v2363
        %3306 = vmatprep.subr.bf16.mxu0 %v2332
        %3307 = vmatpush1.bf16.msra.mxu0 %v2331
        %3308 = vmatprep.subr.bf16.mxu0 %v2300
        %3309 = vmatpush1.bf16.msra.mxu0 %v2299
        %3310 = vmatprep.subr.bf16.mxu0 %v2268
        %3311 = vmatpush1.bf16.msra.mxu0 %v2267
        %3312 = vmatprep.subr.bf16.mxu0 %v2236
        %3313 = vmatpush1.bf16.msra.mxu0 %v2235
        %3314 = vmatprep.subr.bf16.mxu0 %v2716
        %3315 = vmatpush2.bf16.msra.mxu0 %v2715
        %3316 = vmatprep.subr.bf16.mxu0 %v2684
        %3317 = vmatpush2.bf16.msra.mxu0 %v2683
        %3318 = vmatprep.subr.bf16.mxu0 %v2652
        %3319 = vmatpush2.bf16.msra.mxu0 %v2651
        %3320 = vmatprep.subr.bf16.mxu0 %v2620
        %3321 = vmatpush2.bf16.msra.mxu0 %v2619
        %3322 = vmatprep.subr.bf16.mxu0 %v2588
        %3323 = vmatpush2.bf16.msra.mxu0 %v2587
        %3324 = vmatprep.subr.bf16.mxu0 %v2556
        %3325 = vmatpush2.bf16.msra.mxu0 %v2555
        %3326 = vmatprep.subr.bf16.mxu0 %v2524
        %3327 = vmatpush2.bf16.msra.mxu0 %v2523
        %3328 = vmatprep.subr.bf16.mxu0 %v2492
        %3329 = vmatpush2.bf16.msra.mxu0 %v2491
        %3330 = vmatprep.mubr.bf16.mxu0 %v694
        %3331 = vmatmul.mubr.bf16.gmra.mxu0 %v693
        %v3332 = vpop.f32.mrf.mxu0
        %v3333 = vadd.f32 0.0, %v3332
        %v3334 = vpop.f32.mrf.mxu0
        %v3335 = vadd.f32 0.0, %v3334
        %v3336 = vpop.f32.mrf.mxu0
        %v3337 = vpop.f32.mrf.mxu0
        %3338 = vdwg.mxu0
        %3339 = vmatprep.subr.bf16.mxu0 %v2462
        %3340 = vmatpush1.bf16.msra.mxu0 %v2461
        %3341 = vmatprep.subr.bf16.mxu0 %v2430
        %3342 = vmatpush1.bf16.msra.mxu0 %v2429
        %3343 = vmatprep.subr.bf16.mxu0 %v2398
        %3344 = vmatpush1.bf16.msra.mxu0 %v2397
        %3345 = vmatprep.subr.bf16.mxu0 %v2366
        %3346 = vmatpush1.bf16.msra.mxu0 %v2365
        %3347 = vmatprep.subr.bf16.mxu0 %v2334
        %3348 = vmatpush1.bf16.msra.mxu0 %v2333
        %3349 = vmatprep.subr.bf16.mxu0 %v2302
        %3350 = vmatpush1.bf16.msra.mxu0 %v2301
        %3351 = vmatprep.subr.bf16.mxu0 %v2270
        %3352 = vmatpush1.bf16.msra.mxu0 %v2269
        %3353 = vmatprep.subr.bf16.mxu0 %v2238
        %3354 = vmatpush1.bf16.msra.mxu0 %v2237
        %3355 = vmatprep.subr.bf16.mxu0 %v2718
        %3356 = vmatpush2.bf16.msra.mxu0 %v2717
        %3357 = vmatprep.subr.bf16.mxu0 %v2686
        %3358 = vmatpush2.bf16.msra.mxu0 %v2685
        %3359 = vmatprep.subr.bf16.mxu0 %v2654
        %3360 = vmatpush2.bf16.msra.mxu0 %v2653
        %3361 = vmatprep.subr.bf16.mxu0 %v2622
        %3362 = vmatpush2.bf16.msra.mxu0 %v2621
        %3363 = vmatprep.subr.bf16.mxu0 %v2590
        %3364 = vmatpush2.bf16.msra.mxu0 %v2589
        %3365 = vmatprep.subr.bf16.mxu0 %v2558
        %3366 = vmatpush2.bf16.msra.mxu0 %v2557
        %3367 = vmatprep.subr.bf16.mxu0 %v2526
        %3368 = vmatpush2.bf16.msra.mxu0 %v2525
        %3369 = vmatprep.subr.bf16.mxu0 %v2494
        %3370 = vmatpush2.bf16.msra.mxu0 %v2493
        %3371 = vmatprep.mubr.bf16.mxu0 %v694
        %3372 = vmatmul.mubr.bf16.gmra.mxu0 %v693
        %v3373 = vpop.f32.mrf.mxu0
        %v3374 = vadd.f32 0.0, %v3373
        %v3375 = vpop.f32.mrf.mxu0
        %v3376 = vadd.f32 0.0, %v3375
        %v3377 = vpop.f32.mrf.mxu0
        %v3378 = vpop.f32.mrf.mxu0
        %3379 = vdwg.mxu0
        %3380 = vmatprep.subr.bf16.mxu0 %v2464
        %3381 = vmatpush1.bf16.msra.mxu0 %v2463
        %3382 = vmatprep.subr.bf16.mxu0 %v2432
        %3383 = vmatpush1.bf16.msra.mxu0 %v2431
        %3384 = vmatprep.subr.bf16.mxu0 %v2400
        %3385 = vmatpush1.bf16.msra.mxu0 %v2399
        %3386 = vmatprep.subr.bf16.mxu0 %v2368
        %3387 = vmatpush1.bf16.msra.mxu0 %v2367
        %3388 = vmatprep.subr.bf16.mxu0 %v2336
        %3389 = vmatpush1.bf16.msra.mxu0 %v2335
        %3390 = vmatprep.subr.bf16.mxu0 %v2304
        %3391 = vmatpush1.bf16.msra.mxu0 %v2303
        %3392 = vmatprep.subr.bf16.mxu0 %v2272
        %3393 = vmatpush1.bf16.msra.mxu0 %v2271
        %3394 = vmatprep.subr.bf16.mxu0 %v2240
        %3395 = vmatpush1.bf16.msra.mxu0 %v2239
        %3396 = vmatprep.subr.bf16.mxu0 %v2720
        %3397 = vmatpush2.bf16.msra.mxu0 %v2719
        %3398 = vmatprep.subr.bf16.mxu0 %v2688
        %3399 = vmatpush2.bf16.msra.mxu0 %v2687
        %3400 = vmatprep.subr.bf16.mxu0 %v2656
        %3401 = vmatpush2.bf16.msra.mxu0 %v2655
        %3402 = vmatprep.subr.bf16.mxu0 %v2624
        %3403 = vmatpush2.bf16.msra.mxu0 %v2623
        %3404 = vmatprep.subr.bf16.mxu0 %v2592
        %3405 = vmatpush2.bf16.msra.mxu0 %v2591
        %3406 = vmatprep.subr.bf16.mxu0 %v2560
        %3407 = vmatpush2.bf16.msra.mxu0 %v2559
        %3408 = vmatprep.subr.bf16.mxu0 %v2528
        %3409 = vmatpush2.bf16.msra.mxu0 %v2527
        %3410 = vmatprep.subr.bf16.mxu0 %v2496
        %3411 = vmatpush2.bf16.msra.mxu0 %v2495
        %3412 = vmatprep.mubr.bf16.mxu0 %v694
        %3413 = vmatmul.mubr.bf16.gmra.mxu0 %v693
        %v3414 = vpop.f32.mrf.mxu0
        %v3415 = vadd.f32 0.0, %v3414
        %v3416 = vpop.f32.mrf.mxu0
        %v3417 = vadd.f32 0.0, %v3416
        %v3418 = vpop.f32.mrf.mxu0
        %v3419 = vpop.f32.mrf.mxu0
        %3420 = vdwg.mxu0
        %3421 = vmatprep.subr.bf16.mxu0 %v2466
        %3422 = vmatpush1.bf16.msra.mxu0 %v2465
        %3423 = vmatprep.subr.bf16.mxu0 %v2434
        %3424 = vmatpush1.bf16.msra.mxu0 %v2433
        %3425 = vmatprep.subr.bf16.mxu0 %v2402
        %3426 = vmatpush1.bf16.msra.mxu0 %v2401
        %3427 = vmatprep.subr.bf16.mxu0 %v2370
        %3428 = vmatpush1.bf16.msra.mxu0 %v2369
        %3429 = vmatprep.subr.bf16.mxu0 %v2338
        %3430 = vmatpush1.bf16.msra.mxu0 %v2337
        %3431 = vmatprep.subr.bf16.mxu0 %v2306
        %3432 = vmatpush1.bf16.msra.mxu0 %v2305
        %3433 = vmatprep.subr.bf16.mxu0 %v2274
        %3434 = vmatpush1.bf16.msra.mxu0 %v2273
        %3435 = vmatprep.subr.bf16.mxu0 %v2242
        %3436 = vmatpush1.bf16.msra.mxu0 %v2241
        %3437 = vmatprep.subr.bf16.mxu0 %v2722
        %3438 = vmatpush2.bf16.msra.mxu0 %v2721
        %3439 = vmatprep.subr.bf16.mxu0 %v2690
        %3440 = vmatpush2.bf16.msra.mxu0 %v2689
        %3441 = vmatprep.subr.bf16.mxu0 %v2658
        %3442 = vmatpush2.bf16.msra.mxu0 %v2657
        %3443 = vmatprep.subr.bf16.mxu0 %v2626
        %3444 = vmatpush2.bf16.msra.mxu0 %v2625
        %3445 = vmatprep.subr.bf16.mxu0 %v2594
        %3446 = vmatpush2.bf16.msra.mxu0 %v2593
        %3447 = vmatprep.subr.bf16.mxu0 %v2562
        %3448 = vmatpush2.bf16.msra.mxu0 %v2561
        %3449 = vmatprep.subr.bf16.mxu0 %v2530
        %3450 = vmatpush2.bf16.msra.mxu0 %v2529
        %3451 = vmatprep.subr.bf16.mxu0 %v2498
        %3452 = vmatpush2.bf16.msra.mxu0 %v2497
        %3453 = vmatprep.mubr.bf16.mxu0 %v694
        %3454 = vmatmul.mubr.bf16.gmra.mxu0 %v693
        %v3455 = vpop.f32.mrf.mxu0
        %v3456 = vadd.f32 0.0, %v3455
        %v3457 = vpop.f32.mrf.mxu0
        %v3458 = vadd.f32 0.0, %v3457
        %v3459 = vpop.f32.mrf.mxu0
        %v3460 = vpop.f32.mrf.mxu0
        %3461 = vdwg.mxu0
        %3462 = vmatprep.subr.bf16.mxu0 %v2468
        %3463 = vmatpush1.bf16.msra.mxu0 %v2467
        %3464 = vmatprep.subr.bf16.mxu0 %v2436
        %3465 = vmatpush1.bf16.msra.mxu0 %v2435
        %3466 = vmatprep.subr.bf16.mxu0 %v2404
        %3467 = vmatpush1.bf16.msra.mxu0 %v2403
        %3468 = vmatprep.subr.bf16.mxu0 %v2372
        %3469 = vmatpush1.bf16.msra.mxu0 %v2371
        %3470 = vmatprep.subr.bf16.mxu0 %v2340
        %3471 = vmatpush1.bf16.msra.mxu0 %v2339
        %3472 = vmatprep.subr.bf16.mxu0 %v2308
        %3473 = vmatpush1.bf16.msra.mxu0 %v2307
        %3474 = vmatprep.subr.bf16.mxu0 %v2276
        %3475 = vmatpush1.bf16.msra.mxu0 %v2275
        %3476 = vmatprep.subr.bf16.mxu0 %v2244
        %3477 = vmatpush1.bf16.msra.mxu0 %v2243
        %3478 = vmatprep.subr.bf16.mxu0 %v2724
        %3479 = vmatpush2.bf16.msra.mxu0 %v2723
        %3480 = vmatprep.subr.bf16.mxu0 %v2692
        %3481 = vmatpush2.bf16.msra.mxu0 %v2691
        %3482 = vmatprep.subr.bf16.mxu0 %v2660
        %3483 = vmatpush2.bf16.msra.mxu0 %v2659
        %3484 = vmatprep.subr.bf16.mxu0 %v2628
        %3485 = vmatpush2.bf16.msra.mxu0 %v2627
        %3486 = vmatprep.subr.bf16.mxu0 %v2596
        %3487 = vmatpush2.bf16.msra.mxu0 %v2595
        %3488 = vmatprep.subr.bf16.mxu0 %v2564
        %3489 = vmatpush2.bf16.msra.mxu0 %v2563
        %3490 = vmatprep.subr.bf16.mxu0 %v2532
        %3491 = vmatpush2.bf16.msra.mxu0 %v2531
        %3492 = vmatprep.subr.bf16.mxu0 %v2500
        %3493 = vmatpush2.bf16.msra.mxu0 %v2499
        %3494 = vmatprep.mubr.bf16.mxu0 %v694
        %3495 = vmatmul.mubr.bf16.gmra.mxu0 %v693
        %v3496 = vpop.f32.mrf.mxu0
        %v3497 = vadd.f32 0.0, %v3496
        %v3498 = vpop.f32.mrf.mxu0
        %v3499 = vadd.f32 0.0, %v3498
        %v3500 = vpop.f32.mrf.mxu0
        %v3501 = vpop.f32.mrf.mxu0
        %3502 = vdwg.mxu0
        %3503 = vmatprep.subr.bf16.mxu0 %v2470
        %3504 = vmatpush1.bf16.msra.mxu0 %v2469
        %3505 = vmatprep.subr.bf16.mxu0 %v2438
        %3506 = vmatpush1.bf16.msra.mxu0 %v2437
        %3507 = vmatprep.subr.bf16.mxu0 %v2406
        %3508 = vmatpush1.bf16.msra.mxu0 %v2405
        %3509 = vmatprep.subr.bf16.mxu0 %v2374
        %3510 = vmatpush1.bf16.msra.mxu0 %v2373
        %3511 = vmatprep.subr.bf16.mxu0 %v2342
        %3512 = vmatpush1.bf16.msra.mxu0 %v2341
        %3513 = vmatprep.subr.bf16.mxu0 %v2310
        %3514 = vmatpush1.bf16.msra.mxu0 %v2309
        %3515 = vmatprep.subr.bf16.mxu0 %v2278
        %3516 = vmatpush1.bf16.msra.mxu0 %v2277
        %3517 = vmatprep.subr.bf16.mxu0 %v2246
        %3518 = vmatpush1.bf16.msra.mxu0 %v2245
        %3519 = vmatprep.subr.bf16.mxu0 %v2726
        %3520 = vmatpush2.bf16.msra.mxu0 %v2725
        %3521 = vmatprep.subr.bf16.mxu0 %v2694
        %3522 = vmatpush2.bf16.msra.mxu0 %v2693
        %3523 = vmatprep.subr.bf16.mxu0 %v2662
        %3524 = vmatpush2.bf16.msra.mxu0 %v2661
        %3525 = vmatprep.subr.bf16.mxu0 %v2630
        %3526 = vmatpush2.bf16.msra.mxu0 %v2629
        %3527 = vmatprep.subr.bf16.mxu0 %v2598
        %3528 = vmatpush2.bf16.msra.mxu0 %v2597
        %3529 = vmatprep.subr.bf16.mxu0 %v2566
        %3530 = vmatpush2.bf16.msra.mxu0 %v2565
        %3531 = vmatprep.subr.bf16.mxu0 %v2534
        %3532 = vmatpush2.bf16.msra.mxu0 %v2533
        %3533 = vmatprep.subr.bf16.mxu0 %v2502
        %3534 = vmatpush2.bf16.msra.mxu0 %v2501
        %3535 = vmatprep.mubr.bf16.mxu0 %v694
        %3536 = vmatmul.mubr.bf16.gmra.mxu0 %v693
        %v3537 = vpop.f32.mrf.mxu0
        %v3538 = vadd.f32 0.0, %v3537
        %v3539 = vpop.f32.mrf.mxu0
        %v3540 = vadd.f32 0.0, %v3539
        %v3541 = vpop.f32.mrf.mxu0
        %v3542 = vpop.f32.mrf.mxu0
        %3543 = vdwg.mxu0
        %3544 = vmatprep.subr.bf16.mxu0 %v2472
        %3545 = vmatpush1.bf16.msra.mxu0 %v2471
        %3546 = vmatprep.subr.bf16.mxu0 %v2440
        %3547 = vmatpush1.bf16.msra.mxu0 %v2439
        %3548 = vmatprep.subr.bf16.mxu0 %v2408
        %3549 = vmatpush1.bf16.msra.mxu0 %v2407
        %3550 = vmatprep.subr.bf16.mxu0 %v2376
        %3551 = vmatpush1.bf16.msra.mxu0 %v2375
        %3552 = vmatprep.subr.bf16.mxu0 %v2344
        %3553 = vmatpush1.bf16.msra.mxu0 %v2343
        %3554 = vmatprep.subr.bf16.mxu0 %v2312
        %3555 = vmatpush1.bf16.msra.mxu0 %v2311
        %3556 = vmatprep.subr.bf16.mxu0 %v2280
        %3557 = vmatpush1.bf16.msra.mxu0 %v2279
        %3558 = vmatprep.subr.bf16.mxu0 %v2248
        %3559 = vmatpush1.bf16.msra.mxu0 %v2247
        %3560 = vmatprep.subr.bf16.mxu0 %v2728
        %3561 = vmatpush2.bf16.msra.mxu0 %v2727
        %3562 = vmatprep.subr.bf16.mxu0 %v2696
        %3563 = vmatpush2.bf16.msra.mxu0 %v2695
        %3564 = vmatprep.subr.bf16.mxu0 %v2664
        %3565 = vmatpush2.bf16.msra.mxu0 %v2663
        %3566 = vmatprep.subr.bf16.mxu0 %v2632
        %3567 = vmatpush2.bf16.msra.mxu0 %v2631
        %3568 = vmatprep.subr.bf16.mxu0 %v2600
        %3569 = vmatpush2.bf16.msra.mxu0 %v2599
        %3570 = vmatprep.subr.bf16.mxu0 %v2568
        %3571 = vmatpush2.bf16.msra.mxu0 %v2567
        %3572 = vmatprep.subr.bf16.mxu0 %v2536
        %3573 = vmatpush2.bf16.msra.mxu0 %v2535
        %3574 = vmatprep.subr.bf16.mxu0 %v2504
        %3575 = vmatpush2.bf16.msra.mxu0 %v2503
        %3576 = vmatprep.mubr.bf16.mxu0 %v694
        %3577 = vmatmul.mubr.bf16.gmra.mxu0 %v693
        %v3578 = vpop.f32.mrf.mxu0
        %v3579 = vadd.f32 0.0, %v3578
        %v3580 = vpop.f32.mrf.mxu0
        %v3581 = vadd.f32 0.0, %v3580
        %v3582 = vpop.f32.mrf.mxu0
        %v3583 = vpop.f32.mrf.mxu0
        %3584 = vdwg.mxu0
        %3585 = vmatprep.subr.bf16.mxu0 %v2474
        %3586 = vmatpush1.bf16.msra.mxu0 %v2473
        %3587 = vmatprep.subr.bf16.mxu0 %v2442
        %3588 = vmatpush1.bf16.msra.mxu0 %v2441
        %3589 = vmatprep.subr.bf16.mxu0 %v2410
        %3590 = vmatpush1.bf16.msra.mxu0 %v2409
        %3591 = vmatprep.subr.bf16.mxu0 %v2378
        %3592 = vmatpush1.bf16.msra.mxu0 %v2377
        %3593 = vmatprep.subr.bf16.mxu0 %v2346
        %3594 = vmatpush1.bf16.msra.mxu0 %v2345
        %3595 = vmatprep.subr.bf16.mxu0 %v2314
        %3596 = vmatpush1.bf16.msra.mxu0 %v2313
        %3597 = vmatprep.subr.bf16.mxu0 %v2282
        %3598 = vmatpush1.bf16.msra.mxu0 %v2281
        %3599 = vmatprep.subr.bf16.mxu0 %v2250
        %3600 = vmatpush1.bf16.msra.mxu0 %v2249
        %3601 = vmatprep.subr.bf16.mxu0 %v2730
        %3602 = vmatpush2.bf16.msra.mxu0 %v2729
        %3603 = vmatprep.subr.bf16.mxu0 %v2698
        %3604 = vmatpush2.bf16.msra.mxu0 %v2697
        %3605 = vmatprep.subr.bf16.mxu0 %v2666
        %3606 = vmatpush2.bf16.msra.mxu0 %v2665
        %3607 = vmatprep.subr.bf16.mxu0 %v2634
        %3608 = vmatpush2.bf16.msra.mxu0 %v2633
        %3609 = vmatprep.subr.bf16.mxu0 %v2602
        %3610 = vmatpush2.bf16.msra.mxu0 %v2601
        %3611 = vmatprep.subr.bf16.mxu0 %v2570
        %3612 = vmatpush2.bf16.msra.mxu0 %v2569
        %3613 = vmatprep.subr.bf16.mxu0 %v2538
        %3614 = vmatpush2.bf16.msra.mxu0 %v2537
        %3615 = vmatprep.subr.bf16.mxu0 %v2506
        %3616 = vmatpush2.bf16.msra.mxu0 %v2505
        %3617 = vmatprep.mubr.bf16.mxu0 %v694
        %3618 = vmatmul.mubr.bf16.gmra.mxu0 %v693
        %v3619 = vpop.f32.mrf.mxu0
        %v3620 = vadd.f32 0.0, %v3619
        %v3621 = vpop.f32.mrf.mxu0
        %v3622 = vadd.f32 0.0, %v3621
        %v3623 = vpop.f32.mrf.mxu0
        %v3624 = vpop.f32.mrf.mxu0
        %3625 = vdwg.mxu0
        %3626 = vmatprep.subr.bf16.mxu0 %v2476
        %3627 = vmatpush1.bf16.msra.mxu0 %v2475
        %3628 = vmatprep.subr.bf16.mxu0 %v2444
        %3629 = vmatpush1.bf16.msra.mxu0 %v2443
        %3630 = vmatprep.subr.bf16.mxu0 %v2412
        %3631 = vmatpush1.bf16.msra.mxu0 %v2411
        %3632 = vmatprep.subr.bf16.mxu0 %v2380
        %3633 = vmatpush1.bf16.msra.mxu0 %v2379
        %3634 = vmatprep.subr.bf16.mxu0 %v2348
        %3635 = vmatpush1.bf16.msra.mxu0 %v2347
        %3636 = vmatprep.subr.bf16.mxu0 %v2316
        %3637 = vmatpush1.bf16.msra.mxu0 %v2315
        %3638 = vmatprep.subr.bf16.mxu0 %v2284
        %3639 = vmatpush1.bf16.msra.mxu0 %v2283
        %3640 = vmatprep.subr.bf16.mxu0 %v2252
        %3641 = vmatpush1.bf16.msra.mxu0 %v2251
        %3642 = vmatprep.subr.bf16.mxu0 %v2732
        %3643 = vmatpush2.bf16.msra.mxu0 %v2731
        %3644 = vmatprep.subr.bf16.mxu0 %v2700
        %3645 = vmatpush2.bf16.msra.mxu0 %v2699
        %3646 = vmatprep.subr.bf16.mxu0 %v2668
        %3647 = vmatpush2.bf16.msra.mxu0 %v2667
        %3648 = vmatprep.subr.bf16.mxu0 %v2636
        %3649 = vmatpush2.bf16.msra.mxu0 %v2635
        %3650 = vmatprep.subr.bf16.mxu0 %v2604
        %3651 = vmatpush2.bf16.msra.mxu0 %v2603
        %3652 = vmatprep.subr.bf16.mxu0 %v2572
        %3653 = vmatpush2.bf16.msra.mxu0 %v2571
        %3654 = vmatprep.subr.bf16.mxu0 %v2540
        %3655 = vmatpush2.bf16.msra.mxu0 %v2539
        %3656 = vmatprep.subr.bf16.mxu0 %v2508
        %3657 = vmatpush2.bf16.msra.mxu0 %v2507
        %3658 = vmatprep.mubr.bf16.mxu0 %v694
        %3659 = vmatmul.mubr.bf16.gmra.mxu0 %v693
        %v3660 = vpop.f32.mrf.mxu0
        %v3661 = vadd.f32 0.0, %v3660
        %v3662 = vpop.f32.mrf.mxu0
        %v3663 = vadd.f32 0.0, %v3662
        %v3664 = vpop.f32.mrf.mxu0
        %v3665 = vpop.f32.mrf.mxu0
        %3666 = vdwg.mxu0
        %3667 = vmatprep.subr.bf16.mxu0 %v2478
        %3668 = vmatpush1.bf16.msra.mxu0 %v2477
        %3669 = vmatprep.subr.bf16.mxu0 %v2446
        %3670 = vmatpush1.bf16.msra.mxu0 %v2445
        %3671 = vmatprep.subr.bf16.mxu0 %v2414
        %3672 = vmatpush1.bf16.msra.mxu0 %v2413
        %3673 = vmatprep.subr.bf16.mxu0 %v2382
        %3674 = vmatpush1.bf16.msra.mxu0 %v2381
        %3675 = vmatprep.subr.bf16.mxu0 %v2350
        %3676 = vmatpush1.bf16.msra.mxu0 %v2349
        %3677 = vmatprep.subr.bf16.mxu0 %v2318
        %3678 = vmatpush1.bf16.msra.mxu0 %v2317
        %3679 = vmatprep.subr.bf16.mxu0 %v2286
        %3680 = vmatpush1.bf16.msra.mxu0 %v2285
        %3681 = vmatprep.subr.bf16.mxu0 %v2254
        %3682 = vmatpush1.bf16.msra.mxu0 %v2253
        %3683 = vmatprep.subr.bf16.mxu0 %v2734
        %3684 = vmatpush2.bf16.msra.mxu0 %v2733
        %3685 = vmatprep.subr.bf16.mxu0 %v2702
        %3686 = vmatpush2.bf16.msra.mxu0 %v2701
        %3687 = vmatprep.subr.bf16.mxu0 %v2670
        %3688 = vmatpush2.bf16.msra.mxu0 %v2669
        %3689 = vmatprep.subr.bf16.mxu0 %v2638
        %3690 = vmatpush2.bf16.msra.mxu0 %v2637
        %3691 = vmatprep.subr.bf16.mxu0 %v2606
        %3692 = vmatpush2.bf16.msra.mxu0 %v2605
        %3693 = vmatprep.subr.bf16.mxu0 %v2574
        %3694 = vmatpush2.bf16.msra.mxu0 %v2573
        %3695 = vmatprep.subr.bf16.mxu0 %v2542
        %3696 = vmatpush2.bf16.msra.mxu0 %v2541
        %3697 = vmatprep.subr.bf16.mxu0 %v2510
        %3698 = vmatpush2.bf16.msra.mxu0 %v2509
        %3699 = vmatprep.mubr.bf16.mxu0 %v694
        %3700 = vmatmul.mubr.bf16.gmra.mxu0 %v693
        %v3701 = vpop.f32.mrf.mxu0
        %v3702 = vadd.f32 0.0, %v3701
        %v3703 = vpop.f32.mrf.mxu0
        %v3704 = vadd.f32 0.0, %v3703
        %v3705 = vpop.f32.mrf.mxu0
        %v3706 = vpop.f32.mrf.mxu0
        %3707 = vdwg.mxu0
        %3708 = vmatprep.subr.bf16.mxu0 %v2480
        %3709 = vmatpush1.bf16.msra.mxu0 %v2479
        %3710 = vmatprep.subr.bf16.mxu0 %v2448
        %3711 = vmatpush1.bf16.msra.mxu0 %v2447
        %3712 = vmatprep.subr.bf16.mxu0 %v2416
        %3713 = vmatpush1.bf16.msra.mxu0 %v2415
        %3714 = vmatprep.subr.bf16.mxu0 %v2384
        %3715 = vmatpush1.bf16.msra.mxu0 %v2383
        %3716 = vmatprep.subr.bf16.mxu0 %v2352
        %3717 = vmatpush1.bf16.msra.mxu0 %v2351
        %3718 = vmatprep.subr.bf16.mxu0 %v2320
        %3719 = vmatpush1.bf16.msra.mxu0 %v2319
        %3720 = vmatprep.subr.bf16.mxu0 %v2288
        %3721 = vmatpush1.bf16.msra.mxu0 %v2287
        %3722 = vmatprep.subr.bf16.mxu0 %v2256
        %3723 = vmatpush1.bf16.msra.mxu0 %v2255
        %3724 = vmatprep.subr.bf16.mxu0 %v2736
        %3725 = vmatpush2.bf16.msra.mxu0 %v2735
        %3726 = vmatprep.subr.bf16.mxu0 %v2704
        %3727 = vmatpush2.bf16.msra.mxu0 %v2703
        %3728 = vmatprep.subr.bf16.mxu0 %v2672
        %3729 = vmatpush2.bf16.msra.mxu0 %v2671
        %3730 = vmatprep.subr.bf16.mxu0 %v2640
        %3731 = vmatpush2.bf16.msra.mxu0 %v2639
        %3732 = vmatprep.subr.bf16.mxu0 %v2608
        %3733 = vmatpush2.bf16.msra.mxu0 %v2607
        %3734 = vmatprep.subr.bf16.mxu0 %v2576
        %3735 = vmatpush2.bf16.msra.mxu0 %v2575
        %3736 = vmatprep.subr.bf16.mxu0 %v2544
        %3737 = vmatpush2.bf16.msra.mxu0 %v2543
        %3738 = vmatprep.subr.bf16.mxu0 %v2512
        %3739 = vmatpush2.bf16.msra.mxu0 %v2511
        %3740 = vmatprep.mubr.bf16.mxu0 %v694
        %3741 = vmatmul.mubr.bf16.gmra.mxu0 %v693
        %v3742 = vpop.f32.mrf.mxu0
        %v3743 = vadd.f32 0.0, %v3742
        %v3744 = vpop.f32.mrf.mxu0
        %v3745 = vadd.f32 0.0, %v3744
        %v3746 = vpop.f32.mrf.mxu0
        %v3747 = vpop.f32.mrf.mxu0
        %3748 = vdwg.mxu0
        %3749 = vmatprep.subr.bf16.mxu0 %v2482
        %3750 = vmatpush1.bf16.msra.mxu0 %v2481
        %3751 = vmatprep.subr.bf16.mxu0 %v2450
        %3752 = vmatpush1.bf16.msra.mxu0 %v2449
        %3753 = vmatprep.subr.bf16.mxu0 %v2418
        %3754 = vmatpush1.bf16.msra.mxu0 %v2417
        %3755 = vmatprep.subr.bf16.mxu0 %v2386
        %3756 = vmatpush1.bf16.msra.mxu0 %v2385
        %3757 = vmatprep.subr.bf16.mxu0 %v2354
        %3758 = vmatpush1.bf16.msra.mxu0 %v2353
        %3759 = vmatprep.subr.bf16.mxu0 %v2322
        %3760 = vmatpush1.bf16.msra.mxu0 %v2321
        %3761 = vmatprep.subr.bf16.mxu0 %v2290
        %3762 = vmatpush1.bf16.msra.mxu0 %v2289
        %3763 = vmatprep.subr.bf16.mxu0 %v2258
        %3764 = vmatpush1.bf16.msra.mxu0 %v2257
        %3765 = vmatprep.subr.bf16.mxu0 %v2738
        %3766 = vmatpush2.bf16.msra.mxu0 %v2737
        %3767 = vmatprep.subr.bf16.mxu0 %v2706
        %3768 = vmatpush2.bf16.msra.mxu0 %v2705
        %3769 = vmatprep.subr.bf16.mxu0 %v2674
        %3770 = vmatpush2.bf16.msra.mxu0 %v2673
        %3771 = vmatprep.subr.bf16.mxu0 %v2642
        %3772 = vmatpush2.bf16.msra.mxu0 %v2641
        %3773 = vmatprep.subr.bf16.mxu0 %v2610
        %3774 = vmatpush2.bf16.msra.mxu0 %v2609
        %3775 = vmatprep.subr.bf16.mxu0 %v2578
        %3776 = vmatpush2.bf16.msra.mxu0 %v2577
        %3777 = vmatprep.subr.bf16.mxu0 %v2546
        %3778 = vmatpush2.bf16.msra.mxu0 %v2545
        %3779 = vmatprep.subr.bf16.mxu0 %v2514
        %3780 = vmatpush2.bf16.msra.mxu0 %v2513
        %3781 = vmatprep.mubr.bf16.mxu0 %v694
        %3782 = vmatmul.mubr.bf16.gmra.mxu0 %v693
        %v3783 = vpop.f32.mrf.mxu0
        %v3784 = vadd.f32 0.0, %v3783
        %v3785 = vpop.f32.mrf.mxu0
        %v3786 = vadd.f32 0.0, %v3785
        %v3787 = vpop.f32.mrf.mxu0
        %v3788 = vpop.f32.mrf.mxu0
        %3789 = vdwg.mxu0
        %3790 = vmatprep.subr.bf16.mxu0 %v2484
        %3791 = vmatpush1.bf16.msra.mxu0 %v2483
        %3792 = vmatprep.subr.bf16.mxu0 %v2452
        %3793 = vmatpush1.bf16.msra.mxu0 %v2451
        %3794 = vmatprep.subr.bf16.mxu0 %v2420
        %3795 = vmatpush1.bf16.msra.mxu0 %v2419
        %3796 = vmatprep.subr.bf16.mxu0 %v2388
        %3797 = vmatpush1.bf16.msra.mxu0 %v2387
        %3798 = vmatprep.subr.bf16.mxu0 %v2356
        %3799 = vmatpush1.bf16.msra.mxu0 %v2355
        %3800 = vmatprep.subr.bf16.mxu0 %v2324
        %3801 = vmatpush1.bf16.msra.mxu0 %v2323
        %3802 = vmatprep.subr.bf16.mxu0 %v2292
        %3803 = vmatpush1.bf16.msra.mxu0 %v2291
        %3804 = vmatprep.subr.bf16.mxu0 %v2260
        %3805 = vmatpush1.bf16.msra.mxu0 %v2259
        %3806 = vmatprep.subr.bf16.mxu0 %v2740
        %3807 = vmatpush2.bf16.msra.mxu0 %v2739
        %3808 = vmatprep.subr.bf16.mxu0 %v2708
        %3809 = vmatpush2.bf16.msra.mxu0 %v2707
        %3810 = vmatprep.subr.bf16.mxu0 %v2676
        %3811 = vmatpush2.bf16.msra.mxu0 %v2675
        %3812 = vmatprep.subr.bf16.mxu0 %v2644
        %3813 = vmatpush2.bf16.msra.mxu0 %v2643
        %3814 = vmatprep.subr.bf16.mxu0 %v2612
        %3815 = vmatpush2.bf16.msra.mxu0 %v2611
        %3816 = vmatprep.subr.bf16.mxu0 %v2580
        %3817 = vmatpush2.bf16.msra.mxu0 %v2579
        %3818 = vmatprep.subr.bf16.mxu0 %v2548
        %3819 = vmatpush2.bf16.msra.mxu0 %v2547
        %3820 = vmatprep.subr.bf16.mxu0 %v2516
        %3821 = vmatpush2.bf16.msra.mxu0 %v2515
        %3822 = vmatprep.mubr.bf16.mxu0 %v694
        %3823 = vmatmul.mubr.bf16.gmra.mxu0 %v693
        %v3824 = vpop.f32.mrf.mxu0
        %v3825 = vadd.f32 0.0, %v3824
        %v3826 = vpop.f32.mrf.mxu0
        %v3827 = vadd.f32 0.0, %v3826
        %v3828 = vpop.f32.mrf.mxu0
        %v3829 = vpop.f32.mrf.mxu0
        %3830 = vdwg.mxu0
        %3831 = vmatprep.subr.bf16.mxu0 %v2486
        %3832 = vmatpush1.bf16.msra.mxu0 %v2485
        %3833 = vmatprep.subr.bf16.mxu0 %v2454
        %3834 = vmatpush1.bf16.msra.mxu0 %v2453
        %3835 = vmatprep.subr.bf16.mxu0 %v2422
        %3836 = vmatpush1.bf16.msra.mxu0 %v2421
        %3837 = vmatprep.subr.bf16.mxu0 %v2390
        %3838 = vmatpush1.bf16.msra.mxu0 %v2389
        %3839 = vmatprep.subr.bf16.mxu0 %v2358
        %3840 = vmatpush1.bf16.msra.mxu0 %v2357
        %3841 = vmatprep.subr.bf16.mxu0 %v2326
        %3842 = vmatpush1.bf16.msra.mxu0 %v2325
        %3843 = vmatprep.subr.bf16.mxu0 %v2294
        %3844 = vmatpush1.bf16.msra.mxu0 %v2293
        %3845 = vmatprep.subr.bf16.mxu0 %v2262
        %3846 = vmatpush1.bf16.msra.mxu0 %v2261
        %3847 = vmatprep.subr.bf16.mxu0 %v2742
        %3848 = vmatpush2.bf16.msra.mxu0 %v2741
        %3849 = vmatprep.subr.bf16.mxu0 %v2710
        %3850 = vmatpush2.bf16.msra.mxu0 %v2709
        %3851 = vmatprep.subr.bf16.mxu0 %v2678
        %3852 = vmatpush2.bf16.msra.mxu0 %v2677
        %3853 = vmatprep.subr.bf16.mxu0 %v2646
        %3854 = vmatpush2.bf16.msra.mxu0 %v2645
        %3855 = vmatprep.subr.bf16.mxu0 %v2614
        %3856 = vmatpush2.bf16.msra.mxu0 %v2613
        %3857 = vmatprep.subr.bf16.mxu0 %v2582
        %3858 = vmatpush2.bf16.msra.mxu0 %v2581
        %3859 = vmatprep.subr.bf16.mxu0 %v2550
        %3860 = vmatpush2.bf16.msra.mxu0 %v2549
        %3861 = vmatprep.subr.bf16.mxu0 %v2518
        %3862 = vmatpush2.bf16.msra.mxu0 %v2517
        %3863 = vmatprep.mubr.bf16.mxu0 %v694
        %3864 = vmatmul.mubr.bf16.gmra.mxu0 %v693
        %v3865 = vpop.f32.mrf.mxu0
        %v3866 = vadd.f32 0.0, %v3865
        %v3867 = vpop.f32.mrf.mxu0
        %v3868 = vadd.f32 0.0, %v3867
        %v3869 = vpop.f32.mrf.mxu0
        %v3870 = vpop.f32.mrf.mxu0
        %3871 = vdwg.mxu0
        %3872 = vmatprep.subr.bf16.mxu0 %v2488
        %3873 = vmatpush1.bf16.msra.mxu0 %v2487
        %3874 = vmatprep.subr.bf16.mxu0 %v2456
        %3875 = vmatpush1.bf16.msra.mxu0 %v2455
        %3876 = vmatprep.subr.bf16.mxu0 %v2424
        %3877 = vmatpush1.bf16.msra.mxu0 %v2423
        %3878 = vmatprep.subr.bf16.mxu0 %v2392
        %3879 = vmatpush1.bf16.msra.mxu0 %v2391
        %3880 = vmatprep.subr.bf16.mxu0 %v2360
        %3881 = vmatpush1.bf16.msra.mxu0 %v2359
        %3882 = vmatprep.subr.bf16.mxu0 %v2328
        %3883 = vmatpush1.bf16.msra.mxu0 %v2327
        %3884 = vmatprep.subr.bf16.mxu0 %v2296
        %3885 = vmatpush1.bf16.msra.mxu0 %v2295
        %3886 = vmatprep.subr.bf16.mxu0 %v2264
        %3887 = vmatpush1.bf16.msra.mxu0 %v2263
        %3888 = vmatprep.subr.bf16.mxu0 %v2744
        %3889 = vmatpush2.bf16.msra.mxu0 %v2743
        %3890 = vmatprep.subr.bf16.mxu0 %v2712
        %3891 = vmatpush2.bf16.msra.mxu0 %v2711
        %3892 = vmatprep.subr.bf16.mxu0 %v2680
        %3893 = vmatpush2.bf16.msra.mxu0 %v2679
        %3894 = vmatprep.subr.bf16.mxu0 %v2648
        %3895 = vmatpush2.bf16.msra.mxu0 %v2647
        %3896 = vmatprep.subr.bf16.mxu0 %v2616
        %3897 = vmatpush2.bf16.msra.mxu0 %v2615
        %3898 = vmatprep.subr.bf16.mxu0 %v2584
        %3899 = vmatpush2.bf16.msra.mxu0 %v2583
        %3900 = vmatprep.subr.bf16.mxu0 %v2552
        %3901 = vmatpush2.bf16.msra.mxu0 %v2551
        %3902 = vmatprep.subr.bf16.mxu0 %v2520
        %3903 = vmatpush2.bf16.msra.mxu0 %v2519
        %3904 = vmatprep.mubr.bf16.mxu0 %v694
        %3905 = vmatmul.mubr.bf16.gmra.mxu0 %v693
        %v3906 = vpop.f32.mrf.mxu0
        %v3907 = vadd.f32 0.0, %v3906
        %v3908 = vpop.f32.mrf.mxu0
        %v3909 = vadd.f32 0.0, %v3908
        %v3910 = vpop.f32.mrf.mxu0
        %v3911 = vpop.f32.mrf.mxu0
        %3912 = vdwg.mxu0
        %vm3913 = vcmp.ge.f32.partialorder %v3292, 0.0
        %vm3914 = vcmp.ge.f32.partialorder %v3294, 0.0
        %vm3915 = vcmp.ge.f32.partialorder %v3333, 0.0
        %vm3916 = vcmp.ge.f32.partialorder %v3335, 0.0
        %vm3917 = vcmp.ge.f32.partialorder %v3374, 0.0
        %vm3918 = vcmp.ge.f32.partialorder %v3376, 0.0
        %vm3919 = vcmp.ge.f32.partialorder %v3415, 0.0
        %vm3920 = vcmp.ge.f32.partialorder %v3417, 0.0
        %vm3921 = vcmp.ge.f32.partialorder %v3456, 0.0
        %vm3922 = vcmp.ge.f32.partialorder %v3458, 0.0
        %vm3923 = vcmp.ge.f32.partialorder %v3497, 0.0
        %vm3924 = vcmp.ge.f32.partialorder %v3499, 0.0
        %vm3925 = vcmp.ge.f32.partialorder %v3538, 0.0
        %vm3926 = vcmp.ge.f32.partialorder %v3540, 0.0
        %vm3927 = vcmp.ge.f32.partialorder %v3579, 0.0
        %vm3928 = vcmp.ge.f32.partialorder %v3581, 0.0
        %vm3929 = vcmp.ge.f32.partialorder %v3620, 0.0
        %vm3930 = vcmp.ge.f32.partialorder %v3622, 0.0
        %vm3931 = vcmp.ge.f32.partialorder %v3661, 0.0
        %vm3932 = vcmp.ge.f32.partialorder %v3663, 0.0
        %vm3933 = vcmp.ge.f32.partialorder %v3702, 0.0
        %vm3934 = vcmp.ge.f32.partialorder %v3704, 0.0
        %vm3935 = vcmp.ge.f32.partialorder %v3743, 0.0
        %vm3936 = vcmp.ge.f32.partialorder %v3745, 0.0
        %vm3937 = vcmp.ge.f32.partialorder %v3784, 0.0
        %vm3938 = vcmp.ge.f32.partialorder %v3786, 0.0
        %vm3939 = vcmp.ge.f32.partialorder %v3825, 0.0
        %vm3940 = vcmp.ge.f32.partialorder %v3827, 0.0
        %vm3941 = vcmp.ge.f32.partialorder %v3866, 0.0
        %vm3942 = vcmp.ge.f32.partialorder %v3868, 0.0
        %vm3943 = vcmp.ge.f32.partialorder %v3907, 0.0
        %vm3944 = vcmp.ge.f32.partialorder %v3909, 0.0
        %v3945 = vmul.f32 %v3292, 0.2
        %v3946 = vmul.f32 %v3294, 0.2
        %v3947 = vmul.f32 %v3333, 0.2
        %v3948 = vmul.f32 %v3335, 0.2
        %v3949 = vmul.f32 %v3374, 0.2
        %v3950 = vmul.f32 %v3376, 0.2
        %v3951 = vmul.f32 %v3415, 0.2
        %v3952 = vmul.f32 %v3417, 0.2
        %v3953 = vmul.f32 %v3456, 0.2
        %v3954 = vmul.f32 %v3458, 0.2
        %v3955 = vmul.f32 %v3497, 0.2
        %v3956 = vmul.f32 %v3499, 0.2
        %v3957 = vmul.f32 %v3538, 0.2
        %v3958 = vmul.f32 %v3540, 0.2
        %v3959 = vmul.f32 %v3579, 0.2
        %v3960 = vmul.f32 %v3581, 0.2
        %v3961 = vmul.f32 %v3620, 0.2
        %v3962 = vmul.f32 %v3622, 0.2
        %v3963 = vmul.f32 %v3661, 0.2
        %v3964 = vmul.f32 %v3663, 0.2
        %v3965 = vmul.f32 %v3702, 0.2
        %v3966 = vmul.f32 %v3704, 0.2
        %v3967 = vmul.f32 %v3743, 0.2
        %v3968 = vmul.f32 %v3745, 0.2
        %v3969 = vmul.f32 %v3784, 0.2
        %v3970 = vmul.f32 %v3786, 0.2
        %v3971 = vmul.f32 %v3825, 0.2
        %v3972 = vmul.f32 %v3827, 0.2
        %v3973 = vmul.f32 %v3866, 0.2
        %v3974 = vmul.f32 %v3868, 0.2
        %v3975 = vmul.f32 %v3907, 0.2
        %v3976 = vmul.f32 %v3909, 0.2
        %v3977 = vsel %vm3913, %v3292, %v3945
        %v3978 = vsel %vm3914, %v3294, %v3946
        %v3979 = vsel %vm3915, %v3333, %v3947
        %v3980 = vsel %vm3916, %v3335, %v3948
        %v3981 = vsel %vm3917, %v3374, %v3949
        %v3982 = vsel %vm3918, %v3376, %v3950
        %v3983 = vsel %vm3919, %v3415, %v3951
        %v3984 = vsel %vm3920, %v3417, %v3952
        %v3985 = vsel %vm3921, %v3456, %v3953
        %v3986 = vsel %vm3922, %v3458, %v3954
        %v3987 = vsel %vm3923, %v3497, %v3955
        %v3988 = vsel %vm3924, %v3499, %v3956
        %v3989 = vsel %vm3925, %v3538, %v3957
        %v3990 = vsel %vm3926, %v3540, %v3958
        %v3991 = vsel %vm3927, %v3579, %v3959
        %v3992 = vsel %vm3928, %v3581, %v3960
        %v3993 = vsel %vm3929, %v3620, %v3961
        %v3994 = vsel %vm3930, %v3622, %v3962
        %v3995 = vsel %vm3931, %v3661, %v3963
        %v3996 = vsel %vm3932, %v3663, %v3964
        %v3997 = vsel %vm3933, %v3702, %v3965
        %v3998 = vsel %vm3934, %v3704, %v3966
        %v3999 = vsel %vm3935, %v3743, %v3967
        %v4000 = vsel %vm3936, %v3745, %v3968
        %v4001 = vsel %vm3937, %v3784, %v3969
        %v4002 = vsel %vm3938, %v3786, %v3970
        %v4003 = vsel %vm3939, %v3825, %v3971
        %v4004 = vsel %vm3940, %v3827, %v3972
        %v4005 = vsel %vm3941, %v3866, %v3973
        %v4006 = vsel %vm3942, %v3868, %v3974
        %v4007 = vsel %vm3943, %v3907, %v3975
        %v4008 = vsel %vm3944, %v3909, %v3976
        %v4009 = vpack.c.bf16 %v3977, %v3977
        %v4010 = vpack.c.bf16 %v3978, %v3978
        %v4011 = vpack.c.bf16 %v3979, %v3979
        %v4012 = vpack.c.bf16 %v3980, %v3980
        %v4013 = vpack.c.bf16 %v3981, %v3981
        %v4014 = vpack.c.bf16 %v3982, %v3982
        %v4015 = vpack.c.bf16 %v3983, %v3983
        %v4016 = vpack.c.bf16 %v3984, %v3984
        %v4017 = vpack.c.bf16 %v3985, %v3985
        %v4018 = vpack.c.bf16 %v3986, %v3986
        %v4019 = vpack.c.bf16 %v3987, %v3987
        %v4020 = vpack.c.bf16 %v3988, %v3988
        %v4021 = vpack.c.bf16 %v3989, %v3989
        %v4022 = vpack.c.bf16 %v3990, %v3990
        %v4023 = vpack.c.bf16 %v3991, %v3991
        %v4024 = vpack.c.bf16 %v3992, %v3992
        %v4025 = vpack.c.bf16 %v3993, %v3993
        %v4026 = vpack.c.bf16 %v3994, %v3994
        %v4027 = vpack.c.bf16 %v3995, %v3995
        %v4028 = vpack.c.bf16 %v3996, %v3996
        %v4029 = vpack.c.bf16 %v3997, %v3997
        %v4030 = vpack.c.bf16 %v3998, %v3998
        %v4031 = vpack.c.bf16 %v3999, %v3999
        %v4032 = vpack.c.bf16 %v4000, %v4000
        %v4033 = vpack.c.bf16 %v4001, %v4001
        %v4034 = vpack.c.bf16 %v4002, %v4002
        %v4035 = vpack.c.bf16 %v4003, %v4003
        %v4036 = vpack.c.bf16 %v4004, %v4004
        %v4037 = vpack.c.bf16 %v4005, %v4005
        %v4038 = vpack.c.bf16 %v4006, %v4006
        %v4039 = vpack.c.bf16 %v4007, %v4007
        %v4040 = vpack.c.bf16 %v4008, %v4008
        %v4073 = vunpack.c.l.b16 %v4009
        %v4074 = vunpack.c.l.b16 %v4010
        %v4075 = vunpack.c.l.b16 %v4011
        %v4076 = vunpack.c.l.b16 %v4012
        %v4077 = vunpack.c.l.b16 %v4013
        %v4078 = vunpack.c.l.b16 %v4014
        %v4079 = vunpack.c.l.b16 %v4015
        %v4080 = vunpack.c.l.b16 %v4016
        %v4081 = vunpack.c.l.b16 %v4017
        %v4082 = vunpack.c.l.b16 %v4018
        %v4083 = vunpack.c.l.b16 %v4019
        %v4084 = vunpack.c.l.b16 %v4020
        %v4085 = vunpack.c.l.b16 %v4021
        %v4086 = vunpack.c.l.b16 %v4022
        %v4087 = vunpack.c.l.b16 %v4023
        %v4088 = vunpack.c.l.b16 %v4024
        %v4089 = vunpack.c.l.b16 %v4025
        %v4090 = vunpack.c.l.b16 %v4026
        %v4091 = vunpack.c.l.b16 %v4027
        %v4092 = vunpack.c.l.b16 %v4028
        %v4093 = vunpack.c.l.b16 %v4029
        %v4094 = vunpack.c.l.b16 %v4030
        %v4095 = vunpack.c.l.b16 %v4031
        %v4096 = vunpack.c.l.b16 %v4032
        %v4097 = vunpack.c.l.b16 %v4033
        %v4098 = vunpack.c.l.b16 %v4034
        %v4099 = vunpack.c.l.b16 %v4035
        %v4100 = vunpack.c.l.b16 %v4036
        %v4101 = vunpack.c.l.b16 %v4037
        %v4102 = vunpack.c.l.b16 %v4038
        %v4103 = vunpack.c.l.b16 %v4039
        %v4104 = vunpack.c.l.b16 %v4040
        %v4105 = vpack.c.b16 %v4074, %v4073
        %v4106 = vpack.c.b16 %v4076, %v4075
        %v4107 = vpack.c.b16 %v4078, %v4077
        %v4108 = vpack.c.b16 %v4080, %v4079
        %v4109 = vpack.c.b16 %v4082, %v4081
        %v4110 = vpack.c.b16 %v4084, %v4083
        %v4111 = vpack.c.b16 %v4086, %v4085
        %v4112 = vpack.c.b16 %v4088, %v4087
        %v4113 = vpack.c.b16 %v4090, %v4089
        %v4114 = vpack.c.b16 %v4092, %v4091
        %v4115 = vpack.c.b16 %v4094, %v4093
        %v4116 = vpack.c.b16 %v4096, %v4095
        %v4117 = vpack.c.b16 %v4098, %v4097
        %v4118 = vpack.c.b16 %v4100, %v4099
        %v4119 = vpack.c.b16 %v4102, %v4101
        %v4120 = vpack.c.b16 %v4104, %v4103
        %4137 = vst [vmem:[%s174] sm:$0xff] %v4105
        %4138 = vst [vmem:[%s174 + $0x8] sm:$0xff] %v4106
        %4139 = vst [vmem:[%s174 + $0x10] sm:$0xff] %v4107
        %4140 = vst [vmem:[%s174 + $0x18] sm:$0xff] %v4108
        %4141 = vst [vmem:[%s174 + $0x20] sm:$0xff] %v4109
        %4142 = vst [vmem:[%s174 + $0x28] sm:$0xff] %v4110
        %4143 = vst [vmem:[%s174 + $0x30] sm:$0xff] %v4111
        %4144 = vst [vmem:[%s174 + $0x38] sm:$0xff] %v4112
        %4145 = vst [vmem:[%s174 + $0x40] sm:$0xff] %v4113
        %4146 = vst [vmem:[%s174 + $0x48] sm:$0xff] %v4114
        %4147 = vst [vmem:[%s174 + $0x50] sm:$0xff] %v4115
        %4148 = vst [vmem:[%s174 + $0x58] sm:$0xff] %v4116
        %4149 = vst [vmem:[%s174 + $0x60] sm:$0xff] %v4117
        %4150 = vst [vmem:[%s174 + $0x68] sm:$0xff] %v4118
        %4151 = vst [vmem:[%s174 + $0x70] sm:$0xff] %v4119
        %4152 = vst [vmem:[%s174 + $0x78] sm:$0xff] %v4120
        %s4153 = sand.u32 %s75, 1
        %s4154 = scalar_lea.sflag [#allocation4], %s4153
        %s4155 = sand.u32 %s75, 1
        %s4156 = smul.addr %s4155, 128
        %s4157 = scalar_lea.vmem [#allocation7], %s4156
        // Predicated region
        $region37: #{tpu_custom_call.1} parent=27 // pred_check
          %p4158 = pneg %p85
        $region38: #{tpu_custom_call.1} parent=27 // pred_check_branch
          %4160 = sbr.rel (%p4158) target = $region40
        $region39: #{tpu_custom_call.1} parent=27 // pred_region
          %s4161 = smul.u32 32, %s20
          %s4163 = ssub.s32 2048, 2048
          %4164 = vsyncadd %s4154, %s4163
          %s4165 = smul.addr %s4161, 64
          %s4166 = scalar_lea.hbm %s2, %s4165
          %s4168 = sshll.u32 %s4157, 4
          %s4169 = int_to_ptr.vmem [resolvable:$true] %s4168
          %4171 = dma.vmem_to_hbm [thread:$0]  %s4169, 2048, %s4166, %s4154
        $region40: #{tpu_custom_call.1} parent=27 // pred_fallthru
          _
      $region28: #{tpu_custom_call.1} parent=5 // pred_fallthru
        _
      %p4172 = scmp.le.s32.totalorder 2, %s15
      // Predicated region
      $region41: #{tpu_custom_call.1} parent=5 // pred_check
        %p4173 = pneg %p4172
      $region42: #{tpu_custom_call.1} parent=5 // pred_check_branch
        %4175 = sbr.rel (%p4173) target = $region44
      $region43: #{tpu_custom_call.1} parent=5 // pred_region
        %s4176 = ssub.s32 %s15, 2
        // Predicated region
        $region45: #{tpu_custom_call.1} parent=43 // pred_check
          %p4177 = pneg %p91
        $region46: #{tpu_custom_call.1} parent=43 // pred_check_branch
          %4179 = sbr.rel (%p4177) target = $region48
        $region47: #{tpu_custom_call.1} parent=43 // pred_region
          %s4180 = sand.u32 %s76, 1
          %s4181 = scalar_lea.sflag [#allocation4], %s4180
          %s4182 = sand.u32 %s76, 1
          %s4183 = smul.addr %s4182, 128
          %s4184 = scalar_lea.vmem [#allocation7], %s4183
          %4185 = dma.done %s4181, 2048
        $region48: #{tpu_custom_call.1} parent=43 // pred_fallthru
          _
      $region44: #{tpu_custom_call.1} parent=5 // pred_fallthru
        _
    $region6: #{tpu_custom_call.1} parent=1 // loop_footer
      %s19 = sadd.s32 1, %s15
    $region7: #{tpu_custom_call.1} parent=1 // loop_footer_branch
      %14 = sbr.rel target = $region3
    $region8: #{tpu_custom_call.1} parent=1 // loop_exit
      _
    %4186 = vsyncpa [#allocation3], 1
    %s4187 = scalar_lea.sflag [#allocation3], 1
    %4188 = vsyncpa %s4187, 1
    %4189 = vsyncpa [#allocation6], 1
    %s4190 = scalar_lea.sflag [#allocation6], 1
    %4191 = vsyncpa %s4190, 1
    %4192 = vsyncpa [#allocation4], 1
    %s4193 = scalar_lea.sflag [#allocation4], 1
    %4194 = vsyncpa %s4193, 1

</llo_original>
